<compile_context>
chip_gen: v5e
topology: v5e:2x2
jax: 0.10.0
libtpu: 0.0.40
codegen_flags: <defaults>
</compile_context>

<pallas_src>
import math

import jax
import jax.numpy as jnp
from jax import lax
from jax.experimental import pallas as pl
from jax.experimental.pallas import tpu as pltpu

BN_EPS = 1e-5
BN_SCALE = 1.0 / math.sqrt(1.0 + BN_EPS)   # eval-mode BatchNorm2d(1), default stats
LOG_CLIP = 1e-8                            # voicefixer to_log(): log10(clip(x, 1e-8))


def _vmem():
    return pl.BlockSpec(memory_space=pltpu.MemorySpace.VMEM)


def _row_tile(n):
    # rows per grid step for the row-tiled kernels (full array if small)
    return n if n <= 512 else 512


def _parallel():
    return pltpu.CompilerParams(dimension_semantics=("parallel",))


# --------------------------------------------------------------------------- #
# Kernel A: [BN->Lin(M,2M)->ReLU->BN->Lin(2M,4M)->ReLU] fused with the GRU1
#           layer-0 input projections for both directions (BN_GRU1's BN folded).
# --------------------------------------------------------------------------- #
def _mlp_pre_proj_kernel(x_ref, w1_ref, b1_ref, w2_ref, b2_ref, wpf_ref, wpb_ref,
                         ogf_ref, ogb_ref):
    x = x_ref[...].astype(jnp.bfloat16)
    y1 = jnp.dot(x, w1_ref[...], preferred_element_type=jnp.float32) + b1_ref[...]
    y1 = jnp.maximum(y1, 0.0).astype(jnp.bfloat16)
    y2 = jnp.dot(y1, w2_ref[...], preferred_element_type=jnp.float32) + b2_ref[...]
    y2 = jnp.maximum(y2, 0.0).astype(jnp.bfloat16)
    ogf_ref[...] = jnp.dot(y2, wpf_ref[...], preferred_element_type=jnp.float32)
    ogb_ref[...] = jnp.dot(y2, wpb_ref[...], preferred_element_type=jnp.float32)


def mlp_pre_proj(x, w1, b1, w2, b2, wpf, wpb):
    n, m = x.shape
    h3 = wpf.shape[1]
    tile = _row_tile(n)
    const = lambda shp: pl.BlockSpec(shp, lambda i: (0, 0))
    row = lambda c: pl.BlockSpec((tile, c), lambda i: (i, 0))
    return pl.pallas_call(
        _mlp_pre_proj_kernel,
        out_shape=(jax.ShapeDtypeStruct((n, h3), jnp.float32),
                   jax.ShapeDtypeStruct((n, h3), jnp.float32)),
        grid=(pl.cdiv(n, tile),),
        in_specs=[row(m), const(w1.shape), const(b1.shape), const(w2.shape),
                  const(b2.shape), const(wpf.shape), const(wpb.shape)],
        out_specs=(row(h3), row(h3)),
        compiler_params=_parallel(),
    )(x, w1, b1, w2, b2, wpf, wpb)


# --------------------------------------------------------------------------- #
# Kernel B: bidirectional GRU layer recurrence.  Input projections are already
# precomputed (xg_f / xg_b, gate order [r|z|n]); per step only ONE fused h @ U
# matmul per direction remains on the serial critical path.  Forward and
# backward run interleaved in the same fori_loop.
# TODO(synk): for very long T, chunk the time axis (carry h in VMEM scratch) to
#             stay inside v7x's 64 MiB VMEM.
# --------------------------------------------------------------------------- #
def _gru_layer_kernel(xgf_ref, xgb_ref, uf_ref, ub_ref, of_ref, ob_ref):
    T, B, _ = of_ref.shape
    H = uf_ref.shape[0]

    def step(t, carry):
        h_f, h_b = carry
        tb = T - 1 - t
        xg_f = xgf_ref[t]                                           # (B, 3H)
        xg_b = xgb_ref[tb]
        hU_f = jnp.dot(h_f, uf_ref[...], preferred_element_type=jnp.float32)
        hU_b = jnp.dot(h_b, ub_ref[...], preferred_element_type=jnp.float32)

        r_f = jax.nn.sigmoid(xg_f[:, :H] + hU_f[:, :H])
        z_f = jax.nn.sigmoid(xg_f[:, H:2 * H] + hU_f[:, H:2 * H])
        n_f = jnp.tanh(xg_f[:, 2 * H:] + r_f * hU_f[:, 2 * H:])
        h_f = (1.0 - z_f) * n_f + z_f * h_f

        r_b = jax.nn.sigmoid(xg_b[:, :H] + hU_b[:, :H])
        z_b = jax.nn.sigmoid(xg_b[:, H:2 * H] + hU_b[:, H:2 * H])
        n_b = jnp.tanh(xg_b[:, 2 * H:] + r_b * hU_b[:, 2 * H:])
        h_b = (1.0 - z_b) * n_b + z_b * h_b

        of_ref[t] = h_f
        ob_ref[tb] = h_b
        return (h_f, h_b)

    h0 = jnp.zeros((B, H), jnp.float32)
    lax.fori_loop(0, T, step, (h0, h0))


def gru_layer(xg_f, xg_b, u_f, u_b):
    T, B, _ = xg_f.shape
    H = u_f.shape[0]
    return pl.pallas_call(
        _gru_layer_kernel,
        out_shape=(jax.ShapeDtypeStruct((T, B, H), jnp.float32),
                   jax.ShapeDtypeStruct((T, B, H), jnp.float32)),
        in_specs=[_vmem()] * 4,
        out_specs=(_vmem(), _vmem()),
    )(xg_f, xg_b, u_f, u_b)


# --------------------------------------------------------------------------- #
# Kernel C: input projections for the next GRU layer / next BN_GRU block.
# Input is the (f, b) pair from the previous layer; the concat is replaced by a
# row-split of the weight: out_dir = f @ W_top_dir + b @ W_bot_dir.
# (BN of the second BN_GRU is folded into its layer-0 weights.)
# --------------------------------------------------------------------------- #
def _pair_proj_kernel(f_ref, b_ref, wff_ref, wbf_ref, wfb_ref, wbb_ref,
                      ogf_ref, ogb_ref):
    f = f_ref[...].astype(jnp.bfloat16)
    b = b_ref[...].astype(jnp.bfloat16)
    ogf_ref[...] = (jnp.dot(f, wff_ref[...], preferred_element_type=jnp.float32)
                    + jnp.dot(b, wbf_ref[...], preferred_element_type=jnp.float32))
    ogb_ref[...] = (jnp.dot(f, wfb_ref[...], preferred_element_type=jnp.float32)
                    + jnp.dot(b, wbb_ref[...], preferred_element_type=jnp.float32))


def pair_proj(f, b, wff, wbf, wfb, wbb):
    n, h = f.shape
    h3 = wff.shape[1]
    tile = _row_tile(n)
    const = lambda shp: pl.BlockSpec(shp, lambda i: (0, 0))
    row = lambda c: pl.BlockSpec((tile, c), lambda i: (i, 0))
    return pl.pallas_call(
        _pair_proj_kernel,
        out_shape=(jax.ShapeDtypeStruct((n, h3), jnp.float32),
                   jax.ShapeDtypeStruct((n, h3), jnp.float32)),
        grid=(pl.cdiv(n, tile),),
        in_specs=[row(h), row(h), const(wff.shape), const(wbf.shape),
                  const(wfb.shape), const(wbb.shape)],
        out_specs=(row(h3), row(h3)),
        compiler_params=_parallel(),
    )(f, b, wff, wbf, wfb, wbb)


# --------------------------------------------------------------------------- #
# Kernel D: BN->ReLU->Lin(4M,4M)->(Dropout)->BN->ReLU->Lin(4M,M)->Sigmoid
#           -> mask * noisy -> to_log(clean), to_log(noisy).
# Takes the GRU2 (f, b) pair directly (concat replaced by weight row-split).
# --------------------------------------------------------------------------- #
def _mlp_post_kernel(f_ref, b_ref, noisy_ref, w3f_ref, w3b_ref, b3_ref,
                     w4_ref, b4_ref, clean_ref, xlog_ref, logmel_ref):
    f = jnp.maximum(f_ref[...], 0.0).astype(jnp.bfloat16)
    b = jnp.maximum(b_ref[...], 0.0).astype(jnp.bfloat16)
    y3 = (jnp.dot(f, w3f_ref[...], preferred_element_type=jnp.float32)
          + jnp.dot(b, w3b_ref[...], preferred_element_type=jnp.float32)
          + b3_ref[...])
    y3 = jnp.maximum(y3, 0.0).astype(jnp.bfloat16)
    y4 = jnp.dot(y3, w4_ref[...], preferred_element_type=jnp.float32) + b4_ref[...]
    mask = jax.nn.sigmoid(y4)
    noisy = noisy_ref[...]
    clean = mask * noisy
    clean_ref[...] = clean
    xlog_ref[...] = jnp.log10(jnp.maximum(clean, LOG_CLIP))
    logmel_ref[...] = jnp.log10(jnp.maximum(noisy, LOG_CLIP))


def mlp_post(f, b, noisy, w3f, w3b, b3, w4, b4):
    n, h = f.shape
    m = w4.shape[1]
    tile = _row_tile(n)
    const = lambda shp: pl.BlockSpec(shp, lambda i: (0, 0))
    row = lambda c: pl.BlockSpec((tile, c), lambda i: (i, 0))
    return pl.pallas_call(
        _mlp_post_kernel,
        out_shape=(jax.ShapeDtypeStruct((n, m), jnp.float32),
                   jax.ShapeDtypeStruct((n, m), jnp.float32),
                   jax.ShapeDtypeStruct((n, m), jnp.float32)),
        grid=(pl.cdiv(n, tile),),
        in_specs=[row(h), row(h), row(m), const(w3f.shape), const(w3b.shape),
                  const(b3.shape), const(w4.shape), const(b4.shape)],
        out_specs=(row(m), row(m), row(m)),
        compiler_params=_parallel(),
    )(f, b, noisy, w3f, w3b, b3, w4, b4)


# --------------------------------------------------------------------------- #
# Parameter construction (deterministic, synthetic, torch-equivalent init) and
# folding of BatchNorm scales / layouts expected by the kernels.
# --------------------------------------------------------------------------- #
def _linear_params(key, fan_in, fan_out):
    kw, kb = jax.random.split(key)
    bound = 1.0 / math.sqrt(fan_in)
    w = jax.random.uniform(kw, (fan_in, fan_out), jnp.float32, -bound, bound)
    b = jax.random.uniform(kb, (1, fan_out), jnp.float32, -bound, bound)
    return w, b


def _gru_dir_raw(key, d_in, h):
    kih, k1, k2, k3 = jax.random.split(key, 4)
    a = math.sqrt(6.0 / (3 * h + d_in))            # xavier_uniform on weight_ih (3H, D)
    wih = jax.random.uniform(kih, (d_in, 3 * h), jnp.float32, -a, a)   # cols [r|z|n]
    orth = jax.nn.initializers.orthogonal()        # orthogonal on weight_hh
    whh = jnp.concatenate([orth(k1, (h, h), jnp.float32),
                           orth(k2, (h, h), jnp.float32),
                           orth(k3, (h, h), jnp.float32)], axis=1)     # (H, 3H)
    return {"wih": wih, "whh": whh}


def _bn_gru_raw(key, d_in, h):
    ks = jax.random.split(key, 4)
    return {"l0_f": _gru_dir_raw(ks[0], d_in, h), "l0_b": _gru_dir_raw(ks[1], d_in, h),
            "l1_f": _gru_dir_raw(ks[2], 2 * h, h), "l1_b": _gru_dir_raw(ks[3], 2 * h, h)}


def _fold_params(raw, n_mel):
    m = n_mel
    h = 2 * m
    s = BN_SCALE
    bf = jnp.bfloat16

    def split_rows(w):                 # (2H, 3H) -> (top H rows, bottom H rows), bf16
        return w[:h].astype(bf), w[h:].astype(bf)

    g1, g2 = raw["g1"], raw["g2"]
    return {
        # pre-GRU MLP (BN scales folded into the weights)
        "w1": (raw["w1"] * s).astype(bf), "b1": raw["b1"],
        "w2": (raw["w2"] * s).astype(bf), "b2": raw["b2"],
        # GRU1 layer-0 input projection (BN of BN_GRU #1 folded)
        "p10_f": (g1["l0_f"]["wih"] * s).astype(bf),
        "p10_b": (g1["l0_b"]["wih"] * s).astype(bf),
        "u10_f": g1["l0_f"]["whh"], "u10_b": g1["l0_b"]["whh"],
        # GRU1 layer-1 input projection
        "p11": split_rows(g1["l1_f"]["wih"]) + split_rows(g1["l1_b"]["wih"]),
        "u11_f": g1["l1_f"]["whh"], "u11_b": g1["l1_b"]["whh"],
        # GRU2 layer-0 input projection (BN of BN_GRU #2 folded)
        "p20": split_rows(g2["l0_f"]["wih"] * s) + split_rows(g2["l0_b"]["wih"] * s),
        "u20_f": g2["l0_f"]["whh"], "u20_b": g2["l0_b"]["whh"],
        # GRU2 layer-1 input projection
        "p21": split_rows(g2["l1_f"]["wih"]) + split_rows(g2["l1_b"]["wih"]),
        "u21_f": g2["l1_f"]["whh"], "u21_b": g2["l1_b"]["whh"],
        # post-GRU MLP (BN scales folded)
        "w3f": (raw["w3"] * s)[:h].astype(bf), "w3b": (raw["w3"] * s)[h:].astype(bf),
        "b3": raw["b3"],
        "w4": (raw["w4"] * s).astype(bf), "b4": raw["b4"],
    }


def init_params(key, n_mel):
    m = n_mel
    h = 2 * m
    ks = jax.random.split(key, 6)
    w1, b1 = _linear_params(ks[0], m, 2 * m)
    w2, b2 = _linear_params(ks[1], 2 * m, 4 * m)
    g1 = _bn_gru_raw(ks[2], 4 * m, h)
    g2 = _bn_gru_raw(ks[3], 4 * m, h)
    w3, b3 = _linear_params(ks[4], 4 * m, 4 * m)
    w4, b4 = _linear_params(ks[5], 4 * m, m)
    raw = dict(w1=w1, b1=b1, w2=w2, b2=b2, g1=g1, g2=g2, w3=w3, b3=b3, w4=w4, b4=b4)
    return _fold_params(raw, n_mel)


# --------------------------------------------------------------------------- #
# VoiceFixer.forward == Generator.forward
# --------------------------------------------------------------------------- #
def voicefixer_forward(params, sp, mel_orig):
    del sp  # sp is unused by Generator.forward in the reference
    B, _, T, M = mel_orig.shape
    H = 2 * M
    N = T * B
    noisy = mel_orig

    # t-major flat layout (row = t*B + b); only the small (B,T,M) mel tensors
    # are transposed at the boundaries, all large activations keep one layout.
    x_flat = jnp.transpose(mel_orig[:, 0], (1, 0, 2)).reshape(N, M).astype(jnp.float32)

    # pre-GRU MLP fused with GRU1 layer-0 input projections (both directions)
    xg_f, xg_b = mlp_pre_proj(x_flat, params["w1"], params["b1"],
                              params["w2"], params["b2"],
                              params["p10_f"], params["p10_b"])          # (N, 3H) x2

    # GRU1 (2-layer bidirectional)
    f, b = gru_layer(xg_f.reshape(T, B, 3 * H), xg_b.reshape(T, B, 3 * H),
                     params["u10_f"], params["u10_b"])
    xg_f, xg_b = pair_proj(f.reshape(N, H), b.reshape(N, H), *params["p11"])
    f, b = gru_layer(xg_f.reshape(T, B, 3 * H), xg_b.reshape(T, B, 3 * H),
                     params["u11_f"], params["u11_b"])

    # GRU2 (2-layer bidirectional); its BatchNorm is folded into p20
    xg_f, xg_b = pair_proj(f.reshape(N, H), b.reshape(N, H), *params["p20"])
    f, b = gru_layer(xg_f.reshape(T, B, 3 * H), xg_b.reshape(T, B, 3 * H),
                     params["u20_f"], params["u20_b"])
    xg_f, xg_b = pair_proj(f.reshape(N, H), b.reshape(N, H), *params["p21"])
    f, b = gru_layer(xg_f.reshape(T, B, 3 * H), xg_b.reshape(T, B, 3 * H),
                     params["u21_f"], params["u21_b"])

    # post-GRU MLP + sigmoid mask + to_log
    clean_f, xlog_f, logmel_f = mlp_post(f.reshape(N, H), b.reshape(N, H), x_flat,
                                         params["w3f"], params["w3b"], params["b3"],
                                         params["w4"], params["b4"])

    def unflatten(a):   # (N, M) t-major -> (B, 1, T, M)
        return jnp.transpose(a.reshape(T, B, M), (1, 0, 2))[:, None]

    clean = unflatten(clean_f)
    x = unflatten(xlog_f)
    logmel = unflatten(logmel_f)

    unet_in = jnp.concatenate([logmel, x], axis=1)   # (B, 2, T, M), as in the reference
    # TODO(synk): UNetResComplex_100Mb source is not provided in the reference module;
    # its output is substituted with zeros, so mel == x here.
    del unet_in
    unet_out = jnp.zeros_like(x)
    mel = unet_out + x

    return {"mel": mel, "lstm_out": unet_out, "unet_out": unet_out,
            "noisy": noisy, "clean": clean}


if __name__ == "__main__":
    key = jax.random.PRNGKey(0)
    k_param, k_sp, k_mel = jax.random.split(key, 3)

    # sample_rate = 16000 branch: window_size = 512 -> hidden = 257, n_mel = 80
    n_mel = 80
    hidden = 257
    B, T = 2, 8

    params = init_params(k_param, n_mel)
    sp = jax.random.uniform(k_sp, (B, 1, T, hidden), jnp.float32)        # unused by forward
    mel_orig = jax.random.uniform(k_mel, (B, 1, T, n_mel), jnp.float32)  # non-negative mel

    out = jax.jit(voicefixer_forward)(params, sp, mel_orig)
    jax.block_until_ready(out)

    assert out["mel"].shape == (B, 1, T, n_mel)
    assert out["clean"].shape == (B, 1, T, n_mel)
    print("KERNEL_OK")
</pallas_src>

<mosaic_0001>
module attributes {stable_mosaic.version = 11 : i64} {
  func.func @_gru_layer_kernel(%arg0: memref<8x2x480xf32, #tpu.memory_space<vmem>>, %arg1: memref<8x2x480xf32, #tpu.memory_space<vmem>>, %arg2: memref<160x480xf32, #tpu.memory_space<vmem>>, %arg3: memref<160x480xf32, #tpu.memory_space<vmem>>, %arg4: memref<8x2x160xf32, #tpu.memory_space<vmem>>, %arg5: memref<8x2x160xf32, #tpu.memory_space<vmem>>) attributes {dimension_semantics = [], scalar_prefetch = 0 : i64, scratch_operands = 0 : i64, tpu.core_type = #tpu.core_type<tc>} {
    %cst = arith.constant 0.000000e+00 : f32
    %0 = vector.broadcast %cst : f32 to vector<2x160xf32>
    %c0_i32 = arith.constant 0 : i32
    %c8_i32 = arith.constant 8 : i32
    %1 = arith.addi %c0_i32, %c8_i32 : i32
    %c1_i32 = arith.constant 1 : i32
    %2:2 = scf.for %arg6 = %c0_i32 to %1 step %c1_i32 iter_args(%arg7 = %0, %arg8 = %0) -> (vector<2x160xf32>, vector<2x160xf32>)  : i32 {
      %c7_i32 = arith.constant 7 : i32
      %3 = arith.subi %c7_i32, %arg6 : i32
      %4 = arith.index_cast %arg6 : i32 to index
      %c0 = arith.constant 0 : index
      %c0_1 = arith.constant 0 : index
      %5 = vector.load %arg0[%4, %c0, %c0_1] : memref<8x2x480xf32, #tpu.memory_space<vmem>>, vector<1x2x480xf32>
      %6 = vector.shape_cast %5 : vector<1x2x480xf32> to vector<2x480xf32>
      %7 = arith.index_cast %3 : i32 to index
      %c0_2 = arith.constant 0 : index
      %c0_3 = arith.constant 0 : index
      %8 = vector.load %arg1[%7, %c0_2, %c0_3] : memref<8x2x480xf32, #tpu.memory_space<vmem>>, vector<1x2x480xf32>
      %9 = vector.shape_cast %8 : vector<1x2x480xf32> to vector<2x480xf32>
      %c0_4 = arith.constant 0 : index
      %c0_5 = arith.constant 0 : index
      %10 = vector.load %arg2[%c0_4, %c0_5] : memref<160x480xf32, #tpu.memory_space<vmem>>, vector<160x480xf32>
      %cst_6 = arith.constant dense<0.000000e+00> : vector<2x480xf32>
      %11 = tpu.matmul %arg7, %10, %cst_6 {dimension_numbers = #tpu.dot_dimension_numbers<[1], [0], [0], [1], [0, 0, 1, 1], [], []>} : vector<2x160xf32>, vector<160x480xf32>, vector<2x480xf32> -> vector<2x480xf32>
      %c0_7 = arith.constant 0 : index
      %c0_8 = arith.constant 0 : index
      %12 = vector.load %arg3[%c0_7, %c0_8] : memref<160x480xf32, #tpu.memory_space<vmem>>, vector<160x480xf32>
      %cst_9 = arith.constant dense<0.000000e+00> : vector<2x480xf32>
      %13 = tpu.matmul %arg8, %12, %cst_9 {dimension_numbers = #tpu.dot_dimension_numbers<[1], [0], [0], [1], [0, 0, 1, 1], [], []>} : vector<2x160xf32>, vector<160x480xf32>, vector<2x480xf32> -> vector<2x480xf32>
      %14 = vector.extract_strided_slice %6 {offsets = [0, 0], sizes = [2, 160], strides = [1, 1]} : vector<2x480xf32> to vector<2x160xf32>
      %15 = vector.extract_strided_slice %11 {offsets = [0, 0], sizes = [2, 160], strides = [1, 1]} : vector<2x480xf32> to vector<2x160xf32>
      %16 = arith.addf %14, %15 : vector<2x160xf32>
      %17 = arith.negf %16 : vector<2x160xf32>
      %18 = math.exp %17 : vector<2x160xf32>
      %cst_10 = arith.constant 1.000000e+00 : f32
      %19 = vector.broadcast %cst_10 : f32 to vector<2x160xf32>
      %20 = arith.addf %19, %18 : vector<2x160xf32>
      %21 = arith.divf %19, %20 : vector<2x160xf32>
      %22 = vector.extract_strided_slice %6 {offsets = [0, 160], sizes = [2, 160], strides = [1, 1]} : vector<2x480xf32> to vector<2x160xf32>
      %23 = vector.extract_strided_slice %11 {offsets = [0, 160], sizes = [2, 160], strides = [1, 1]} : vector<2x480xf32> to vector<2x160xf32>
      %24 = arith.addf %22, %23 : vector<2x160xf32>
      %25 = arith.negf %24 : vector<2x160xf32>
      %26 = math.exp %25 : vector<2x160xf32>
      %cst_11 = arith.constant 1.000000e+00 : f32
      %27 = vector.broadcast %cst_11 : f32 to vector<2x160xf32>
      %28 = arith.addf %27, %26 : vector<2x160xf32>
      %29 = arith.divf %27, %28 : vector<2x160xf32>
      %30 = vector.extract_strided_slice %6 {offsets = [0, 320], sizes = [2, 160], strides = [1, 1]} : vector<2x480xf32> to vector<2x160xf32>
      %31 = vector.extract_strided_slice %11 {offsets = [0, 320], sizes = [2, 160], strides = [1, 1]} : vector<2x480xf32> to vector<2x160xf32>
      %32 = arith.mulf %21, %31 : vector<2x160xf32>
      %33 = arith.addf %30, %32 : vector<2x160xf32>
      %34 = math.tanh %33 : vector<2x160xf32>
      %cst_12 = arith.constant 1.000000e+00 : f32
      %35 = vector.broadcast %cst_12 : f32 to vector<2x160xf32>
      %36 = arith.subf %35, %29 : vector<2x160xf32>
      %37 = arith.mulf %36, %34 : vector<2x160xf32>
      %38 = arith.mulf %29, %arg7 : vector<2x160xf32>
      %39 = arith.addf %37, %38 : vector<2x160xf32>
      %40 = vector.extract_strided_slice %9 {offsets = [0, 0], sizes = [2, 160], strides = [1, 1]} : vector<2x480xf32> to vector<2x160xf32>
      %41 = vector.extract_strided_slice %13 {offsets = [0, 0], sizes = [2, 160], strides = [1, 1]} : vector<2x480xf32> to vector<2x160xf32>
      %42 = arith.addf %40, %41 : vector<2x160xf32>
      %43 = arith.negf %42 : vector<2x160xf32>
      %44 = math.exp %43 : vector<2x160xf32>
      %cst_13 = arith.constant 1.000000e+00 : f32
      %45 = vector.broadcast %cst_13 : f32 to vector<2x160xf32>
      %46 = arith.addf %45, %44 : vector<2x160xf32>
      %47 = arith.divf %45, %46 : vector<2x160xf32>
      %48 = vector.extract_strided_slice %9 {offsets = [0, 160], sizes = [2, 160], strides = [1, 1]} : vector<2x480xf32> to vector<2x160xf32>
      %49 = vector.extract_strided_slice %13 {offsets = [0, 160], sizes = [2, 160], strides = [1, 1]} : vector<2x480xf32> to vector<2x160xf32>
      %50 = arith.addf %48, %49 : vector<2x160xf32>
      %51 = arith.negf %50 : vector<2x160xf32>
      %52 = math.exp %51 : vector<2x160xf32>
      %cst_14 = arith.constant 1.000000e+00 : f32
      %53 = vector.broadcast %cst_14 : f32 to vector<2x160xf32>
      %54 = arith.addf %53, %52 : vector<2x160xf32>
      %55 = arith.divf %53, %54 : vector<2x160xf32>
      %56 = vector.extract_strided_slice %9 {offsets = [0, 320], sizes = [2, 160], strides = [1, 1]} : vector<2x480xf32> to vector<2x160xf32>
      %57 = vector.extract_strided_slice %13 {offsets = [0, 320], sizes = [2, 160], strides = [1, 1]} : vector<2x480xf32> to vector<2x160xf32>
      %58 = arith.mulf %47, %57 : vector<2x160xf32>
      %59 = arith.addf %56, %58 : vector<2x160xf32>
      %60 = math.tanh %59 : vector<2x160xf32>
      %cst_15 = arith.constant 1.000000e+00 : f32
      %61 = vector.broadcast %cst_15 : f32 to vector<2x160xf32>
      %62 = arith.subf %61, %55 : vector<2x160xf32>
      %63 = arith.mulf %62, %60 : vector<2x160xf32>
      %64 = arith.mulf %55, %arg8 : vector<2x160xf32>
      %65 = arith.addf %63, %64 : vector<2x160xf32>
      %66 = arith.index_cast %arg6 : i32 to index
      %c0_16 = arith.constant 0 : index
      %c0_17 = arith.constant 0 : index
      %67 = vector.load %arg4[%66, %c0_16, %c0_17] : memref<8x2x160xf32, #tpu.memory_space<vmem>>, vector<1x2x160xf32>
      %68 = vector.shape_cast %67 : vector<1x2x160xf32> to vector<2x160xf32>
      %69 = vector.shape_cast %39 : vector<2x160xf32> to vector<1x2x160xf32>
      tpu.vector_store %arg4[%66, %c0_16, %c0_17], %69 {strides = array<i32>} : memref<8x2x160xf32, #tpu.memory_space<vmem>>, vector<1x2x160xf32>,
      %70 = arith.index_cast %3 : i32 to index
      %c0_18 = arith.constant 0 : index
      %c0_19 = arith.constant 0 : index
      %71 = vector.load %arg5[%70, %c0_18, %c0_19] : memref<8x2x160xf32, #tpu.memory_space<vmem>>, vector<1x2x160xf32>
      %72 = vector.shape_cast %71 : vector<1x2x160xf32> to vector<2x160xf32>
      %73 = vector.shape_cast %65 : vector<2x160xf32> to vector<1x2x160xf32>
      tpu.vector_store %arg5[%70, %c0_18, %c0_19], %73 {strides = array<i32>} : memref<8x2x160xf32, #tpu.memory_space<vmem>>, vector<1x2x160xf32>,
      scf.yield %39, %65 : vector<2x160xf32>, vector<2x160xf32>
    }
    %c8_i32_0 = arith.constant 8 : i32
    return
  }
}

module attributes {stable_mosaic.version = 11 : i64} {
  func.func @_mlp_pre_proj_kernel(%arg0: i32, %arg1: memref<16x80xf32, #tpu.memory_space<vmem>>, %arg2: memref<80x160xbf16, #tpu.memory_space<vmem>>, %arg3: memref<1x160xf32, #tpu.memory_space<vmem>>, %arg4: memref<160x320xbf16, #tpu.memory_space<vmem>>, %arg5: memref<1x320xf32, #tpu.memory_space<vmem>>, %arg6: memref<320x480xbf16, #tpu.memory_space<vmem>>, %arg7: memref<320x480xbf16, #tpu.memory_space<vmem>>, %arg8: memref<16x480xf32, #tpu.memory_space<vmem>>, %arg9: memref<16x480xf32, #tpu.memory_space<vmem>>) attributes {dimension_semantics = [#tpu.dimension_semantics<parallel>], iteration_bounds = array<i64: 1>, scalar_prefetch = 0 : i64, scratch_operands = 0 : i64, tpu.core_type = #tpu.core_type<tc>, window_params = [{transform_indices = @transform_0, window_bounds = array<i64: 16, 80>}, {pipeline_mode = #tpu.pipeline_mode<synchronous>, transform_indices = @transform_1, window_bounds = array<i64: 80, 160>}, {pipeline_mode = #tpu.pipeline_mode<synchronous>, transform_indices = @transform_2, window_bounds = array<i64: 1, 160>}, {pipeline_mode = #tpu.pipeline_mode<synchronous>, transform_indices = @transform_3, window_bounds = array<i64: 160, 320>}, {pipeline_mode = #tpu.pipeline_mode<synchronous>, transform_indices = @transform_4, window_bounds = array<i64: 1, 320>}, {pipeline_mode = #tpu.pipeline_mode<synchronous>, transform_indices = @transform_5, window_bounds = array<i64: 320, 480>}, {pipeline_mode = #tpu.pipeline_mode<synchronous>, transform_indices = @transform_6, window_bounds = array<i64: 320, 480>}, {transform_indices = @transform_7, window_bounds = array<i64: 16, 480>}, {transform_indices = @transform_8, window_bounds = array<i64: 16, 480>}]} {
    %c0 = arith.constant 0 : index
    %c0_0 = arith.constant 0 : index
    %0 = vector.load %arg1[%c0, %c0_0] : memref<16x80xf32, #tpu.memory_space<vmem>>, vector<16x80xf32>
    %1 = arith.truncf %0 : vector<16x80xf32> to vector<16x80xbf16>
    %c0_1 = arith.constant 0 : index
    %c0_2 = arith.constant 0 : index
    %2 = vector.load %arg2[%c0_1, %c0_2] : memref<80x160xbf16, #tpu.memory_space<vmem>>, vector<80x160xbf16>
    %cst = arith.constant dense<0.000000e+00> : vector<16x160xf32>
    %3 = tpu.matmul %1, %2, %cst {dimension_numbers = #tpu.dot_dimension_numbers<[1], [0], [0], [1], [0, 0, 1, 1], [], []>} : vector<16x80xbf16>, vector<80x160xbf16>, vector<16x160xf32> -> vector<16x160xf32>
    %c0_3 = arith.constant 0 : index
    %c0_4 = arith.constant 0 : index
    %4 = vector.load %arg3[%c0_3, %c0_4] : memref<1x160xf32, #tpu.memory_space<vmem>>, vector<1x160xf32>
    %5 = vector.broadcast %4 : vector<1x160xf32> to vector<16x160xf32>
    %6 = arith.addf %3, %5 : vector<16x160xf32>
    %cst_5 = arith.constant 0.000000e+00 : f32
    %7 = vector.broadcast %cst_5 : f32 to vector<16x160xf32>
    %8 = arith.maximumf %6, %7 : vector<16x160xf32>
    %9 = arith.truncf %8 : vector<16x160xf32> to vector<16x160xbf16>
    %c0_6 = arith.constant 0 : index
    %c0_7 = arith.constant 0 : index
    %10 = vector.load %arg4[%c0_6, %c0_7] : memref<160x320xbf16, #tpu.memory_space<vmem>>, vector<160x320xbf16>
    %cst_8 = arith.constant dense<0.000000e+00> : vector<16x320xf32>
    %11 = tpu.matmul %9, %10, %cst_8 {dimension_numbers = #tpu.dot_dimension_numbers<[1], [0], [0], [1], [0, 0, 1, 1], [], []>} : vector<16x160xbf16>, vector<160x320xbf16>, vector<16x320xf32> -> vector<16x320xf32>
    %c0_9 = arith.constant 0 : index
    %c0_10 = arith.constant 0 : index
    %12 = vector.load %arg5[%c0_9, %c0_10] : memref<1x320xf32, #tpu.memory_space<vmem>>, vector<1x320xf32>
    %13 = vector.broadcast %12 : vector<1x320xf32> to vector<16x320xf32>
    %14 = arith.addf %11, %13 : vector<16x320xf32>
    %cst_11 = arith.constant 0.000000e+00 : f32
    %15 = vector.broadcast %cst_11 : f32 to vector<16x320xf32>
    %16 = arith.maximumf %14, %15 : vector<16x320xf32>
    %17 = arith.truncf %16 : vector<16x320xf32> to vector<16x320xbf16>
    %c0_12 = arith.constant 0 : index
    %c0_13 = arith.constant 0 : index
    %18 = vector.load %arg6[%c0_12, %c0_13] : memref<320x480xbf16, #tpu.memory_space<vmem>>, vector<320x480xbf16>
    %cst_14 = arith.constant dense<0.000000e+00> : vector<16x480xf32>
    %19 = tpu.matmul %17, %18, %cst_14 {dimension_numbers = #tpu.dot_dimension_numbers<[1], [0], [0], [1], [0, 0, 1, 1], [], []>} : vector<16x320xbf16>, vector<320x480xbf16>, vector<16x480xf32> -> vector<16x480xf32>
    %c0_15 = arith.constant 0 : index
    %c0_16 = arith.constant 0 : index
    %20 = vector.load %arg8[%c0_15, %c0_16] : memref<16x480xf32, #tpu.memory_space<vmem>>, vector<16x480xf32>
    tpu.vector_store %arg8[%c0_15, %c0_16], %19 {strides = array<i32>} : memref<16x480xf32, #tpu.memory_space<vmem>>, vector<16x480xf32>,
    %c0_17 = arith.constant 0 : index
    %c0_18 = arith.constant 0 : index
    %21 = vector.load %arg7[%c0_17, %c0_18] : memref<320x480xbf16, #tpu.memory_space<vmem>>, vector<320x480xbf16>
    %cst_19 = arith.constant dense<0.000000e+00> : vector<16x480xf32>
    %22 = tpu.matmul %17, %21, %cst_19 {dimension_numbers = #tpu.dot_dimension_numbers<[1], [0], [0], [1], [0, 0, 1, 1], [], []>} : vector<16x320xbf16>, vector<320x480xbf16>, vector<16x480xf32> -> vector<16x480xf32>
    %c0_20 = arith.constant 0 : index
    %c0_21 = arith.constant 0 : index
    %23 = vector.load %arg9[%c0_20, %c0_21] : memref<16x480xf32, #tpu.memory_space<vmem>>, vector<16x480xf32>
    tpu.vector_store %arg9[%c0_20, %c0_21], %22 {strides = array<i32>} : memref<16x480xf32, #tpu.memory_space<vmem>>, vector<16x480xf32>,
    return
  }
  func.func @transform_0(%arg0: i32) -> (i32, i32) {
    %c0_i32 = arith.constant 0 : i32
    %c0_i32_0 = arith.constant 0 : i32
    return %arg0, %c0_i32 : i32, i32
  }
  func.func @transform_1(%arg0: i32) -> (i32, i32) {
    %c0_i32 = arith.constant 0 : i32
    %c0_i32_0 = arith.constant 0 : i32
    %c0_i32_1 = arith.constant 0 : i32
    return %c0_i32, %c0_i32_0 : i32, i32
  }
  func.func @transform_2(%arg0: i32) -> (i32, i32) {
    %c0_i32 = arith.constant 0 : i32
    %c0_i32_0 = arith.constant 0 : i32
    %c0_i32_1 = arith.constant 0 : i32
    return %c0_i32, %c0_i32_0 : i32, i32
  }
  func.func @transform_3(%arg0: i32) -> (i32, i32) {
    %c0_i32 = arith.constant 0 : i32
    %c0_i32_0 = arith.constant 0 : i32
    %c0_i32_1 = arith.constant 0 : i32
    return %c0_i32, %c0_i32_0 : i32, i32
  }
  func.func @transform_4(%arg0: i32) -> (i32, i32) {
    %c0_i32 = arith.constant 0 : i32
    %c0_i32_0 = arith.constant 0 : i32
    %c0_i32_1 = arith.constant 0 : i32
    return %c0_i32, %c0_i32_0 : i32, i32
  }
  func.func @transform_5(%arg0: i32) -> (i32, i32) {
    %c0_i32 = arith.constant 0 : i32
    %c0_i32_0 = arith.constant 0 : i32
    %c0_i32_1 = arith.constant 0 : i32
    return %c0_i32, %c0_i32_0 : i32, i32
  }
  func.func @transform_6(%arg0: i32) -> (i32, i32) {
    %c0_i32 = arith.constant 0 : i32
    %c0_i32_0 = arith.constant 0 : i32
    %c0_i32_1 = arith.constant 0 : i32
    return %c0_i32, %c0_i32_0 : i32, i32
  }
  func.func @transform_7(%arg0: i32) -> (i32, i32) {
    %c0_i32 = arith.constant 0 : i32
    %c0_i32_0 = arith.constant 0 : i32
    return %arg0, %c0_i32 : i32, i32
  }
  func.func @transform_8(%arg0: i32) -> (i32, i32) {
    %c0_i32 = arith.constant 0 : i32
    %c0_i32_0 = arith.constant 0 : i32
    return %arg0, %c0_i32 : i32, i32
  }
}

module attributes {stable_mosaic.version = 11 : i64} {
  func.func @_pair_proj_kernel(%arg0: i32, %arg1: memref<16x160xf32, #tpu.memory_space<vmem>>, %arg2: memref<16x160xf32, #tpu.memory_space<vmem>>, %arg3: memref<160x480xbf16, #tpu.memory_space<vmem>>, %arg4: memref<160x480xbf16, #tpu.memory_space<vmem>>, %arg5: memref<160x480xbf16, #tpu.memory_space<vmem>>, %arg6: memref<160x480xbf16, #tpu.memory_space<vmem>>, %arg7: memref<16x480xf32, #tpu.memory_space<vmem>>, %arg8: memref<16x480xf32, #tpu.memory_space<vmem>>) attributes {dimension_semantics = [#tpu.dimension_semantics<parallel>], iteration_bounds = array<i64: 1>, scalar_prefetch = 0 : i64, scratch_operands = 0 : i64, tpu.core_type = #tpu.core_type<tc>, window_params = [{transform_indices = @transform_0, window_bounds = array<i64: 16, 160>}, {transform_indices = @transform_1, window_bounds = array<i64: 16, 160>}, {pipeline_mode = #tpu.pipeline_mode<synchronous>, transform_indices = @transform_2, window_bounds = array<i64: 160, 480>}, {pipeline_mode = #tpu.pipeline_mode<synchronous>, transform_indices = @transform_3, window_bounds = array<i64: 160, 480>}, {pipeline_mode = #tpu.pipeline_mode<synchronous>, transform_indices = @transform_4, window_bounds = array<i64: 160, 480>}, {pipeline_mode = #tpu.pipeline_mode<synchronous>, transform_indices = @transform_5, window_bounds = array<i64: 160, 480>}, {transform_indices = @transform_6, window_bounds = array<i64: 16, 480>}, {transform_indices = @transform_7, window_bounds = array<i64: 16, 480>}]} {
    %c0 = arith.constant 0 : index
    %c0_0 = arith.constant 0 : index
    %0 = vector.load %arg1[%c0, %c0_0] : memref<16x160xf32, #tpu.memory_space<vmem>>, vector<16x160xf32>
    %1 = arith.truncf %0 : vector<16x160xf32> to vector<16x160xbf16>
    %c0_1 = arith.constant 0 : index
    %c0_2 = arith.constant 0 : index
    %2 = vector.load %arg2[%c0_1, %c0_2] : memref<16x160xf32, #tpu.memory_space<vmem>>, vector<16x160xf32>
    %3 = arith.truncf %2 : vector<16x160xf32> to vector<16x160xbf16>
    %c0_3 = arith.constant 0 : index
    %c0_4 = arith.constant 0 : index
    %4 = vector.load %arg3[%c0_3, %c0_4] : memref<160x480xbf16, #tpu.memory_space<vmem>>, vector<160x480xbf16>
    %cst = arith.constant dense<0.000000e+00> : vector<16x480xf32>
    %5 = tpu.matmul %1, %4, %cst {dimension_numbers = #tpu.dot_dimension_numbers<[1], [0], [0], [1], [0, 0, 1, 1], [], []>} : vector<16x160xbf16>, vector<160x480xbf16>, vector<16x480xf32> -> vector<16x480xf32>
    %c0_5 = arith.constant 0 : index
    %c0_6 = arith.constant 0 : index
    %6 = vector.load %arg4[%c0_5, %c0_6] : memref<160x480xbf16, #tpu.memory_space<vmem>>, vector<160x480xbf16>
    %cst_7 = arith.constant dense<0.000000e+00> : vector<16x480xf32>
    %7 = tpu.matmul %3, %6, %cst_7 {dimension_numbers = #tpu.dot_dimension_numbers<[1], [0], [0], [1], [0, 0, 1, 1], [], []>} : vector<16x160xbf16>, vector<160x480xbf16>, vector<16x480xf32> -> vector<16x480xf32>
    %8 = arith.addf %5, %7 : vector<16x480xf32>
    %c0_8 = arith.constant 0 : index
    %c0_9 = arith.constant 0 : index
    %9 = vector.load %arg7[%c0_8, %c0_9] : memref<16x480xf32, #tpu.memory_space<vmem>>, vector<16x480xf32>
    tpu.vector_store %arg7[%c0_8, %c0_9], %8 {strides = array<i32>} : memref<16x480xf32, #tpu.memory_space<vmem>>, vector<16x480xf32>,
    %c0_10 = arith.constant 0 : index
    %c0_11 = arith.constant 0 : index
    %10 = vector.load %arg5[%c0_10, %c0_11] : memref<160x480xbf16, #tpu.memory_space<vmem>>, vector<160x480xbf16>
    %cst_12 = arith.constant dense<0.000000e+00> : vector<16x480xf32>
    %11 = tpu.matmul %1, %10, %cst_12 {dimension_numbers = #tpu.dot_dimension_numbers<[1], [0], [0], [1], [0, 0, 1, 1], [], []>} : vector<16x160xbf16>, vector<160x480xbf16>, vector<16x480xf32> -> vector<16x480xf32>
    %c0_13 = arith.constant 0 : index
    %c0_14 = arith.constant 0 : index
    %12 = vector.load %arg6[%c0_13, %c0_14] : memref<160x480xbf16, #tpu.memory_space<vmem>>, vector<160x480xbf16>
    %cst_15 = arith.constant dense<0.000000e+00> : vector<16x480xf32>
    %13 = tpu.matmul %3, %12, %cst_15 {dimension_numbers = #tpu.dot_dimension_numbers<[1], [0], [0], [1], [0, 0, 1, 1], [], []>} : vector<16x160xbf16>, vector<160x480xbf16>, vector<16x480xf32> -> vector<16x480xf32>
    %14 = arith.addf %11, %13 : vector<16x480xf32>
    %c0_16 = arith.constant 0 : index
    %c0_17 = arith.constant 0 : index
    %15 = vector.load %arg8[%c0_16, %c0_17] : memref<16x480xf32, #tpu.memory_space<vmem>>, vector<16x480xf32>
    tpu.vector_store %arg8[%c0_16, %c0_17], %14 {strides = array<i32>} : memref<16x480xf32, #tpu.memory_space<vmem>>, vector<16x480xf32>,
    return
  }
  func.func @transform_0(%arg0: i32) -> (i32, i32) {
    %c0_i32 = arith.constant 0 : i32
    %c0_i32_0 = arith.constant 0 : i32
    return %arg0, %c0_i32 : i32, i32
  }
  func.func @transform_1(%arg0: i32) -> (i32, i32) {
    %c0_i32 = arith.constant 0 : i32
    %c0_i32_0 = arith.constant 0 : i32
    return %arg0, %c0_i32 : i32, i32
  }
  func.func @transform_2(%arg0: i32) -> (i32, i32) {
    %c0_i32 = arith.constant 0 : i32
    %c0_i32_0 = arith.constant 0 : i32
    %c0_i32_1 = arith.constant 0 : i32
    return %c0_i32, %c0_i32_0 : i32, i32
  }
  func.func @transform_3(%arg0: i32) -> (i32, i32) {
    %c0_i32 = arith.constant 0 : i32
    %c0_i32_0 = arith.constant 0 : i32
    %c0_i32_1 = arith.constant 0 : i32
    return %c0_i32, %c0_i32_0 : i32, i32
  }
  func.func @transform_4(%arg0: i32) -> (i32, i32) {
    %c0_i32 = arith.constant 0 : i32
    %c0_i32_0 = arith.constant 0 : i32
    %c0_i32_1 = arith.constant 0 : i32
    return %c0_i32, %c0_i32_0 : i32, i32
  }
  func.func @transform_5(%arg0: i32) -> (i32, i32) {
    %c0_i32 = arith.constant 0 : i32
    %c0_i32_0 = arith.constant 0 : i32
    %c0_i32_1 = arith.constant 0 : i32
    return %c0_i32, %c0_i32_0 : i32, i32
  }
  func.func @transform_6(%arg0: i32) -> (i32, i32) {
    %c0_i32 = arith.constant 0 : i32
    %c0_i32_0 = arith.constant 0 : i32
    return %arg0, %c0_i32 : i32, i32
  }
  func.func @transform_7(%arg0: i32) -> (i32, i32) {
    %c0_i32 = arith.constant 0 : i32
    %c0_i32_0 = arith.constant 0 : i32
    return %arg0, %c0_i32 : i32, i32
  }
}

module attributes {stable_mosaic.version = 11 : i64} {
  func.func @_gru_layer_kernel(%arg0: memref<8x2x480xf32, #tpu.memory_space<vmem>>, %arg1: memref<8x2x480xf32, #tpu.memory_space<vmem>>, %arg2: memref<160x480xf32, #tpu.memory_space<vmem>>, %arg3: memref<160x480xf32, #tpu.memory_space<vmem>>, %arg4: memref<8x2x160xf32, #tpu.memory_space<vmem>>, %arg5: memref<8x2x160xf32, #tpu.memory_space<vmem>>) attributes {dimension_semantics = [], scalar_prefetch = 0 : i64, scratch_operands = 0 : i64, tpu.core_type = #tpu.core_type<tc>} {
    %cst = arith.constant 0.000000e+00 : f32
    %0 = vector.broadcast %cst : f32 to vector<2x160xf32>
    %c0_i32 = arith.constant 0 : i32
    %c8_i32 = arith.constant 8 : i32
    %1 = arith.addi %c0_i32, %c8_i32 : i32
    %c1_i32 = arith.constant 1 : i32
    %2:2 = scf.for %arg6 = %c0_i32 to %1 step %c1_i32 iter_args(%arg7 = %0, %arg8 = %0) -> (vector<2x160xf32>, vector<2x160xf32>)  : i32 {
      %c7_i32 = arith.constant 7 : i32
      %3 = arith.subi %c7_i32, %arg6 : i32
      %4 = arith.index_cast %arg6 : i32 to index
      %c0 = arith.constant 0 : index
      %c0_1 = arith.constant 0 : index
      %5 = vector.load %arg0[%4, %c0, %c0_1] : memref<8x2x480xf32, #tpu.memory_space<vmem>>, vector<1x2x480xf32>
      %6 = vector.shape_cast %5 : vector<1x2x480xf32> to vector<2x480xf32>
      %7 = arith.index_cast %3 : i32 to index
      %c0_2 = arith.constant 0 : index
      %c0_3 = arith.constant 0 : index
      %8 = vector.load %arg1[%7, %c0_2, %c0_3] : memref<8x2x480xf32, #tpu.memory_space<vmem>>, vector<1x2x480xf32>
      %9 = vector.shape_cast %8 : vector<1x2x480xf32> to vector<2x480xf32>
      %c0_4 = arith.constant 0 : index
      %c0_5 = arith.constant 0 : index
      %10 = vector.load %arg2[%c0_4, %c0_5] : memref<160x480xf32, #tpu.memory_space<vmem>>, vector<160x480xf32>
      %cst_6 = arith.constant dense<0.000000e+00> : vector<2x480xf32>
      %11 = tpu.matmul %arg7, %10, %cst_6 {dimension_numbers = #tpu.dot_dimension_numbers<[1], [0], [0], [1], [0, 0, 1, 1], [], []>} : vector<2x160xf32>, vector<160x480xf32>, vector<2x480xf32> -> vector<2x480xf32>
      %c0_7 = arith.constant 0 : index
      %c0_8 = arith.constant 0 : index
      %12 = vector.load %arg3[%c0_7, %c0_8] : memref<160x480xf32, #tpu.memory_space<vmem>>, vector<160x480xf32>
      %cst_9 = arith.constant dense<0.000000e+00> : vector<2x480xf32>
      %13 = tpu.matmul %arg8, %12, %cst_9 {dimension_numbers = #tpu.dot_dimension_numbers<[1], [0], [0], [1], [0, 0, 1, 1], [], []>} : vector<2x160xf32>, vector<160x480xf32>, vector<2x480xf32> -> vector<2x480xf32>
      %14 = vector.extract_strided_slice %6 {offsets = [0, 0], sizes = [2, 160], strides = [1, 1]} : vector<2x480xf32> to vector<2x160xf32>
      %15 = vector.extract_strided_slice %11 {offsets = [0, 0], sizes = [2, 160], strides = [1, 1]} : vector<2x480xf32> to vector<2x160xf32>
      %16 = arith.addf %14, %15 : vector<2x160xf32>
      %17 = arith.negf %16 : vector<2x160xf32>
      %18 = math.exp %17 : vector<2x160xf32>
      %cst_10 = arith.constant 1.000000e+00 : f32
      %19 = vector.broadcast %cst_10 : f32 to vector<2x160xf32>
      %20 = arith.addf %19, %18 : vector<2x160xf32>
      %21 = arith.divf %19, %20 : vector<2x160xf32>
      %22 = vector.extract_strided_slice %6 {offsets = [0, 160], sizes = [2, 160], strides = [1, 1]} : vector<2x480xf32> to vector<2x160xf32>
      %23 = vector.extract_strided_slice %11 {offsets = [0, 160], sizes = [2, 160], strides = [1, 1]} : vector<2x480xf32> to vector<2x160xf32>
      %24 = arith.addf %22, %23 : vector<2x160xf32>
      %25 = arith.negf %24 : vector<2x160xf32>
      %26 = math.exp %25 : vector<2x160xf32>
      %cst_11 = arith.constant 1.000000e+00 : f32
      %27 = vector.broadcast %cst_11 : f32 to vector<2x160xf32>
      %28 = arith.addf %27, %26 : vector<2x160xf32>
      %29 = arith.divf %27, %28 : vector<2x160xf32>
      %30 = vector.extract_strided_slice %6 {offsets = [0, 320], sizes = [2, 160], strides = [1, 1]} : vector<2x480xf32> to vector<2x160xf32>
      %31 = vector.extract_strided_slice %11 {offsets = [0, 320], sizes = [2, 160], strides = [1, 1]} : vector<2x480xf32> to vector<2x160xf32>
      %32 = arith.mulf %21, %31 : vector<2x160xf32>
      %33 = arith.addf %30, %32 : vector<2x160xf32>
      %34 = math.tanh %33 : vector<2x160xf32>
      %cst_12 = arith.constant 1.000000e+00 : f32
      %35 = vector.broadcast %cst_12 : f32 to vector<2x160xf32>
      %36 = arith.subf %35, %29 : vector<2x160xf32>
      %37 = arith.mulf %36, %34 : vector<2x160xf32>
      %38 = arith.mulf %29, %arg7 : vector<2x160xf32>
      %39 = arith.addf %37, %38 : vector<2x160xf32>
      %40 = vector.extract_strided_slice %9 {offsets = [0, 0], sizes = [2, 160], strides = [1, 1]} : vector<2x480xf32> to vector<2x160xf32>
      %41 = vector.extract_strided_slice %13 {offsets = [0, 0], sizes = [2, 160], strides = [1, 1]} : vector<2x480xf32> to vector<2x160xf32>
      %42 = arith.addf %40, %41 : vector<2x160xf32>
      %43 = arith.negf %42 : vector<2x160xf32>
      %44 = math.exp %43 : vector<2x160xf32>
      %cst_13 = arith.constant 1.000000e+00 : f32
      %45 = vector.broadcast %cst_13 : f32 to vector<2x160xf32>
      %46 = arith.addf %45, %44 : vector<2x160xf32>
      %47 = arith.divf %45, %46 : vector<2x160xf32>
      %48 = vector.extract_strided_slice %9 {offsets = [0, 160], sizes = [2, 160], strides = [1, 1]} : vector<2x480xf32> to vector<2x160xf32>
      %49 = vector.extract_strided_slice %13 {offsets = [0, 160], sizes = [2, 160], strides = [1, 1]} : vector<2x480xf32> to vector<2x160xf32>
      %50 = arith.addf %48, %49 : vector<2x160xf32>
      %51 = arith.negf %50 : vector<2x160xf32>
      %52 = math.exp %51 : vector<2x160xf32>
      %cst_14 = arith.constant 1.000000e+00 : f32
      %53 = vector.broadcast %cst_14 : f32 to vector<2x160xf32>
      %54 = arith.addf %53, %52 : vector<2x160xf32>
      %55 = arith.divf %53, %54 : vector<2x160xf32>
      %56 = vector.extract_strided_slice %9 {offsets = [0, 320], sizes = [2, 160], strides = [1, 1]} : vector<2x480xf32> to vector<2x160xf32>
      %57 = vector.extract_strided_slice %13 {offsets = [0, 320], sizes = [2, 160], strides = [1, 1]} : vector<2x480xf32> to vector<2x160xf32>
      %58 = arith.mulf %47, %57 : vector<2x160xf32>
      %59 = arith.addf %56, %58 : vector<2x160xf32>
      %60 = math.tanh %59 : vector<2x160xf32>
      %cst_15 = arith.constant 1.000000e+00 : f32
      %61 = vector.broadcast %cst_15 : f32 to vector<2x160xf32>
      %62 = arith.subf %61, %55 : vector<2x160xf32>
      %63 = arith.mulf %62, %60 : vector<2x160xf32>
      %64 = arith.mulf %55, %arg8 : vector<2x160xf32>
      %65 = arith.addf %63, %64 : vector<2x160xf32>
      %66 = arith.index_cast %arg6 : i32 to index
      %c0_16 = arith.constant 0 : index
      %c0_17 = arith.constant 0 : index
      %67 = vector.load %arg4[%66, %c0_16, %c0_17] : memref<8x2x160xf32, #tpu.memory_space<vmem>>, vector<1x2x160xf32>
      %68 = vector.shape_cast %67 : vector<1x2x160xf32> to vector<2x160xf32>
      %69 = vector.shape_cast %39 : vector<2x160xf32> to vector<1x2x160xf32>
      tpu.vector_store %arg4[%66, %c0_16, %c0_17], %69 {strides = array<i32>} : memref<8x2x160xf32, #tpu.memory_space<vmem>>, vector<1x2x160xf32>,
      %70 = arith.index_cast %3 : i32 to index
      %c0_18 = arith.constant 0 : index
      %c0_19 = arith.constant 0 : index
      %71 = vector.load %arg5[%70, %c0_18, %c0_19] : memref<8x2x160xf32, #tpu.memory_space<vmem>>, vector<1x2x160xf32>
      %72 = vector.shape_cast %71 : vector<1x2x160xf32> to vector<2x160xf32>
      %73 = vector.shape_cast %65 : vector<2x160xf32> to vector<1x2x160xf32>
      tpu.vector_store %arg5[%70, %c0_18, %c0_19], %73 {strides = array<i32>} : memref<8x2x160xf32, #tpu.memory_space<vmem>>, vector<1x2x160xf32>,
      scf.yield %39, %65 : vector<2x160xf32>, vector<2x160xf32>
    }
    %c8_i32_0 = arith.constant 8 : i32
    return
  }
}

module attributes {stable_mosaic.version = 11 : i64} {
  func.func @_mlp_post_kernel(%arg0: i32, %arg1: memref<16x160xf32, #tpu.memory_space<vmem>>, %arg2: memref<16x160xf32, #tpu.memory_space<vmem>>, %arg3: memref<16x80xf32, #tpu.memory_space<vmem>>, %arg4: memref<160x320xbf16, #tpu.memory_space<vmem>>, %arg5: memref<160x320xbf16, #tpu.memory_space<vmem>>, %arg6: memref<1x320xf32, #tpu.memory_space<vmem>>, %arg7: memref<320x80xbf16, #tpu.memory_space<vmem>>, %arg8: memref<1x80xf32, #tpu.memory_space<vmem>>, %arg9: memref<16x80xf32, #tpu.memory_space<vmem>>, %arg10: memref<16x80xf32, #tpu.memory_space<vmem>>, %arg11: memref<16x80xf32, #tpu.memory_space<vmem>>) attributes {dimension_semantics = [#tpu.dimension_semantics<parallel>], iteration_bounds = array<i64: 1>, scalar_prefetch = 0 : i64, scratch_operands = 0 : i64, tpu.core_type = #tpu.core_type<tc>, window_params = [{transform_indices = @transform_0, window_bounds = array<i64: 16, 160>}, {transform_indices = @transform_1, window_bounds = array<i64: 16, 160>}, {transform_indices = @transform_2, window_bounds = array<i64: 16, 80>}, {pipeline_mode = #tpu.pipeline_mode<synchronous>, transform_indices = @transform_3, window_bounds = array<i64: 160, 320>}, {pipeline_mode = #tpu.pipeline_mode<synchronous>, transform_indices = @transform_4, window_bounds = array<i64: 160, 320>}, {pipeline_mode = #tpu.pipeline_mode<synchronous>, transform_indices = @transform_5, window_bounds = array<i64: 1, 320>}, {pipeline_mode = #tpu.pipeline_mode<synchronous>, transform_indices = @transform_6, window_bounds = array<i64: 320, 80>}, {pipeline_mode = #tpu.pipeline_mode<synchronous>, transform_indices = @transform_7, window_bounds = array<i64: 1, 80>}, {transform_indices = @transform_8, window_bounds = array<i64: 16, 80>}, {transform_indices = @transform_9, window_bounds = array<i64: 16, 80>}, {transform_indices = @transform_10, window_bounds = array<i64: 16, 80>}]} {
    %c0 = arith.constant 0 : index
    %c0_0 = arith.constant 0 : index
    %0 = vector.load %arg1[%c0, %c0_0] : memref<16x160xf32, #tpu.memory_space<vmem>>, vector<16x160xf32>
    %cst = arith.constant 0.000000e+00 : f32
    %1 = vector.broadcast %cst : f32 to vector<16x160xf32>
    %2 = arith.maximumf %0, %1 : vector<16x160xf32>
    %3 = arith.truncf %2 : vector<16x160xf32> to vector<16x160xbf16>
    %c0_1 = arith.constant 0 : index
    %c0_2 = arith.constant 0 : index
    %4 = vector.load %arg2[%c0_1, %c0_2] : memref<16x160xf32, #tpu.memory_space<vmem>>, vector<16x160xf32>
    %cst_3 = arith.constant 0.000000e+00 : f32
    %5 = vector.broadcast %cst_3 : f32 to vector<16x160xf32>
    %6 = arith.maximumf %4, %5 : vector<16x160xf32>
    %7 = arith.truncf %6 : vector<16x160xf32> to vector<16x160xbf16>
    %c0_4 = arith.constant 0 : index
    %c0_5 = arith.constant 0 : index
    %8 = vector.load %arg4[%c0_4, %c0_5] : memref<160x320xbf16, #tpu.memory_space<vmem>>, vector<160x320xbf16>
    %cst_6 = arith.constant dense<0.000000e+00> : vector<16x320xf32>
    %9 = tpu.matmul %3, %8, %cst_6 {dimension_numbers = #tpu.dot_dimension_numbers<[1], [0], [0], [1], [0, 0, 1, 1], [], []>} : vector<16x160xbf16>, vector<160x320xbf16>, vector<16x320xf32> -> vector<16x320xf32>
    %c0_7 = arith.constant 0 : index
    %c0_8 = arith.constant 0 : index
    %10 = vector.load %arg5[%c0_7, %c0_8] : memref<160x320xbf16, #tpu.memory_space<vmem>>, vector<160x320xbf16>
    %cst_9 = arith.constant dense<0.000000e+00> : vector<16x320xf32>
    %11 = tpu.matmul %7, %10, %cst_9 {dimension_numbers = #tpu.dot_dimension_numbers<[1], [0], [0], [1], [0, 0, 1, 1], [], []>} : vector<16x160xbf16>, vector<160x320xbf16>, vector<16x320xf32> -> vector<16x320xf32>
    %12 = arith.addf %9, %11 : vector<16x320xf32>
    %c0_10 = arith.constant 0 : index
    %c0_11 = arith.constant 0 : index
    %13 = vector.load %arg6[%c0_10, %c0_11] : memref<1x320xf32, #tpu.memory_space<vmem>>, vector<1x320xf32>
    %14 = vector.broadcast %13 : vector<1x320xf32> to vector<16x320xf32>
    %15 = arith.addf %12, %14 : vector<16x320xf32>
    %cst_12 = arith.constant 0.000000e+00 : f32
    %16 = vector.broadcast %cst_12 : f32 to vector<16x320xf32>
    %17 = arith.maximumf %15, %16 : vector<16x320xf32>
    %18 = arith.truncf %17 : vector<16x320xf32> to vector<16x320xbf16>
    %c0_13 = arith.constant 0 : index
    %c0_14 = arith.constant 0 : index
    %19 = vector.load %arg7[%c0_13, %c0_14] : memref<320x80xbf16, #tpu.memory_space<vmem>>, vector<320x80xbf16>
    %cst_15 = arith.constant dense<0.000000e+00> : vector<16x80xf32>
    %20 = tpu.matmul %18, %19, %cst_15 {dimension_numbers = #tpu.dot_dimension_numbers<[1], [0], [0], [1], [0, 0, 1, 1], [], []>} : vector<16x320xbf16>, vector<320x80xbf16>, vector<16x80xf32> -> vector<16x80xf32>
    %c0_16 = arith.constant 0 : index
    %c0_17 = arith.constant 0 : index
    %21 = vector.load %arg8[%c0_16, %c0_17] : memref<1x80xf32, #tpu.memory_space<vmem>>, vector<1x80xf32>
    %22 = vector.broadcast %21 : vector<1x80xf32> to vector<16x80xf32>
    %23 = arith.addf %20, %22 : vector<16x80xf32>
    %24 = arith.negf %23 : vector<16x80xf32>
    %25 = math.exp %24 : vector<16x80xf32>
    %cst_18 = arith.constant 1.000000e+00 : f32
    %26 = vector.broadcast %cst_18 : f32 to vector<16x80xf32>
    %27 = arith.addf %26, %25 : vector<16x80xf32>
    %28 = arith.divf %26, %27 : vector<16x80xf32>
    %c0_19 = arith.constant 0 : index
    %c0_20 = arith.constant 0 : index
    %29 = vector.load %arg3[%c0_19, %c0_20] : memref<16x80xf32, #tpu.memory_space<vmem>>, vector<16x80xf32>
    %30 = arith.mulf %28, %29 : vector<16x80xf32>
    %c0_21 = arith.constant 0 : index
    %c0_22 = arith.constant 0 : index
    %31 = vector.load %arg9[%c0_21, %c0_22] : memref<16x80xf32, #tpu.memory_space<vmem>>, vector<16x80xf32>
    tpu.vector_store %arg9[%c0_21, %c0_22], %30 {strides = array<i32>} : memref<16x80xf32, #tpu.memory_space<vmem>>, vector<16x80xf32>,
    %cst_23 = arith.constant 9.99999993E-9 : f32
    %32 = vector.broadcast %cst_23 : f32 to vector<16x80xf32>
    %33 = arith.maximumf %30, %32 : vector<16x80xf32>
    %34 = math.log %33 : vector<16x80xf32>
    %cst_24 = arith.constant 0.434294492 : f32
    %35 = vector.broadcast %cst_24 : f32 to vector<16x80xf32>
    %36 = arith.mulf %34, %35 : vector<16x80xf32>
    %c0_25 = arith.constant 0 : index
    %c0_26 = arith.constant 0 : index
    %37 = vector.load %arg10[%c0_25, %c0_26] : memref<16x80xf32, #tpu.memory_space<vmem>>, vector<16x80xf32>
    tpu.vector_store %arg10[%c0_25, %c0_26], %36 {strides = array<i32>} : memref<16x80xf32, #tpu.memory_space<vmem>>, vector<16x80xf32>,
    %cst_27 = arith.constant 9.99999993E-9 : f32
    %38 = vector.broadcast %cst_27 : f32 to vector<16x80xf32>
    %39 = arith.maximumf %29, %38 : vector<16x80xf32>
    %40 = math.log %39 : vector<16x80xf32>
    %cst_28 = arith.constant 0.434294492 : f32
    %41 = vector.broadcast %cst_28 : f32 to vector<16x80xf32>
    %42 = arith.mulf %40, %41 : vector<16x80xf32>
    %c0_29 = arith.constant 0 : index
    %c0_30 = arith.constant 0 : index
    %43 = vector.load %arg11[%c0_29, %c0_30] : memref<16x80xf32, #tpu.memory_space<vmem>>, vector<16x80xf32>
    tpu.vector_store %arg11[%c0_29, %c0_30], %42 {strides = array<i32>} : memref<16x80xf32, #tpu.memory_space<vmem>>, vector<16x80xf32>,
    return
  }
  func.func @transform_0(%arg0: i32) -> (i32, i32) {
    %c0_i32 = arith.constant 0 : i32
    %c0_i32_0 = arith.constant 0 : i32
    return %arg0, %c0_i32 : i32, i32
  }
  func.func @transform_1(%arg0: i32) -> (i32, i32) {
    %c0_i32 = arith.constant 0 : i32
    %c0_i32_0 = arith.constant 0 : i32
    return %arg0, %c0_i32 : i32, i32
  }
  func.func @transform_2(%arg0: i32) -> (i32, i32) {
    %c0_i32 = arith.constant 0 : i32
    %c0_i32_0 = arith.constant 0 : i32
    return %arg0, %c0_i32 : i32, i32
  }
  func.func @transform_3(%arg0: i32) -> (i32, i32) {
    %c0_i32 = arith.constant 0 : i32
    %c0_i32_0 = arith.constant 0 : i32
    %c0_i32_1 = arith.constant 0 : i32
    return %c0_i32, %c0_i32_0 : i32, i32
  }
  func.func @transform_4(%arg0: i32) -> (i32, i32) {
    %c0_i32 = arith.constant 0 : i32
    %c0_i32_0 = arith.constant 0 : i32
    %c0_i32_1 = arith.constant 0 : i32
    return %c0_i32, %c0_i32_0 : i32, i32
  }
  func.func @transform_5(%arg0: i32) -> (i32, i32) {
    %c0_i32 = arith.constant 0 : i32
    %c0_i32_0 = arith.constant 0 : i32
    %c0_i32_1 = arith.constant 0 : i32
    return %c0_i32, %c0_i32_0 : i32, i32
  }
  func.func @transform_6(%arg0: i32) -> (i32, i32) {
    %c0_i32 = arith.constant 0 : i32
    %c0_i32_0 = arith.constant 0 : i32
    %c0_i32_1 = arith.constant 0 : i32
    return %c0_i32, %c0_i32_0 : i32, i32
  }
  func.func @transform_7(%arg0: i32) -> (i32, i32) {
    %c0_i32 = arith.constant 0 : i32
    %c0_i32_0 = arith.constant 0 : i32
    %c0_i32_1 = arith.constant 0 : i32
    return %c0_i32, %c0_i32_0 : i32, i32
  }
  func.func @transform_8(%arg0: i32) -> (i32, i32) {
    %c0_i32 = arith.constant 0 : i32
    %c0_i32_0 = arith.constant 0 : i32
    return %arg0, %c0_i32 : i32, i32
  }
  func.func @transform_9(%arg0: i32) -> (i32, i32) {
    %c0_i32 = arith.constant 0 : i32
    %c0_i32_0 = arith.constant 0 : i32
    return %arg0, %c0_i32 : i32, i32
  }
  func.func @transform_10(%arg0: i32) -> (i32, i32) {
    %c0_i32 = arith.constant 0 : i32
    %c0_i32_0 = arith.constant 0 : i32
    return %arg0, %c0_i32 : i32, i32
  }
}

</mosaic_0001>

<llo_original>
// kernel: voicefixer_forward.10
$region0: #{voicefixer_forward.10}
  #allocation0 [shape = 'u32[]', space=smem, size = 0x4, offset = 0x4, fixed_abs, tag = 'smem constant byte address 0x4 - core index']
  #allocation1 [shape = 'u32[72,128]{1,0:T(1,128)}', space=vmem, size = 0x9000, scoped, tag = 'internal scratch']
  %s0 = inlined_call_operand.vmem [shape: f32[8,2,480], index: 0, kind: input, shape index: {}]
  %s1 = inlined_call_operand.vmem [shape: f32[8,2,480], index: 1, kind: input, shape index: {}]
  %s2 = inlined_call_operand.hbm [shape: f32[160,480], index: 2, kind: input, shape index: {}]
  %s3 = inlined_call_operand.hbm [shape: f32[160,480], index: 3, kind: input, shape index: {}]
  %s4 = inlined_call_operand.vmem [shape: f32[8,2,160], index: 4, kind: output, shape index: {0}]
  %s5 = inlined_call_operand.vmem [shape: f32[8,2,160], index: 5, kind: output, shape index: {1}]
  %6 = xla_tuple %s4, %s5
  %s7 = sld [smem:[#allocation0]]
  $region49: #{voicefixer_forward.10} parent=0
    _
  %s9 = ssub.s32 1, %s7
  %s10 = scalar_select 0, %s9, %s7
  $region1: #{voicefixer_forward.10} parent=0
    #allocation2 [shape = 'u8[327680]{0}', space=vmem, size = 0x50000, scoped, tag = 'input window, operand 2, single buffered']
    #allocation3 [shape = 's32[1]{0}', space=sflag, size = 0x4, scoped, tag = 'scoped memory for voicefixer_forward.10']
    #allocation4 [shape = 'u8[327680]{0}', space=vmem, size = 0x50000, scoped, tag = 'input window, operand 3, single buffered']
    #allocation5 [shape = 's32[1]{0}', space=sflag, size = 0x4, scoped, tag = 'scoped memory for voicefixer_forward.10']
    %11 = vsyncpa [#allocation3], 0
    %12 = vsyncpa [#allocation5], 0
    // Predicated region
    $region2: #{voicefixer_forward.10} parent=1 // pred_check
      _
    $region3: #{voicefixer_forward.10} parent=1 // pred_check_branch
      %14 = sbr.rel (0) target = $region5
    $region4: #{voicefixer_forward.10} parent=1 // pred_region
      _
    $region5: #{voicefixer_forward.10} parent=1 // pred_fallthru
      _
    // Predicated region
    $region6: #{voicefixer_forward.10} parent=1 // pred_check
      _
    $region7: #{voicefixer_forward.10} parent=1 // pred_check_branch
      %16 = sbr.rel (0) target = $region9
    $region8: #{voicefixer_forward.10} parent=1 // pred_region
      _
    $region9: #{voicefixer_forward.10} parent=1 // pred_fallthru
      _
    // Predicated region
    $region10: #{voicefixer_forward.10} parent=1 // pred_check
      _
    $region11: #{voicefixer_forward.10} parent=1 // pred_check_branch
      %18 = sbr.rel (0) target = $region13
    $region12: #{voicefixer_forward.10} parent=1 // pred_region
      %20 = vsyncadd [#allocation3], 0
      %s21 = sshll.u32 %s2, 4
      %s22 = int_to_ptr.hbm [resolvable:$true] %s21
      %s23 = sshll.u32 [#allocation2], 4
      %s24 = int_to_ptr.vmem [resolvable:$true] %s23
      %29 = dma.hbm_to_vmem [thread:$0]  %s22, 10240, %s24, [#allocation3], 512, 512, 32
    $region13: #{voicefixer_forward.10} parent=1 // pred_fallthru
      _
    // Predicated region
    $region14: #{voicefixer_forward.10} parent=1 // pred_check
      _
    $region15: #{voicefixer_forward.10} parent=1 // pred_check_branch
      %31 = sbr.rel (0) target = $region17
    $region16: #{voicefixer_forward.10} parent=1 // pred_region
      %33 = vsyncadd [#allocation5], 0
      %s34 = sshll.u32 %s3, 4
      %s35 = int_to_ptr.hbm [resolvable:$true] %s34
      %s36 = sshll.u32 [#allocation4], 4
      %s37 = int_to_ptr.vmem [resolvable:$true] %s36
      %42 = dma.hbm_to_vmem [thread:$0]  %s35, 10240, %s37, [#allocation5], 512, 512, 32
    $region17: #{voicefixer_forward.10} parent=1 // pred_fallthru
      _
    // Predicated region
    $region18: #{voicefixer_forward.10} parent=1 // pred_check
      _
    $region19: #{voicefixer_forward.10} parent=1 // pred_check_branch
      %44 = sbr.rel (0) target = $region21
    $region20: #{voicefixer_forward.10} parent=1 // pred_region
      %46 = dma.done [#allocation3], 10240
    $region21: #{voicefixer_forward.10} parent=1 // pred_fallthru
      _
    // Predicated region
    $region22: #{voicefixer_forward.10} parent=1 // pred_check
      _
    $region23: #{voicefixer_forward.10} parent=1 // pred_check_branch
      %48 = sbr.rel (0) target = $region25
    $region24: #{voicefixer_forward.10} parent=1 // pred_region
      %50 = dma.done [#allocation5], 10240
    $region25: #{voicefixer_forward.10} parent=1 // pred_fallthru
      _
    loop: start=0, step=1, limit=8
    $region26: #{voicefixer_forward.10} parent=1 // loop_pre_header
      _
    $region27: #{voicefixer_forward.10} parent=1 // loop_header
      %s52 = sphi 0, %s56
      %p53 = scmp.ge.s32.totalorder %s52, 8
      %v57 = vphi 0.0, %v646
      %v58 = vphi 0.0, %v727
    $region28: #{voicefixer_forward.10} parent=1 // loop_header_branch
      %55 = sbr.rel (%p53) target = $region32
    $region29: #{voicefixer_forward.10} parent=1 // loop_body
      %s59 = ssub.s32 7, %s52
      %s60 = smul.u32 %s52, 4
      %s61 = smul.addr %s60, 2
      %s62 = scalar_lea.vmem %s0, %s61
      %v63 = vld [vmem:[%s62] sm:$0xff]
      %s64 = smul.u32 %s59, 4
      %s65 = smul.addr %s64, 2
      %s66 = scalar_lea.vmem %s1, %s65
      %v67 = vld [vmem:[%s66] sm:$0xff]
      %v68 = vld [vmem:[#allocation2] sm:$0xff]
      %v69 = vld [vmem:[#allocation2 + $0x8] sm:$0xff]
      %v70 = vld [vmem:[#allocation2 + $0x10] sm:$0xff]
      %v71 = vld [vmem:[#allocation2 + $0x18] sm:$0xff]
      %v72 = vld [vmem:[#allocation2 + $0x20] sm:$0xff]
      %v73 = vld [vmem:[#allocation2 + $0x28] sm:$0xff]
      %v74 = vld [vmem:[#allocation2 + $0x30] sm:$0xff]
      %v75 = vld [vmem:[#allocation2 + $0x38] sm:$0xff]
      %v76 = vld [vmem:[#allocation2 + $0x40] sm:$0xff]
      %v77 = vld [vmem:[#allocation2 + $0x48] sm:$0xff]
      %v78 = vld [vmem:[#allocation2 + $0x50] sm:$0xff]
      %v79 = vld [vmem:[#allocation2 + $0x58] sm:$0xff]
      %v80 = vld [vmem:[#allocation2 + $0x60] sm:$0xff]
      %v81 = vld [vmem:[#allocation2 + $0x68] sm:$0xff]
      %v82 = vld [vmem:[#allocation2 + $0x70] sm:$0xff]
      %v83 = vld [vmem:[#allocation2 + $0x78] sm:$0xff]
      %v84 = vld [vmem:[#allocation2 + $0x80] sm:$0xff]
      %v85 = vld [vmem:[#allocation2 + $0x88] sm:$0xff]
      %v86 = vld [vmem:[#allocation2 + $0x90] sm:$0xff]
      %v87 = vld [vmem:[#allocation2 + $0x98] sm:$0xff]
      %v88 = vld [vmem:[#allocation2 + $0xa0] sm:$0xff]
      %v89 = vld [vmem:[#allocation2 + $0xa8] sm:$0xff]
      %v90 = vld [vmem:[#allocation2 + $0xb0] sm:$0xff]
      %v91 = vld [vmem:[#allocation2 + $0xb8] sm:$0xff]
      %v92 = vld [vmem:[#allocation2 + $0xc0] sm:$0xff]
      %v93 = vld [vmem:[#allocation2 + $0xc8] sm:$0xff]
      %v94 = vld [vmem:[#allocation2 + $0xd0] sm:$0xff]
      %v95 = vld [vmem:[#allocation2 + $0xd8] sm:$0xff]
      %v96 = vld [vmem:[#allocation2 + $0xe0] sm:$0xff]
      %v97 = vld [vmem:[#allocation2 + $0xe8] sm:$0xff]
      %v98 = vld [vmem:[#allocation2 + $0xf0] sm:$0xff]
      %v99 = vld [vmem:[#allocation2 + $0xf8] sm:$0xff]
      %v100 = vld [vmem:[#allocation2 + $0x100] sm:$0xff]
      %v101 = vld [vmem:[#allocation2 + $0x108] sm:$0xff]
      %v102 = vld [vmem:[#allocation2 + $0x110] sm:$0xff]
      %v103 = vld [vmem:[#allocation2 + $0x118] sm:$0xff]
      %v104 = vld [vmem:[#allocation2 + $0x120] sm:$0xff]
      %v105 = vld [vmem:[#allocation2 + $0x128] sm:$0xff]
      %v106 = vld [vmem:[#allocation2 + $0x130] sm:$0xff]
      %v107 = vld [vmem:[#allocation2 + $0x138] sm:$0xff]
      %v108 = vld [vmem:[#allocation2 + $0x140] sm:$0xff]
      %v109 = vld [vmem:[#allocation2 + $0x148] sm:$0xff]
      %v110 = vld [vmem:[#allocation2 + $0x150] sm:$0xff]
      %v111 = vld [vmem:[#allocation2 + $0x158] sm:$0xff]
      %v112 = vld [vmem:[#allocation2 + $0x160] sm:$0xff]
      %v113 = vld [vmem:[#allocation2 + $0x168] sm:$0xff]
      %v114 = vld [vmem:[#allocation2 + $0x170] sm:$0xff]
      %v115 = vld [vmem:[#allocation2 + $0x178] sm:$0xff]
      %v116 = vld [vmem:[#allocation2 + $0x180] sm:$0xff]
      %v117 = vld [vmem:[#allocation2 + $0x188] sm:$0xff]
      %v118 = vld [vmem:[#allocation2 + $0x190] sm:$0xff]
      %v119 = vld [vmem:[#allocation2 + $0x198] sm:$0xff]
      %v120 = vld [vmem:[#allocation2 + $0x1a0] sm:$0xff]
      %v121 = vld [vmem:[#allocation2 + $0x1a8] sm:$0xff]
      %v122 = vld [vmem:[#allocation2 + $0x1b0] sm:$0xff]
      %v123 = vld [vmem:[#allocation2 + $0x1b8] sm:$0xff]
      %v124 = vld [vmem:[#allocation2 + $0x1c0] sm:$0xff]
      %v125 = vld [vmem:[#allocation2 + $0x1c8] sm:$0xff]
      %v126 = vld [vmem:[#allocation2 + $0x1d0] sm:$0xff]
      %v127 = vld [vmem:[#allocation2 + $0x1d8] sm:$0xff]
      %v128 = vld [vmem:[#allocation2 + $0x1e0] sm:$0xff]
      %v129 = vld [vmem:[#allocation2 + $0x1e8] sm:$0xff]
      %v130 = vld [vmem:[#allocation2 + $0x1f0] sm:$0xff]
      %v131 = vld [vmem:[#allocation2 + $0x1f8] sm:$0xff]
      %v132 = vld [vmem:[#allocation2 + $0x200] sm:$0xff]
      %v133 = vld [vmem:[#allocation2 + $0x208] sm:$0xff]
      %v134 = vld [vmem:[#allocation2 + $0x210] sm:$0xff]
      %v135 = vld [vmem:[#allocation2 + $0x218] sm:$0xff]
      %v136 = vld [vmem:[#allocation2 + $0x220] sm:$0xff]
      %v137 = vld [vmem:[#allocation2 + $0x228] sm:$0xff]
      %v138 = vld [vmem:[#allocation2 + $0x230] sm:$0xff]
      %v139 = vld [vmem:[#allocation2 + $0x238] sm:$0xff]
      %v140 = vld [vmem:[#allocation2 + $0x240] sm:$0xff]
      %v141 = vld [vmem:[#allocation2 + $0x248] sm:$0xff]
      %v142 = vld [vmem:[#allocation2 + $0x250] sm:$0xff]
      %v143 = vld [vmem:[#allocation2 + $0x258] sm:$0xff]
      %v144 = vld [vmem:[#allocation2 + $0x260] sm:$0xff]
      %v145 = vld [vmem:[#allocation2 + $0x268] sm:$0xff]
      %v146 = vld [vmem:[#allocation2 + $0x270] sm:$0xff]
      %v147 = vld [vmem:[#allocation2 + $0x278] sm:$0xff]
      %149 = vst [vmem:[#allocation1] ss:$4 sm:$0xff] %v57
      %v150 = vld.sshfl [vmem:[#allocation1] sm:$0xff pattern:$0x73625140]
      %v151 = vld.sshfl [vmem:[#allocation1 + $0x8] sm:$0xff pattern:$0x73625140]
      %vm153 = vcmask 261120
      %v154 = vsel %vm153, %v151, 0
      %156 = vmatpush.msra.mxu0 %v128
      %157 = vmatpush.msra.mxu0 %v124
      %158 = vmatpush.msra.mxu0 %v120
      %159 = vmatpush.msra.mxu0 %v116
      %160 = vmatpush.msra.mxu0 %v112
      %161 = vmatpush.msra.mxu0 %v108
      %162 = vmatpush.msra.mxu0 %v104
      %163 = vmatpush.msra.mxu0 %v100
      %164 = vmatpush.msra.mxu0 %v96
      %165 = vmatpush.msra.mxu0 %v92
      %166 = vmatpush.msra.mxu0 %v88
      %167 = vmatpush.msra.mxu0 %v84
      %168 = vmatpush.msra.mxu0 %v80
      %169 = vmatpush.msra.mxu0 %v76
      %170 = vmatpush.msra.mxu0 %v72
      %171 = vmatpush.msra.mxu0 %v68
      %172 = vmatmul.f32.gmra.mxu0 %v150
      %v173 = vpop.f32.mrf.mxu0
      %v174 = vadd.f32 0.0, %v173
      %175 = vdwg.mxu0
      %176 = vmatpush.msra.mxu0 0.0
      %177 = vmatpush.msra.mxu0 0.0
      %178 = vmatpush.msra.mxu0 0.0
      %179 = vmatpush.msra.mxu0 0.0
      %180 = vmatpush.msra.mxu0 0.0
      %181 = vmatpush.msra.mxu0 0.0
      %182 = vmatpush.msra.mxu0 0.0
      %183 = vmatpush.msra.mxu0 0.0
      %184 = vmatpush.msra.mxu0 0.0
      %185 = vmatpush.msra.mxu0 0.0
      %186 = vmatpush.msra.mxu0 0.0
      %187 = vmatpush.msra.mxu0 0.0
      %188 = vmatpush.msra.mxu0 %v144
      %189 = vmatpush.msra.mxu0 %v140
      %190 = vmatpush.msra.mxu0 %v136
      %191 = vmatpush.msra.mxu0 %v132
      %192 = vmatmul.f32.gmra.mxu0 %v154
      %v193 = vpop.f32.mrf.mxu0
      %v194 = vadd.f32 %v174, %v193
      %195 = vdwg.mxu0
      %196 = vmatpush.msra.mxu0 %v129
      %197 = vmatpush.msra.mxu0 %v125
      %198 = vmatpush.msra.mxu0 %v121
      %199 = vmatpush.msra.mxu0 %v117
      %200 = vmatpush.msra.mxu0 %v113
      %201 = vmatpush.msra.mxu0 %v109
      %202 = vmatpush.msra.mxu0 %v105
      %203 = vmatpush.msra.mxu0 %v101
      %204 = vmatpush.msra.mxu0 %v97
      %205 = vmatpush.msra.mxu0 %v93
      %206 = vmatpush.msra.mxu0 %v89
      %207 = vmatpush.msra.mxu0 %v85
      %208 = vmatpush.msra.mxu0 %v81
      %209 = vmatpush.msra.mxu0 %v77
      %210 = vmatpush.msra.mxu0 %v73
      %211 = vmatpush.msra.mxu0 %v69
      %212 = vmatmul.f32.gmra.mxu0 %v150
      %v213 = vpop.f32.mrf.mxu0
      %v214 = vadd.f32 0.0, %v213
      %215 = vdwg.mxu0
      %216 = vmatpush.msra.mxu0 0.0
      %217 = vmatpush.msra.mxu0 0.0
      %218 = vmatpush.msra.mxu0 0.0
      %219 = vmatpush.msra.mxu0 0.0
      %220 = vmatpush.msra.mxu0 0.0
      %221 = vmatpush.msra.mxu0 0.0
      %222 = vmatpush.msra.mxu0 0.0
      %223 = vmatpush.msra.mxu0 0.0
      %224 = vmatpush.msra.mxu0 0.0
      %225 = vmatpush.msra.mxu0 0.0
      %226 = vmatpush.msra.mxu0 0.0
      %227 = vmatpush.msra.mxu0 0.0
      %228 = vmatpush.msra.mxu0 %v145
      %229 = vmatpush.msra.mxu0 %v141
      %230 = vmatpush.msra.mxu0 %v137
      %231 = vmatpush.msra.mxu0 %v133
      %232 = vmatmul.f32.gmra.mxu0 %v154
      %v233 = vpop.f32.mrf.mxu0
      %v234 = vadd.f32 %v214, %v233
      %235 = vdwg.mxu0
      %236 = vmatpush.msra.mxu0 %v130
      %237 = vmatpush.msra.mxu0 %v126
      %238 = vmatpush.msra.mxu0 %v122
      %239 = vmatpush.msra.mxu0 %v118
      %240 = vmatpush.msra.mxu0 %v114
      %241 = vmatpush.msra.mxu0 %v110
      %242 = vmatpush.msra.mxu0 %v106
      %243 = vmatpush.msra.mxu0 %v102
      %244 = vmatpush.msra.mxu0 %v98
      %245 = vmatpush.msra.mxu0 %v94
      %246 = vmatpush.msra.mxu0 %v90
      %247 = vmatpush.msra.mxu0 %v86
      %248 = vmatpush.msra.mxu0 %v82
      %249 = vmatpush.msra.mxu0 %v78
      %250 = vmatpush.msra.mxu0 %v74
      %251 = vmatpush.msra.mxu0 %v70
      %252 = vmatmul.f32.gmra.mxu0 %v150
      %v253 = vpop.f32.mrf.mxu0
      %v254 = vadd.f32 0.0, %v253
      %255 = vdwg.mxu0
      %256 = vmatpush.msra.mxu0 0.0
      %257 = vmatpush.msra.mxu0 0.0
      %258 = vmatpush.msra.mxu0 0.0
      %259 = vmatpush.msra.mxu0 0.0
      %260 = vmatpush.msra.mxu0 0.0
      %261 = vmatpush.msra.mxu0 0.0
      %262 = vmatpush.msra.mxu0 0.0
      %263 = vmatpush.msra.mxu0 0.0
      %264 = vmatpush.msra.mxu0 0.0
      %265 = vmatpush.msra.mxu0 0.0
      %266 = vmatpush.msra.mxu0 0.0
      %267 = vmatpush.msra.mxu0 0.0
      %268 = vmatpush.msra.mxu0 %v146
      %269 = vmatpush.msra.mxu0 %v142
      %270 = vmatpush.msra.mxu0 %v138
      %271 = vmatpush.msra.mxu0 %v134
      %272 = vmatmul.f32.gmra.mxu0 %v154
      %v273 = vpop.f32.mrf.mxu0
      %v274 = vadd.f32 %v254, %v273
      %275 = vdwg.mxu0
      %276 = vmatpush.msra.mxu0 %v131
      %277 = vmatpush.msra.mxu0 %v127
      %278 = vmatpush.msra.mxu0 %v123
      %279 = vmatpush.msra.mxu0 %v119
      %280 = vmatpush.msra.mxu0 %v115
      %281 = vmatpush.msra.mxu0 %v111
      %282 = vmatpush.msra.mxu0 %v107
      %283 = vmatpush.msra.mxu0 %v103
      %284 = vmatpush.msra.mxu0 %v99
      %285 = vmatpush.msra.mxu0 %v95
      %286 = vmatpush.msra.mxu0 %v91
      %287 = vmatpush.msra.mxu0 %v87
      %288 = vmatpush.msra.mxu0 %v83
      %289 = vmatpush.msra.mxu0 %v79
      %290 = vmatpush.msra.mxu0 %v75
      %291 = vmatpush.msra.mxu0 %v71
      %292 = vmatmul.f32.gmra.mxu0 %v150
      %v293 = vpop.f32.mrf.mxu0
      %v294 = vadd.f32 0.0, %v293
      %295 = vdwg.mxu0
      %296 = vmatpush.msra.mxu0 0.0
      %297 = vmatpush.msra.mxu0 0.0
      %298 = vmatpush.msra.mxu0 0.0
      %299 = vmatpush.msra.mxu0 0.0
      %300 = vmatpush.msra.mxu0 0.0
      %301 = vmatpush.msra.mxu0 0.0
      %302 = vmatpush.msra.mxu0 0.0
      %303 = vmatpush.msra.mxu0 0.0
      %304 = vmatpush.msra.mxu0 0.0
      %305 = vmatpush.msra.mxu0 0.0
      %306 = vmatpush.msra.mxu0 0.0
      %307 = vmatpush.msra.mxu0 0.0
      %308 = vmatpush.msra.mxu0 %v147
      %309 = vmatpush.msra.mxu0 %v143
      %310 = vmatpush.msra.mxu0 %v139
      %311 = vmatpush.msra.mxu0 %v135
      %312 = vmatmul.f32.gmra.mxu0 %v154
      %v313 = vpop.f32.mrf.mxu0
      %v314 = vadd.f32 %v294, %v313
      %315 = vdwg.mxu0
      %v316 = vld [vmem:[#allocation4] sm:$0xff]
      %v317 = vld [vmem:[#allocation4 + $0x8] sm:$0xff]
      %v318 = vld [vmem:[#allocation4 + $0x10] sm:$0xff]
      %v319 = vld [vmem:[#allocation4 + $0x18] sm:$0xff]
      %v320 = vld [vmem:[#allocation4 + $0x20] sm:$0xff]
      %v321 = vld [vmem:[#allocation4 + $0x28] sm:$0xff]
      %v322 = vld [vmem:[#allocation4 + $0x30] sm:$0xff]
      %v323 = vld [vmem:[#allocation4 + $0x38] sm:$0xff]
      %v324 = vld [vmem:[#allocation4 + $0x40] sm:$0xff]
      %v325 = vld [vmem:[#allocation4 + $0x48] sm:$0xff]
      %v326 = vld [vmem:[#allocation4 + $0x50] sm:$0xff]
      %v327 = vld [vmem:[#allocation4 + $0x58] sm:$0xff]
      %v328 = vld [vmem:[#allocation4 + $0x60] sm:$0xff]
      %v329 = vld [vmem:[#allocation4 + $0x68] sm:$0xff]
      %v330 = vld [vmem:[#allocation4 + $0x70] sm:$0xff]
      %v331 = vld [vmem:[#allocation4 + $0x78] sm:$0xff]
      %v332 = vld [vmem:[#allocation4 + $0x80] sm:$0xff]
      %v333 = vld [vmem:[#allocation4 + $0x88] sm:$0xff]
      %v334 = vld [vmem:[#allocation4 + $0x90] sm:$0xff]
      %v335 = vld [vmem:[#allocation4 + $0x98] sm:$0xff]
      %v336 = vld [vmem:[#allocation4 + $0xa0] sm:$0xff]
      %v337 = vld [vmem:[#allocation4 + $0xa8] sm:$0xff]
      %v338 = vld [vmem:[#allocation4 + $0xb0] sm:$0xff]
      %v339 = vld [vmem:[#allocation4 + $0xb8] sm:$0xff]
      %v340 = vld [vmem:[#allocation4 + $0xc0] sm:$0xff]
      %v341 = vld [vmem:[#allocation4 + $0xc8] sm:$0xff]
      %v342 = vld [vmem:[#allocation4 + $0xd0] sm:$0xff]
      %v343 = vld [vmem:[#allocation4 + $0xd8] sm:$0xff]
      %v344 = vld [vmem:[#allocation4 + $0xe0] sm:$0xff]
      %v345 = vld [vmem:[#allocation4 + $0xe8] sm:$0xff]
      %v346 = vld [vmem:[#allocation4 + $0xf0] sm:$0xff]
      %v347 = vld [vmem:[#allocation4 + $0xf8] sm:$0xff]
      %v348 = vld [vmem:[#allocation4 + $0x100] sm:$0xff]
      %v349 = vld [vmem:[#allocation4 + $0x108] sm:$0xff]
      %v350 = vld [vmem:[#allocation4 + $0x110] sm:$0xff]
      %v351 = vld [vmem:[#allocation4 + $0x118] sm:$0xff]
      %v352 = vld [vmem:[#allocation4 + $0x120] sm:$0xff]
      %v353 = vld [vmem:[#allocation4 + $0x128] sm:$0xff]
      %v354 = vld [vmem:[#allocation4 + $0x130] sm:$0xff]
      %v355 = vld [vmem:[#allocation4 + $0x138] sm:$0xff]
      %v356 = vld [vmem:[#allocation4 + $0x140] sm:$0xff]
      %v357 = vld [vmem:[#allocation4 + $0x148] sm:$0xff]
      %v358 = vld [vmem:[#allocation4 + $0x150] sm:$0xff]
      %v359 = vld [vmem:[#allocation4 + $0x158] sm:$0xff]
      %v360 = vld [vmem:[#allocation4 + $0x160] sm:$0xff]
      %v361 = vld [vmem:[#allocation4 + $0x168] sm:$0xff]
      %v362 = vld [vmem:[#allocation4 + $0x170] sm:$0xff]
      %v363 = vld [vmem:[#allocation4 + $0x178] sm:$0xff]
      %v364 = vld [vmem:[#allocation4 + $0x180] sm:$0xff]
      %v365 = vld [vmem:[#allocation4 + $0x188] sm:$0xff]
      %v366 = vld [vmem:[#allocation4 + $0x190] sm:$0xff]
      %v367 = vld [vmem:[#allocation4 + $0x198] sm:$0xff]
      %v368 = vld [vmem:[#allocation4 + $0x1a0] sm:$0xff]
      %v369 = vld [vmem:[#allocation4 + $0x1a8] sm:$0xff]
      %v370 = vld [vmem:[#allocation4 + $0x1b0] sm:$0xff]
      %v371 = vld [vmem:[#allocation4 + $0x1b8] sm:$0xff]
      %v372 = vld [vmem:[#allocation4 + $0x1c0] sm:$0xff]
      %v373 = vld [vmem:[#allocation4 + $0x1c8] sm:$0xff]
      %v374 = vld [vmem:[#allocation4 + $0x1d0] sm:$0xff]
      %v375 = vld [vmem:[#allocation4 + $0x1d8] sm:$0xff]
      %v376 = vld [vmem:[#allocation4 + $0x1e0] sm:$0xff]
      %v377 = vld [vmem:[#allocation4 + $0x1e8] sm:$0xff]
      %v378 = vld [vmem:[#allocation4 + $0x1f0] sm:$0xff]
      %v379 = vld [vmem:[#allocation4 + $0x1f8] sm:$0xff]
      %v380 = vld [vmem:[#allocation4 + $0x200] sm:$0xff]
      %v381 = vld [vmem:[#allocation4 + $0x208] sm:$0xff]
      %v382 = vld [vmem:[#allocation4 + $0x210] sm:$0xff]
      %v383 = vld [vmem:[#allocation4 + $0x218] sm:$0xff]
      %v384 = vld [vmem:[#allocation4 + $0x220] sm:$0xff]
      %v385 = vld [vmem:[#allocation4 + $0x228] sm:$0xff]
      %v386 = vld [vmem:[#allocation4 + $0x230] sm:$0xff]
      %v387 = vld [vmem:[#allocation4 + $0x238] sm:$0xff]
      %v388 = vld [vmem:[#allocation4 + $0x240] sm:$0xff]
      %v389 = vld [vmem:[#allocation4 + $0x248] sm:$0xff]
      %v390 = vld [vmem:[#allocation4 + $0x250] sm:$0xff]
      %v391 = vld [vmem:[#allocation4 + $0x258] sm:$0xff]
      %v392 = vld [vmem:[#allocation4 + $0x260] sm:$0xff]
      %v393 = vld [vmem:[#allocation4 + $0x268] sm:$0xff]
      %v394 = vld [vmem:[#allocation4 + $0x270] sm:$0xff]
      %v395 = vld [vmem:[#allocation4 + $0x278] sm:$0xff]
      %397 = vst [vmem:[#allocation1] ss:$4 sm:$0xff] %v58
      %v398 = vld.sshfl [vmem:[#allocation1] sm:$0xff pattern:$0x73625140]
      %v399 = vld.sshfl [vmem:[#allocation1 + $0x8] sm:$0xff pattern:$0x73625140]
      %v401 = vsel %vm153, %v399, 0
      %403 = vmatpush.msra.mxu0 %v376
      %404 = vmatpush.msra.mxu0 %v372
      %405 = vmatpush.msra.mxu0 %v368
      %406 = vmatpush.msra.mxu0 %v364
      %407 = vmatpush.msra.mxu0 %v360
      %408 = vmatpush.msra.mxu0 %v356
      %409 = vmatpush.msra.mxu0 %v352
      %410 = vmatpush.msra.mxu0 %v348
      %411 = vmatpush.msra.mxu0 %v344
      %412 = vmatpush.msra.mxu0 %v340
      %413 = vmatpush.msra.mxu0 %v336
      %414 = vmatpush.msra.mxu0 %v332
      %415 = vmatpush.msra.mxu0 %v328
      %416 = vmatpush.msra.mxu0 %v324
      %417 = vmatpush.msra.mxu0 %v320
      %418 = vmatpush.msra.mxu0 %v316
      %419 = vmatmul.f32.gmra.mxu0 %v398
      %v420 = vpop.f32.mrf.mxu0
      %v421 = vadd.f32 0.0, %v420
      %422 = vdwg.mxu0
      %423 = vmatpush.msra.mxu0 0.0
      %424 = vmatpush.msra.mxu0 0.0
      %425 = vmatpush.msra.mxu0 0.0
      %426 = vmatpush.msra.mxu0 0.0
      %427 = vmatpush.msra.mxu0 0.0
      %428 = vmatpush.msra.mxu0 0.0
      %429 = vmatpush.msra.mxu0 0.0
      %430 = vmatpush.msra.mxu0 0.0
      %431 = vmatpush.msra.mxu0 0.0
      %432 = vmatpush.msra.mxu0 0.0
      %433 = vmatpush.msra.mxu0 0.0
      %434 = vmatpush.msra.mxu0 0.0
      %435 = vmatpush.msra.mxu0 %v392
      %436 = vmatpush.msra.mxu0 %v388
      %437 = vmatpush.msra.mxu0 %v384
      %438 = vmatpush.msra.mxu0 %v380
      %439 = vmatmul.f32.gmra.mxu0 %v401
      %v440 = vpop.f32.mrf.mxu0
      %v441 = vadd.f32 %v421, %v440
      %442 = vdwg.mxu0
      %443 = vmatpush.msra.mxu0 %v377
      %444 = vmatpush.msra.mxu0 %v373
      %445 = vmatpush.msra.mxu0 %v369
      %446 = vmatpush.msra.mxu0 %v365
      %447 = vmatpush.msra.mxu0 %v361
      %448 = vmatpush.msra.mxu0 %v357
      %449 = vmatpush.msra.mxu0 %v353
      %450 = vmatpush.msra.mxu0 %v349
      %451 = vmatpush.msra.mxu0 %v345
      %452 = vmatpush.msra.mxu0 %v341
      %453 = vmatpush.msra.mxu0 %v337
      %454 = vmatpush.msra.mxu0 %v333
      %455 = vmatpush.msra.mxu0 %v329
      %456 = vmatpush.msra.mxu0 %v325
      %457 = vmatpush.msra.mxu0 %v321
      %458 = vmatpush.msra.mxu0 %v317
      %459 = vmatmul.f32.gmra.mxu0 %v398
      %v460 = vpop.f32.mrf.mxu0
      %v461 = vadd.f32 0.0, %v460
      %462 = vdwg.mxu0
      %463 = vmatpush.msra.mxu0 0.0
      %464 = vmatpush.msra.mxu0 0.0
      %465 = vmatpush.msra.mxu0 0.0
      %466 = vmatpush.msra.mxu0 0.0
      %467 = vmatpush.msra.mxu0 0.0
      %468 = vmatpush.msra.mxu0 0.0
      %469 = vmatpush.msra.mxu0 0.0
      %470 = vmatpush.msra.mxu0 0.0
      %471 = vmatpush.msra.mxu0 0.0
      %472 = vmatpush.msra.mxu0 0.0
      %473 = vmatpush.msra.mxu0 0.0
      %474 = vmatpush.msra.mxu0 0.0
      %475 = vmatpush.msra.mxu0 %v393
      %476 = vmatpush.msra.mxu0 %v389
      %477 = vmatpush.msra.mxu0 %v385
      %478 = vmatpush.msra.mxu0 %v381
      %479 = vmatmul.f32.gmra.mxu0 %v401
      %v480 = vpop.f32.mrf.mxu0
      %v481 = vadd.f32 %v461, %v480
      %482 = vdwg.mxu0
      %483 = vmatpush.msra.mxu0 %v378
      %484 = vmatpush.msra.mxu0 %v374
      %485 = vmatpush.msra.mxu0 %v370
      %486 = vmatpush.msra.mxu0 %v366
      %487 = vmatpush.msra.mxu0 %v362
      %488 = vmatpush.msra.mxu0 %v358
      %489 = vmatpush.msra.mxu0 %v354
      %490 = vmatpush.msra.mxu0 %v350
      %491 = vmatpush.msra.mxu0 %v346
      %492 = vmatpush.msra.mxu0 %v342
      %493 = vmatpush.msra.mxu0 %v338
      %494 = vmatpush.msra.mxu0 %v334
      %495 = vmatpush.msra.mxu0 %v330
      %496 = vmatpush.msra.mxu0 %v326
      %497 = vmatpush.msra.mxu0 %v322
      %498 = vmatpush.msra.mxu0 %v318
      %499 = vmatmul.f32.gmra.mxu0 %v398
      %v500 = vpop.f32.mrf.mxu0
      %v501 = vadd.f32 0.0, %v500
      %502 = vdwg.mxu0
      %503 = vmatpush.msra.mxu0 0.0
      %504 = vmatpush.msra.mxu0 0.0
      %505 = vmatpush.msra.mxu0 0.0
      %506 = vmatpush.msra.mxu0 0.0
      %507 = vmatpush.msra.mxu0 0.0
      %508 = vmatpush.msra.mxu0 0.0
      %509 = vmatpush.msra.mxu0 0.0
      %510 = vmatpush.msra.mxu0 0.0
      %511 = vmatpush.msra.mxu0 0.0
      %512 = vmatpush.msra.mxu0 0.0
      %513 = vmatpush.msra.mxu0 0.0
      %514 = vmatpush.msra.mxu0 0.0
      %515 = vmatpush.msra.mxu0 %v394
      %516 = vmatpush.msra.mxu0 %v390
      %517 = vmatpush.msra.mxu0 %v386
      %518 = vmatpush.msra.mxu0 %v382
      %519 = vmatmul.f32.gmra.mxu0 %v401
      %v520 = vpop.f32.mrf.mxu0
      %v521 = vadd.f32 %v501, %v520
      %522 = vdwg.mxu0
      %523 = vmatpush.msra.mxu0 %v379
      %524 = vmatpush.msra.mxu0 %v375
      %525 = vmatpush.msra.mxu0 %v371
      %526 = vmatpush.msra.mxu0 %v367
      %527 = vmatpush.msra.mxu0 %v363
      %528 = vmatpush.msra.mxu0 %v359
      %529 = vmatpush.msra.mxu0 %v355
      %530 = vmatpush.msra.mxu0 %v351
      %531 = vmatpush.msra.mxu0 %v347
      %532 = vmatpush.msra.mxu0 %v343
      %533 = vmatpush.msra.mxu0 %v339
      %534 = vmatpush.msra.mxu0 %v335
      %535 = vmatpush.msra.mxu0 %v331
      %536 = vmatpush.msra.mxu0 %v327
      %537 = vmatpush.msra.mxu0 %v323
      %538 = vmatpush.msra.mxu0 %v319
      %539 = vmatmul.f32.gmra.mxu0 %v398
      %v540 = vpop.f32.mrf.mxu0
      %v541 = vadd.f32 0.0, %v540
      %542 = vdwg.mxu0
      %543 = vmatpush.msra.mxu0 0.0
      %544 = vmatpush.msra.mxu0 0.0
      %545 = vmatpush.msra.mxu0 0.0
      %546 = vmatpush.msra.mxu0 0.0
      %547 = vmatpush.msra.mxu0 0.0
      %548 = vmatpush.msra.mxu0 0.0
      %549 = vmatpush.msra.mxu0 0.0
      %550 = vmatpush.msra.mxu0 0.0
      %551 = vmatpush.msra.mxu0 0.0
      %552 = vmatpush.msra.mxu0 0.0
      %553 = vmatpush.msra.mxu0 0.0
      %554 = vmatpush.msra.mxu0 0.0
      %555 = vmatpush.msra.mxu0 %v395
      %556 = vmatpush.msra.mxu0 %v391
      %557 = vmatpush.msra.mxu0 %v387
      %558 = vmatpush.msra.mxu0 %v383
      %559 = vmatmul.f32.gmra.mxu0 %v401
      %v560 = vpop.f32.mrf.mxu0
      %v561 = vadd.f32 %v541, %v560
      %562 = vdwg.mxu0
      %v565 = vrot.slane %v234, 6
      %vm566 = vcmask 1041408
      %v567 = vsel %vm566, %v194, %v565
      %v569 = vadd.f32 %v63, %v567
      %v570 = vxor.u32 %v569, 2147483648
      %v571 = vmul.f32 %v570, 1.442695
      %v572 = vpow.pop %v571
      %v573 = vadd.f32 %v572, 1.0
      %v574 = vrcp.pop %v573
      %v575 = vmul.f32 %v573, %v574
      %v576 = vsub.f32 1.0, %v575
      %v577 = vmul.f32 %v574, %v576
      %v578 = vadd.f32 %v574, %v577
      %vm579 = vweird.f32 %v573
      %vm580 = vweird.f32 %v574
      %vm581 = vmor %vm579, %vm580
      %v582 = vsel %vm581, %v574, %v578
      %v583 = vand.u32 2147483647, %v573
      %vm584 = vcmp.eq.f32.partialorder %v583, 8.507059e+37
      %v585 = vand.u32 %v573, 2147483648
      %v586 = vor.u32 1.1754944e-38, %v585
      %v587 = vsel %vm584, %v586, %v582
      %v588 = vmul.f32 1.0, %v587
      %590 = vrot.lane.b32.xlu0 %v63, 96
      %v591 = vpop.permute.xlu0 %590
      %v592 = vrot.slane %v591, 2
      %v593 = vrot.slane %v591, 4
      %vm594 = vcmask 785408
      %v595 = vsel %vm594, %v592, %v593
      %v598 = vrot.slane %v274, 6
      %v599 = vsel %vm566, %v234, %v598
      %600 = vrot.lane.b32.xlu0 %v599, 96
      %v601 = vpop.permute.xlu0 %600
      %v602 = vrot.slane %v601, 2
      %v603 = vsel %vm594, %v601, %v602
      %v605 = vadd.f32 %v595, %v603
      %v606 = vxor.u32 %v605, 2147483648
      %v607 = vmul.f32 %v606, 1.442695
      %v608 = vpow.pop %v607
      %v609 = vadd.f32 %v608, 1.0
      %v610 = vrcp.pop %v609
      %v611 = vmul.f32 %v609, %v610
      %v612 = vsub.f32 1.0, %v611
      %v613 = vmul.f32 %v610, %v612
      %v614 = vadd.f32 %v610, %v613
      %vm615 = vweird.f32 %v609
      %vm616 = vweird.f32 %v610
      %vm617 = vmor %vm615, %vm616
      %v618 = vsel %vm617, %v610, %v614
      %v619 = vand.u32 2147483647, %v609
      %vm620 = vcmp.eq.f32.partialorder %v619, 8.507059e+37
      %v621 = vand.u32 %v609, 2147483648
      %v622 = vor.u32 1.1754944e-38, %v621
      %v623 = vsel %vm620, %v622, %v618
      %v624 = vmul.f32 1.0, %v623
      %v626 = vrot.slane %v314, 6
      %v627 = vsel %vm566, %v274, %v626
      %628 = vrot.lane.b32.xlu0 %v627, 64
      %v629 = vpop.permute.xlu0 %628
      %v630 = vrot.slane %v629, 2
      %vm631 = vcmask 523264
      %v632 = vsel %vm631, %v629, %v630
      %v634 = vmul.f32 %v588, %v632
      %635 = vrot.lane.b32.xlu0 %v63, 64
      %v636 = vpop.permute.xlu0 %635
      %v637 = vrot.slane %v636, 4
      %v638 = vrot.slane %v636, 6
      %v639 = vsel %vm631, %v637, %v638
      %v641 = vadd.f32 %v639, %v634
      %v642 = vtanh.pop %v641
      %v643 = vsub.f32 1.0, %v624
      %v644 = vmul.f32 %v643, %v642
      %v645 = vmul.f32 %v624, %v57
      %v646 = vadd.f32 %v644, %v645
      %v649 = vrot.slane %v481, 6
      %v650 = vsel %vm566, %v441, %v649
      %v652 = vadd.f32 %v67, %v650
      %v653 = vxor.u32 %v652, 2147483648
      %v654 = vmul.f32 %v653, 1.442695
      %v655 = vpow.pop %v654
      %v656 = vadd.f32 %v655, 1.0
      %v657 = vrcp.pop %v656
      %v658 = vmul.f32 %v656, %v657
      %v659 = vsub.f32 1.0, %v658
      %v660 = vmul.f32 %v657, %v659
      %v661 = vadd.f32 %v657, %v660
      %vm662 = vweird.f32 %v656
      %vm663 = vweird.f32 %v657
      %vm664 = vmor %vm662, %vm663
      %v665 = vsel %vm664, %v657, %v661
      %v666 = vand.u32 2147483647, %v656
      %vm667 = vcmp.eq.f32.partialorder %v666, 8.507059e+37
      %v668 = vand.u32 %v656, 2147483648
      %v669 = vor.u32 1.1754944e-38, %v668
      %v670 = vsel %vm667, %v669, %v665
      %v671 = vmul.f32 1.0, %v670
      %673 = vrot.lane.b32.xlu0 %v67, 96
      %v674 = vpop.permute.xlu0 %673
      %v675 = vrot.slane %v674, 2
      %v676 = vrot.slane %v674, 4
      %v677 = vsel %vm594, %v675, %v676
      %v680 = vrot.slane %v521, 6
      %v681 = vsel %vm566, %v481, %v680
      %682 = vrot.lane.b32.xlu0 %v681, 96
      %v683 = vpop.permute.xlu0 %682
      %v684 = vrot.slane %v683, 2
      %v685 = vsel %vm594, %v683, %v684
      %v687 = vadd.f32 %v677, %v685
      %v688 = vxor.u32 %v687, 2147483648
      %v689 = vmul.f32 %v688, 1.442695
      %v690 = vpow.pop %v689
      %v691 = vadd.f32 %v690, 1.0
      %v692 = vrcp.pop %v691
      %v693 = vmul.f32 %v691, %v692
      %v694 = vsub.f32 1.0, %v693
      %v695 = vmul.f32 %v692, %v694
      %v696 = vadd.f32 %v692, %v695
      %vm697 = vweird.f32 %v691
      %vm698 = vweird.f32 %v692
      %vm699 = vmor %vm697, %vm698
      %v700 = vsel %vm699, %v692, %v696
      %v701 = vand.u32 2147483647, %v691
      %vm702 = vcmp.eq.f32.partialorder %v701, 8.507059e+37
      %v703 = vand.u32 %v691, 2147483648
      %v704 = vor.u32 1.1754944e-38, %v703
      %v705 = vsel %vm702, %v704, %v700
      %v706 = vmul.f32 1.0, %v705
      %v708 = vrot.slane %v561, 6
      %v709 = vsel %vm566, %v521, %v708
      %710 = vrot.lane.b32.xlu0 %v709, 64
      %v711 = vpop.permute.xlu0 %710
      %v712 = vrot.slane %v711, 2
      %v713 = vsel %vm631, %v711, %v712
      %v715 = vmul.f32 %v671, %v713
      %716 = vrot.lane.b32.xlu0 %v67, 64
      %v717 = vpop.permute.xlu0 %716
      %v718 = vrot.slane %v717, 4
      %v719 = vrot.slane %v717, 6
      %v720 = vsel %vm631, %v718, %v719
      %v722 = vadd.f32 %v720, %v715
      %v723 = vtanh.pop %v722
      %v724 = vsub.f32 1.0, %v706
      %v725 = vmul.f32 %v724, %v723
      %v726 = vmul.f32 %v706, %v58
      %v727 = vadd.f32 %v725, %v726
      %s728 = smul.u32 %s52, 2
      %s729 = smul.addr %s728, 2
      %s730 = scalar_lea.vmem %s4, %s729
      %vm731 = vcmask 257026
      %vm732 = vmor %vm731, %vm566
      %733 = vst.msk [vmem:[%s730] sm:$0xf] %vm732, %v646
      %s734 = smul.u32 %s59, 2
      %s735 = smul.addr %s734, 2
      %s736 = scalar_lea.vmem %s5, %s735
      %737 = vst.msk [vmem:[%s736] sm:$0xf] %vm732, %v727
    $region30: #{voicefixer_forward.10} parent=1 // loop_footer
      %s56 = sadd.s32 1, %s52
    $region31: #{voicefixer_forward.10} parent=1 // loop_footer_branch
      %51 = sbr.rel target = $region27
    $region32: #{voicefixer_forward.10} parent=1 // loop_exit
      _
    // Predicated region
    $region33: #{voicefixer_forward.10} parent=1 // pred_check
      _
    $region34: #{voicefixer_forward.10} parent=1 // pred_check_branch
      %739 = sbr.rel (0) target = $region36
    $region35: #{voicefixer_forward.10} parent=1 // pred_region
      _
    $region36: #{voicefixer_forward.10} parent=1 // pred_fallthru
      _
    // Predicated region
    $region37: #{voicefixer_forward.10} parent=1 // pred_check
      _
    $region38: #{voicefixer_forward.10} parent=1 // pred_check_branch
      %741 = sbr.rel (0) target = $region40
    $region39: #{voicefixer_forward.10} parent=1 // pred_region
      _
    $region40: #{voicefixer_forward.10} parent=1 // pred_fallthru
      _
    // Predicated region
    $region41: #{voicefixer_forward.10} parent=1 // pred_check
      _
    $region42: #{voicefixer_forward.10} parent=1 // pred_check_branch
      %743 = sbr.rel (0) target = $region44
    $region43: #{voicefixer_forward.10} parent=1 // pred_region
      _
    $region44: #{voicefixer_forward.10} parent=1 // pred_fallthru
      _
    // Predicated region
    $region45: #{voicefixer_forward.10} parent=1 // pred_check
      _
    $region46: #{voicefixer_forward.10} parent=1 // pred_check_branch
      %745 = sbr.rel (0) target = $region48
    $region47: #{voicefixer_forward.10} parent=1 // pred_region
      _
    $region48: #{voicefixer_forward.10} parent=1 // pred_fallthru
      _
    %746 = vsyncpa [#allocation3], 1
    %747 = vsyncpa [#allocation5], 1

// kernel: voicefixer_forward.11
$region0: #{voicefixer_forward.11}
  #allocation0 [shape = 'u32[]', space=smem, size = 0x4, offset = 0x4, fixed_abs, tag = 'smem constant byte address 0x4 - core index']
  #allocation1 [shape = 'u32[72,128]{1,0:T(1,128)}', space=vmem, size = 0x9000, scoped, tag = 'internal scratch']
  %s0 = inlined_call_operand.vmem [shape: f32[16,160], index: 0, kind: input, shape index: {}]
  %s1 = inlined_call_operand.vmem [shape: f32[16,160], index: 1, kind: input, shape index: {}]
  %s2 = inlined_call_operand.hbm [shape: bf16[160,480], index: 2, kind: input, shape index: {}]
  %s3 = inlined_call_operand.hbm [shape: bf16[160,480], index: 3, kind: input, shape index: {}]
  %s4 = inlined_call_operand.hbm [shape: bf16[160,480], index: 4, kind: input, shape index: {}]
  %s5 = inlined_call_operand.hbm [shape: bf16[160,480], index: 5, kind: input, shape index: {}]
  %s6 = inlined_call_operand.vmem [shape: f32[16,480], index: 6, kind: output, shape index: {0}]
  %s7 = inlined_call_operand.vmem [shape: f32[16,480], index: 7, kind: output, shape index: {1}]
  %8 = xla_tuple %s6, %s7
  %s9 = sld [smem:[#allocation0]]
  $region58: #{voicefixer_forward.11} parent=0
    _
  %s11 = ssub.s32 1, %s9
  %s12 = scalar_select 0, %s11, %s9
  $region1: #{voicefixer_forward.11} parent=0
    #allocation2 [shape = 'u8[163840]{0}', space=vmem, size = 0x28000, scoped, tag = 'input window, operand 2, single buffered']
    #allocation3 [shape = 's32[1]{0}', space=sflag, size = 0x4, scoped, tag = 'scoped memory for voicefixer_forward.11']
    #allocation4 [shape = 'u8[163840]{0}', space=vmem, size = 0x28000, scoped, tag = 'input window, operand 3, single buffered']
    #allocation5 [shape = 's32[1]{0}', space=sflag, size = 0x4, scoped, tag = 'scoped memory for voicefixer_forward.11']
    #allocation6 [shape = 'u8[163840]{0}', space=vmem, size = 0x28000, scoped, tag = 'input window, operand 4, single buffered']
    #allocation7 [shape = 'u8[163840]{0}', space=vmem, size = 0x28000, scoped, tag = 'input window, operand 5, single buffered']
    #allocation8 [shape = 's32[1]{0}', space=sflag, size = 0x4, scoped, tag = 'scoped memory for voicefixer_forward.11']
    %13 = vsyncpa [#allocation3], 0
    %14 = vsyncpa [#allocation5], 0
    %15 = vsyncpa [#allocation8], 0
    // Predicated region
    $region2: #{voicefixer_forward.11} parent=1 // pred_check
      _
    $region3: #{voicefixer_forward.11} parent=1 // pred_check_branch
      %17 = sbr.rel (0) target = $region5
    $region4: #{voicefixer_forward.11} parent=1 // pred_region
      _
    $region5: #{voicefixer_forward.11} parent=1 // pred_fallthru
      _
    // Predicated region
    $region6: #{voicefixer_forward.11} parent=1 // pred_check
      _
    $region7: #{voicefixer_forward.11} parent=1 // pred_check_branch
      %19 = sbr.rel (0) target = $region9
    $region8: #{voicefixer_forward.11} parent=1 // pred_region
      _
    $region9: #{voicefixer_forward.11} parent=1 // pred_fallthru
      _
    // Predicated region
    $region10: #{voicefixer_forward.11} parent=1 // pred_check
      _
    $region11: #{voicefixer_forward.11} parent=1 // pred_check_branch
      %21 = sbr.rel (0) target = $region13
    $region12: #{voicefixer_forward.11} parent=1 // pred_region
      %23 = vsyncadd [#allocation3], 0
      %s24 = sshll.u32 %s2, 4
      %s25 = int_to_ptr.hbm [resolvable:$true] %s24
      %s26 = sshll.u32 [#allocation2], 4
      %s27 = int_to_ptr.vmem [resolvable:$true] %s26
      %32 = dma.hbm_to_vmem [thread:$0]  %s25, 5120, %s27, [#allocation3], 256, 256, 16
    $region13: #{voicefixer_forward.11} parent=1 // pred_fallthru
      _
    // Predicated region
    $region14: #{voicefixer_forward.11} parent=1 // pred_check
      _
    $region15: #{voicefixer_forward.11} parent=1 // pred_check_branch
      %34 = sbr.rel (0) target = $region17
    $region16: #{voicefixer_forward.11} parent=1 // pred_region
      %36 = vsyncadd [#allocation5], 0
      %s37 = sshll.u32 %s3, 4
      %s38 = int_to_ptr.hbm [resolvable:$true] %s37
      %s39 = sshll.u32 [#allocation4], 4
      %s40 = int_to_ptr.vmem [resolvable:$true] %s39
      %45 = dma.hbm_to_vmem [thread:$0]  %s38, 5120, %s40, [#allocation5], 256, 256, 16
    $region17: #{voicefixer_forward.11} parent=1 // pred_fallthru
      _
    // Predicated region
    $region18: #{voicefixer_forward.11} parent=1 // pred_check
      _
    $region19: #{voicefixer_forward.11} parent=1 // pred_check_branch
      %47 = sbr.rel (0) target = $region21
    $region20: #{voicefixer_forward.11} parent=1 // pred_region
      %49 = vsyncadd [#allocation5], 0
      %s50 = sshll.u32 %s4, 4
      %s51 = int_to_ptr.hbm [resolvable:$true] %s50
      %s52 = sshll.u32 [#allocation6], 4
      %s53 = int_to_ptr.vmem [resolvable:$true] %s52
      %58 = dma.hbm_to_vmem [thread:$0]  %s51, 5120, %s53, [#allocation5], 256, 256, 16
    $region21: #{voicefixer_forward.11} parent=1 // pred_fallthru
      _
    // Predicated region
    $region22: #{voicefixer_forward.11} parent=1 // pred_check
      _
    $region23: #{voicefixer_forward.11} parent=1 // pred_check_branch
      %60 = sbr.rel (0) target = $region25
    $region24: #{voicefixer_forward.11} parent=1 // pred_region
      %62 = vsyncadd [#allocation8], 0
      %s63 = sshll.u32 %s5, 4
      %s64 = int_to_ptr.hbm [resolvable:$true] %s63
      %s65 = sshll.u32 [#allocation7], 4
      %s66 = int_to_ptr.vmem [resolvable:$true] %s65
      %71 = dma.hbm_to_vmem [thread:$0]  %s64, 5120, %s66, [#allocation8], 256, 256, 16
    $region25: #{voicefixer_forward.11} parent=1 // pred_fallthru
      _
    // Predicated region
    $region26: #{voicefixer_forward.11} parent=1 // pred_check
      _
    $region27: #{voicefixer_forward.11} parent=1 // pred_check_branch
      %73 = sbr.rel (0) target = $region29
    $region28: #{voicefixer_forward.11} parent=1 // pred_region
      %75 = dma.done [#allocation3], 5120
    $region29: #{voicefixer_forward.11} parent=1 // pred_fallthru
      _
    // Predicated region
    $region30: #{voicefixer_forward.11} parent=1 // pred_check
      _
    $region31: #{voicefixer_forward.11} parent=1 // pred_check_branch
      %77 = sbr.rel (0) target = $region33
    $region32: #{voicefixer_forward.11} parent=1 // pred_region
      %79 = dma.done [#allocation5], 5120
    $region33: #{voicefixer_forward.11} parent=1 // pred_fallthru
      _
    // Predicated region
    $region34: #{voicefixer_forward.11} parent=1 // pred_check
      _
    $region35: #{voicefixer_forward.11} parent=1 // pred_check_branch
      %81 = sbr.rel (0) target = $region37
    $region36: #{voicefixer_forward.11} parent=1 // pred_region
      %83 = dma.done [#allocation5], 5120
    $region37: #{voicefixer_forward.11} parent=1 // pred_fallthru
      _
    // Predicated region
    $region38: #{voicefixer_forward.11} parent=1 // pred_check
      _
    $region39: #{voicefixer_forward.11} parent=1 // pred_check_branch
      %85 = sbr.rel (0) target = $region41
    $region40: #{voicefixer_forward.11} parent=1 // pred_region
      %87 = dma.done [#allocation8], 5120
    $region41: #{voicefixer_forward.11} parent=1 // pred_fallthru
      _
    %v89 = vld [vmem:[%s0] sm:$0xff]
    %v90 = vld [vmem:[%s0 + $0x8] sm:$0xff]
    %v91 = vld [vmem:[%s0 + $0x10] sm:$0xff]
    %v92 = vld [vmem:[%s0 + $0x18] sm:$0xff]
    %v93 = vpack.c.bf16 %v91, %v89
    %v94 = vpack.c.bf16 %v92, %v90
    %v95 = vld [vmem:[%s1] sm:$0xff]
    %v96 = vld [vmem:[%s1 + $0x8] sm:$0xff]
    %v97 = vld [vmem:[%s1 + $0x10] sm:$0xff]
    %v98 = vld [vmem:[%s1 + $0x18] sm:$0xff]
    %v99 = vpack.c.bf16 %v97, %v95
    %v100 = vpack.c.bf16 %v98, %v96
    %v101 = vld [vmem:[#allocation2] sm:$0xff]
    %v102 = vld [vmem:[#allocation2 + $0x8] sm:$0xff]
    %v103 = vld [vmem:[#allocation2 + $0x10] sm:$0xff]
    %v104 = vld [vmem:[#allocation2 + $0x18] sm:$0xff]
    %v105 = vld [vmem:[#allocation2 + $0x20] sm:$0xff]
    %v106 = vld [vmem:[#allocation2 + $0x28] sm:$0xff]
    %v107 = vld [vmem:[#allocation2 + $0x30] sm:$0xff]
    %v108 = vld [vmem:[#allocation2 + $0x38] sm:$0xff]
    %v109 = vld [vmem:[#allocation2 + $0x40] sm:$0xff]
    %v110 = vld [vmem:[#allocation2 + $0x48] sm:$0xff]
    %v111 = vld [vmem:[#allocation2 + $0x50] sm:$0xff]
    %v112 = vld [vmem:[#allocation2 + $0x58] sm:$0xff]
    %v113 = vld [vmem:[#allocation2 + $0x60] sm:$0xff]
    %v114 = vld [vmem:[#allocation2 + $0x68] sm:$0xff]
    %v115 = vld [vmem:[#allocation2 + $0x70] sm:$0xff]
    %v116 = vld [vmem:[#allocation2 + $0x78] sm:$0xff]
    %v117 = vld [vmem:[#allocation2 + $0x80] sm:$0xff]
    %v118 = vld [vmem:[#allocation2 + $0x88] sm:$0xff]
    %v119 = vld [vmem:[#allocation2 + $0x90] sm:$0xff]
    %v120 = vld [vmem:[#allocation2 + $0x98] sm:$0xff]
    %v121 = vld [vmem:[#allocation2 + $0xa0] sm:$0xff]
    %v122 = vld [vmem:[#allocation2 + $0xa8] sm:$0xff]
    %v123 = vld [vmem:[#allocation2 + $0xb0] sm:$0xff]
    %v124 = vld [vmem:[#allocation2 + $0xb8] sm:$0xff]
    %v125 = vld [vmem:[#allocation2 + $0xc0] sm:$0xff]
    %v126 = vld [vmem:[#allocation2 + $0xc8] sm:$0xff]
    %v127 = vld [vmem:[#allocation2 + $0xd0] sm:$0xff]
    %v128 = vld [vmem:[#allocation2 + $0xd8] sm:$0xff]
    %v129 = vld [vmem:[#allocation2 + $0xe0] sm:$0xff]
    %v130 = vld [vmem:[#allocation2 + $0xe8] sm:$0xff]
    %v131 = vld [vmem:[#allocation2 + $0xf0] sm:$0xff]
    %v132 = vld [vmem:[#allocation2 + $0xf8] sm:$0xff]
    %v133 = vld [vmem:[#allocation2 + $0x100] sm:$0xff]
    %v134 = vld [vmem:[#allocation2 + $0x108] sm:$0xff]
    %v135 = vld [vmem:[#allocation2 + $0x110] sm:$0xff]
    %v136 = vld [vmem:[#allocation2 + $0x118] sm:$0xff]
    %v137 = vld [vmem:[#allocation2 + $0x120] sm:$0xff]
    %v138 = vld [vmem:[#allocation2 + $0x128] sm:$0xff]
    %v139 = vld [vmem:[#allocation2 + $0x130] sm:$0xff]
    %v140 = vld [vmem:[#allocation2 + $0x138] sm:$0xff]
    %v141 = vld [vmem:[#allocation4] sm:$0xff]
    %v142 = vld [vmem:[#allocation4 + $0x8] sm:$0xff]
    %v143 = vld [vmem:[#allocation4 + $0x10] sm:$0xff]
    %v144 = vld [vmem:[#allocation4 + $0x18] sm:$0xff]
    %v145 = vld [vmem:[#allocation4 + $0x20] sm:$0xff]
    %v146 = vld [vmem:[#allocation4 + $0x28] sm:$0xff]
    %v147 = vld [vmem:[#allocation4 + $0x30] sm:$0xff]
    %v148 = vld [vmem:[#allocation4 + $0x38] sm:$0xff]
    %v149 = vld [vmem:[#allocation4 + $0x40] sm:$0xff]
    %v150 = vld [vmem:[#allocation4 + $0x48] sm:$0xff]
    %v151 = vld [vmem:[#allocation4 + $0x50] sm:$0xff]
    %v152 = vld [vmem:[#allocation4 + $0x58] sm:$0xff]
    %v153 = vld [vmem:[#allocation4 + $0x60] sm:$0xff]
    %v154 = vld [vmem:[#allocation4 + $0x68] sm:$0xff]
    %v155 = vld [vmem:[#allocation4 + $0x70] sm:$0xff]
    %v156 = vld [vmem:[#allocation4 + $0x78] sm:$0xff]
    %v157 = vld [vmem:[#allocation4 + $0x80] sm:$0xff]
    %v158 = vld [vmem:[#allocation4 + $0x88] sm:$0xff]
    %v159 = vld [vmem:[#allocation4 + $0x90] sm:$0xff]
    %v160 = vld [vmem:[#allocation4 + $0x98] sm:$0xff]
    %v161 = vld [vmem:[#allocation4 + $0xa0] sm:$0xff]
    %v162 = vld [vmem:[#allocation4 + $0xa8] sm:$0xff]
    %v163 = vld [vmem:[#allocation4 + $0xb0] sm:$0xff]
    %v164 = vld [vmem:[#allocation4 + $0xb8] sm:$0xff]
    %v165 = vld [vmem:[#allocation4 + $0xc0] sm:$0xff]
    %v166 = vld [vmem:[#allocation4 + $0xc8] sm:$0xff]
    %v167 = vld [vmem:[#allocation4 + $0xd0] sm:$0xff]
    %v168 = vld [vmem:[#allocation4 + $0xd8] sm:$0xff]
    %v169 = vld [vmem:[#allocation4 + $0xe0] sm:$0xff]
    %v170 = vld [vmem:[#allocation4 + $0xe8] sm:$0xff]
    %v171 = vld [vmem:[#allocation4 + $0xf0] sm:$0xff]
    %v172 = vld [vmem:[#allocation4 + $0xf8] sm:$0xff]
    %v173 = vld [vmem:[#allocation4 + $0x100] sm:$0xff]
    %v174 = vld [vmem:[#allocation4 + $0x108] sm:$0xff]
    %v175 = vld [vmem:[#allocation4 + $0x110] sm:$0xff]
    %v176 = vld [vmem:[#allocation4 + $0x118] sm:$0xff]
    %v177 = vld [vmem:[#allocation4 + $0x120] sm:$0xff]
    %v178 = vld [vmem:[#allocation4 + $0x128] sm:$0xff]
    %v179 = vld [vmem:[#allocation4 + $0x130] sm:$0xff]
    %v180 = vld [vmem:[#allocation4 + $0x138] sm:$0xff]
    %v221 = vunpack.c.l.b16 %v141
    %v222 = vunpack.c.h.b16 %v141
    %v223 = vunpack.c.l.b16 %v142
    %v224 = vunpack.c.h.b16 %v142
    %v225 = vunpack.c.l.b16 %v143
    %v226 = vunpack.c.h.b16 %v143
    %v227 = vunpack.c.l.b16 %v144
    %v228 = vunpack.c.h.b16 %v144
    %v229 = vunpack.c.l.b16 %v145
    %v230 = vunpack.c.h.b16 %v145
    %v231 = vunpack.c.l.b16 %v146
    %v232 = vunpack.c.h.b16 %v146
    %v233 = vunpack.c.l.b16 %v147
    %v234 = vunpack.c.h.b16 %v147
    %v235 = vunpack.c.l.b16 %v148
    %v236 = vunpack.c.h.b16 %v148
    %v237 = vunpack.c.l.b16 %v149
    %v238 = vunpack.c.h.b16 %v149
    %v239 = vunpack.c.l.b16 %v150
    %v240 = vunpack.c.h.b16 %v150
    %v241 = vunpack.c.l.b16 %v151
    %v242 = vunpack.c.h.b16 %v151
    %v243 = vunpack.c.l.b16 %v152
    %v244 = vunpack.c.h.b16 %v152
    %v245 = vunpack.c.l.b16 %v153
    %v246 = vunpack.c.h.b16 %v153
    %v247 = vunpack.c.l.b16 %v154
    %v248 = vunpack.c.h.b16 %v154
    %v249 = vunpack.c.l.b16 %v155
    %v250 = vunpack.c.h.b16 %v155
    %v251 = vunpack.c.l.b16 %v156
    %v252 = vunpack.c.h.b16 %v156
    %v253 = vunpack.c.l.b16 %v157
    %v254 = vunpack.c.h.b16 %v157
    %v255 = vunpack.c.l.b16 %v158
    %v256 = vunpack.c.h.b16 %v158
    %v257 = vunpack.c.l.b16 %v159
    %v258 = vunpack.c.h.b16 %v159
    %v259 = vunpack.c.l.b16 %v160
    %v260 = vunpack.c.h.b16 %v160
    %v261 = vunpack.c.l.b16 %v161
    %v262 = vunpack.c.h.b16 %v161
    %v263 = vunpack.c.l.b16 %v162
    %v264 = vunpack.c.h.b16 %v162
    %v265 = vunpack.c.l.b16 %v163
    %v266 = vunpack.c.h.b16 %v163
    %v267 = vunpack.c.l.b16 %v164
    %v268 = vunpack.c.h.b16 %v164
    %v269 = vunpack.c.l.b16 %v165
    %v270 = vunpack.c.h.b16 %v165
    %v271 = vunpack.c.l.b16 %v166
    %v272 = vunpack.c.h.b16 %v166
    %v273 = vunpack.c.l.b16 %v167
    %v274 = vunpack.c.h.b16 %v167
    %v275 = vunpack.c.l.b16 %v168
    %v276 = vunpack.c.h.b16 %v168
    %v277 = vunpack.c.l.b16 %v169
    %v278 = vunpack.c.h.b16 %v169
    %v279 = vunpack.c.l.b16 %v170
    %v280 = vunpack.c.h.b16 %v170
    %v281 = vunpack.c.l.b16 %v171
    %v282 = vunpack.c.h.b16 %v171
    %v283 = vunpack.c.l.b16 %v172
    %v284 = vunpack.c.h.b16 %v172
    %v285 = vunpack.c.l.b16 %v173
    %v286 = vunpack.c.h.b16 %v173
    %v287 = vunpack.c.l.b16 %v174
    %v288 = vunpack.c.h.b16 %v174
    %v289 = vunpack.c.l.b16 %v175
    %v290 = vunpack.c.h.b16 %v175
    %v291 = vunpack.c.l.b16 %v176
    %v292 = vunpack.c.h.b16 %v176
    %v293 = vunpack.c.l.b16 %v177
    %v294 = vunpack.c.h.b16 %v177
    %v295 = vunpack.c.l.b16 %v178
    %v296 = vunpack.c.h.b16 %v178
    %v297 = vunpack.c.l.b16 %v179
    %v298 = vunpack.c.h.b16 %v179
    %v299 = vunpack.c.l.b16 %v180
    %v300 = vunpack.c.h.b16 %v180
    %v301 = vpack.c.b16 %v225, %v221
    %v302 = vpack.c.b16 %v226, %v222
    %v303 = vpack.c.b16 %v227, %v223
    %v304 = vpack.c.b16 %v228, %v224
    %v305 = vpack.c.b16 %v233, %v229
    %v306 = vpack.c.b16 %v234, %v230
    %v307 = vpack.c.b16 %v235, %v231
    %v308 = vpack.c.b16 %v236, %v232
    %v309 = vpack.c.b16 %v241, %v237
    %v310 = vpack.c.b16 %v242, %v238
    %v311 = vpack.c.b16 %v243, %v239
    %v312 = vpack.c.b16 %v244, %v240
    %v313 = vpack.c.b16 %v249, %v245
    %v314 = vpack.c.b16 %v250, %v246
    %v315 = vpack.c.b16 %v251, %v247
    %v316 = vpack.c.b16 %v252, %v248
    %v317 = vpack.c.b16 %v257, %v253
    %v318 = vpack.c.b16 %v258, %v254
    %v319 = vpack.c.b16 %v259, %v255
    %v320 = vpack.c.b16 %v260, %v256
    %v321 = vpack.c.b16 %v265, %v261
    %v322 = vpack.c.b16 %v266, %v262
    %v323 = vpack.c.b16 %v267, %v263
    %v324 = vpack.c.b16 %v268, %v264
    %v325 = vpack.c.b16 %v273, %v269
    %v326 = vpack.c.b16 %v274, %v270
    %v327 = vpack.c.b16 %v275, %v271
    %v328 = vpack.c.b16 %v276, %v272
    %v329 = vpack.c.b16 %v281, %v277
    %v330 = vpack.c.b16 %v282, %v278
    %v331 = vpack.c.b16 %v283, %v279
    %v332 = vpack.c.b16 %v284, %v280
    %v333 = vpack.c.b16 %v289, %v285
    %v334 = vpack.c.b16 %v290, %v286
    %v335 = vpack.c.b16 %v291, %v287
    %v336 = vpack.c.b16 %v292, %v288
    %v337 = vpack.c.b16 %v297, %v293
    %v338 = vpack.c.b16 %v298, %v294
    %v339 = vpack.c.b16 %v299, %v295
    %v340 = vpack.c.b16 %v300, %v296
    %vm381 = vcmask 261120
    %v383 = vsel %vm381, %v100, 0
    %385 = vmatpush.bf16.msra.mxu0 %v329
    %386 = vmatpush.bf16.msra.mxu0 %v325
    %387 = vmatpush.bf16.msra.mxu0 %v321
    %388 = vmatpush.bf16.msra.mxu0 %v317
    %389 = vmatpush.bf16.msra.mxu0 %v313
    %390 = vmatpush.bf16.msra.mxu0 %v309
    %391 = vmatpush.bf16.msra.mxu0 %v305
    %392 = vmatpush.bf16.msra.mxu0 %v301
    %393 = vmatmul.bf16.gmra.mxu0 %v99
    %v394 = vpop.f32.mrf.mxu0
    %v395 = vadd.f32 0.0, %v394
    %v396 = vpop.f32.mrf.mxu0
    %v397 = vadd.f32 0.0, %v396
    %398 = vdwg.mxu0
    %399 = vmatpush.bf16.msra.mxu0 0
    %400 = vmatpush.bf16.msra.mxu0 0
    %401 = vmatpush.bf16.msra.mxu0 0
    %402 = vmatpush.bf16.msra.mxu0 0
    %403 = vmatpush.bf16.msra.mxu0 0
    %404 = vmatpush.bf16.msra.mxu0 0
    %405 = vmatpush.bf16.msra.mxu0 %v337
    %406 = vmatpush.bf16.msra.mxu0 %v333
    %407 = vmatmul.bf16.gmra.mxu0 %v383
    %v408 = vpop.f32.mrf.mxu0
    %v409 = vadd.f32 %v395, %v408
    %v410 = vpop.f32.mrf.mxu0
    %v411 = vadd.f32 %v397, %v410
    %412 = vdwg.mxu0
    %413 = vmatpush.bf16.msra.mxu0 %v330
    %414 = vmatpush.bf16.msra.mxu0 %v326
    %415 = vmatpush.bf16.msra.mxu0 %v322
    %416 = vmatpush.bf16.msra.mxu0 %v318
    %417 = vmatpush.bf16.msra.mxu0 %v314
    %418 = vmatpush.bf16.msra.mxu0 %v310
    %419 = vmatpush.bf16.msra.mxu0 %v306
    %420 = vmatpush.bf16.msra.mxu0 %v302
    %421 = vmatmul.bf16.gmra.mxu0 %v99
    %v422 = vpop.f32.mrf.mxu0
    %v423 = vadd.f32 0.0, %v422
    %v424 = vpop.f32.mrf.mxu0
    %v425 = vadd.f32 0.0, %v424
    %426 = vdwg.mxu0
    %427 = vmatpush.bf16.msra.mxu0 0
    %428 = vmatpush.bf16.msra.mxu0 0
    %429 = vmatpush.bf16.msra.mxu0 0
    %430 = vmatpush.bf16.msra.mxu0 0
    %431 = vmatpush.bf16.msra.mxu0 0
    %432 = vmatpush.bf16.msra.mxu0 0
    %433 = vmatpush.bf16.msra.mxu0 %v338
    %434 = vmatpush.bf16.msra.mxu0 %v334
    %435 = vmatmul.bf16.gmra.mxu0 %v383
    %v436 = vpop.f32.mrf.mxu0
    %v437 = vadd.f32 %v423, %v436
    %v438 = vpop.f32.mrf.mxu0
    %v439 = vadd.f32 %v425, %v438
    %440 = vdwg.mxu0
    %441 = vmatpush.bf16.msra.mxu0 %v331
    %442 = vmatpush.bf16.msra.mxu0 %v327
    %443 = vmatpush.bf16.msra.mxu0 %v323
    %444 = vmatpush.bf16.msra.mxu0 %v319
    %445 = vmatpush.bf16.msra.mxu0 %v315
    %446 = vmatpush.bf16.msra.mxu0 %v311
    %447 = vmatpush.bf16.msra.mxu0 %v307
    %448 = vmatpush.bf16.msra.mxu0 %v303
    %449 = vmatmul.bf16.gmra.mxu0 %v99
    %v450 = vpop.f32.mrf.mxu0
    %v451 = vadd.f32 0.0, %v450
    %v452 = vpop.f32.mrf.mxu0
    %v453 = vadd.f32 0.0, %v452
    %454 = vdwg.mxu0
    %455 = vmatpush.bf16.msra.mxu0 0
    %456 = vmatpush.bf16.msra.mxu0 0
    %457 = vmatpush.bf16.msra.mxu0 0
    %458 = vmatpush.bf16.msra.mxu0 0
    %459 = vmatpush.bf16.msra.mxu0 0
    %460 = vmatpush.bf16.msra.mxu0 0
    %461 = vmatpush.bf16.msra.mxu0 %v339
    %462 = vmatpush.bf16.msra.mxu0 %v335
    %463 = vmatmul.bf16.gmra.mxu0 %v383
    %v464 = vpop.f32.mrf.mxu0
    %v465 = vadd.f32 %v451, %v464
    %v466 = vpop.f32.mrf.mxu0
    %v467 = vadd.f32 %v453, %v466
    %468 = vdwg.mxu0
    %469 = vmatpush.bf16.msra.mxu0 %v332
    %470 = vmatpush.bf16.msra.mxu0 %v328
    %471 = vmatpush.bf16.msra.mxu0 %v324
    %472 = vmatpush.bf16.msra.mxu0 %v320
    %473 = vmatpush.bf16.msra.mxu0 %v316
    %474 = vmatpush.bf16.msra.mxu0 %v312
    %475 = vmatpush.bf16.msra.mxu0 %v308
    %476 = vmatpush.bf16.msra.mxu0 %v304
    %477 = vmatmul.bf16.gmra.mxu0 %v99
    %v478 = vpop.f32.mrf.mxu0
    %v479 = vadd.f32 0.0, %v478
    %v480 = vpop.f32.mrf.mxu0
    %v481 = vadd.f32 0.0, %v480
    %482 = vdwg.mxu0
    %483 = vmatpush.bf16.msra.mxu0 0
    %484 = vmatpush.bf16.msra.mxu0 0
    %485 = vmatpush.bf16.msra.mxu0 0
    %486 = vmatpush.bf16.msra.mxu0 0
    %487 = vmatpush.bf16.msra.mxu0 0
    %488 = vmatpush.bf16.msra.mxu0 0
    %489 = vmatpush.bf16.msra.mxu0 %v340
    %490 = vmatpush.bf16.msra.mxu0 %v336
    %491 = vmatmul.bf16.gmra.mxu0 %v383
    %v492 = vpop.f32.mrf.mxu0
    %v493 = vadd.f32 %v479, %v492
    %v494 = vpop.f32.mrf.mxu0
    %v495 = vadd.f32 %v481, %v494
    %496 = vdwg.mxu0
    %v537 = vunpack.c.l.b16 %v101
    %v538 = vunpack.c.h.b16 %v101
    %v539 = vunpack.c.l.b16 %v102
    %v540 = vunpack.c.h.b16 %v102
    %v541 = vunpack.c.l.b16 %v103
    %v542 = vunpack.c.h.b16 %v103
    %v543 = vunpack.c.l.b16 %v104
    %v544 = vunpack.c.h.b16 %v104
    %v545 = vunpack.c.l.b16 %v105
    %v546 = vunpack.c.h.b16 %v105
    %v547 = vunpack.c.l.b16 %v106
    %v548 = vunpack.c.h.b16 %v106
    %v549 = vunpack.c.l.b16 %v107
    %v550 = vunpack.c.h.b16 %v107
    %v551 = vunpack.c.l.b16 %v108
    %v552 = vunpack.c.h.b16 %v108
    %v553 = vunpack.c.l.b16 %v109
    %v554 = vunpack.c.h.b16 %v109
    %v555 = vunpack.c.l.b16 %v110
    %v556 = vunpack.c.h.b16 %v110
    %v557 = vunpack.c.l.b16 %v111
    %v558 = vunpack.c.h.b16 %v111
    %v559 = vunpack.c.l.b16 %v112
    %v560 = vunpack.c.h.b16 %v112
    %v561 = vunpack.c.l.b16 %v113
    %v562 = vunpack.c.h.b16 %v113
    %v563 = vunpack.c.l.b16 %v114
    %v564 = vunpack.c.h.b16 %v114
    %v565 = vunpack.c.l.b16 %v115
    %v566 = vunpack.c.h.b16 %v115
    %v567 = vunpack.c.l.b16 %v116
    %v568 = vunpack.c.h.b16 %v116
    %v569 = vunpack.c.l.b16 %v117
    %v570 = vunpack.c.h.b16 %v117
    %v571 = vunpack.c.l.b16 %v118
    %v572 = vunpack.c.h.b16 %v118
    %v573 = vunpack.c.l.b16 %v119
    %v574 = vunpack.c.h.b16 %v119
    %v575 = vunpack.c.l.b16 %v120
    %v576 = vunpack.c.h.b16 %v120
    %v577 = vunpack.c.l.b16 %v121
    %v578 = vunpack.c.h.b16 %v121
    %v579 = vunpack.c.l.b16 %v122
    %v580 = vunpack.c.h.b16 %v122
    %v581 = vunpack.c.l.b16 %v123
    %v582 = vunpack.c.h.b16 %v123
    %v583 = vunpack.c.l.b16 %v124
    %v584 = vunpack.c.h.b16 %v124
    %v585 = vunpack.c.l.b16 %v125
    %v586 = vunpack.c.h.b16 %v125
    %v587 = vunpack.c.l.b16 %v126
    %v588 = vunpack.c.h.b16 %v126
    %v589 = vunpack.c.l.b16 %v127
    %v590 = vunpack.c.h.b16 %v127
    %v591 = vunpack.c.l.b16 %v128
    %v592 = vunpack.c.h.b16 %v128
    %v593 = vunpack.c.l.b16 %v129
    %v594 = vunpack.c.h.b16 %v129
    %v595 = vunpack.c.l.b16 %v130
    %v596 = vunpack.c.h.b16 %v130
    %v597 = vunpack.c.l.b16 %v131
    %v598 = vunpack.c.h.b16 %v131
    %v599 = vunpack.c.l.b16 %v132
    %v600 = vunpack.c.h.b16 %v132
    %v601 = vunpack.c.l.b16 %v133
    %v602 = vunpack.c.h.b16 %v133
    %v603 = vunpack.c.l.b16 %v134
    %v604 = vunpack.c.h.b16 %v134
    %v605 = vunpack.c.l.b16 %v135
    %v606 = vunpack.c.h.b16 %v135
    %v607 = vunpack.c.l.b16 %v136
    %v608 = vunpack.c.h.b16 %v136
    %v609 = vunpack.c.l.b16 %v137
    %v610 = vunpack.c.h.b16 %v137
    %v611 = vunpack.c.l.b16 %v138
    %v612 = vunpack.c.h.b16 %v138
    %v613 = vunpack.c.l.b16 %v139
    %v614 = vunpack.c.h.b16 %v139
    %v615 = vunpack.c.l.b16 %v140
    %v616 = vunpack.c.h.b16 %v140
    %v617 = vpack.c.b16 %v541, %v537
    %v618 = vpack.c.b16 %v542, %v538
    %v619 = vpack.c.b16 %v543, %v539
    %v620 = vpack.c.b16 %v544, %v540
    %v621 = vpack.c.b16 %v549, %v545
    %v622 = vpack.c.b16 %v550, %v546
    %v623 = vpack.c.b16 %v551, %v547
    %v624 = vpack.c.b16 %v552, %v548
    %v625 = vpack.c.b16 %v557, %v553
    %v626 = vpack.c.b16 %v558, %v554
    %v627 = vpack.c.b16 %v559, %v555
    %v628 = vpack.c.b16 %v560, %v556
    %v629 = vpack.c.b16 %v565, %v561
    %v630 = vpack.c.b16 %v566, %v562
    %v631 = vpack.c.b16 %v567, %v563
    %v632 = vpack.c.b16 %v568, %v564
    %v633 = vpack.c.b16 %v573, %v569
    %v634 = vpack.c.b16 %v574, %v570
    %v635 = vpack.c.b16 %v575, %v571
    %v636 = vpack.c.b16 %v576, %v572
    %v637 = vpack.c.b16 %v581, %v577
    %v638 = vpack.c.b16 %v582, %v578
    %v639 = vpack.c.b16 %v583, %v579
    %v640 = vpack.c.b16 %v584, %v580
    %v641 = vpack.c.b16 %v589, %v585
    %v642 = vpack.c.b16 %v590, %v586
    %v643 = vpack.c.b16 %v591, %v587
    %v644 = vpack.c.b16 %v592, %v588
    %v645 = vpack.c.b16 %v597, %v593
    %v646 = vpack.c.b16 %v598, %v594
    %v647 = vpack.c.b16 %v599, %v595
    %v648 = vpack.c.b16 %v600, %v596
    %v649 = vpack.c.b16 %v605, %v601
    %v650 = vpack.c.b16 %v606, %v602
    %v651 = vpack.c.b16 %v607, %v603
    %v652 = vpack.c.b16 %v608, %v604
    %v653 = vpack.c.b16 %v613, %v609
    %v654 = vpack.c.b16 %v614, %v610
    %v655 = vpack.c.b16 %v615, %v611
    %v656 = vpack.c.b16 %v616, %v612
    %v698 = vsel %vm381, %v94, 0
    %700 = vmatpush.bf16.msra.mxu0 %v645
    %701 = vmatpush.bf16.msra.mxu0 %v641
    %702 = vmatpush.bf16.msra.mxu0 %v637
    %703 = vmatpush.bf16.msra.mxu0 %v633
    %704 = vmatpush.bf16.msra.mxu0 %v629
    %705 = vmatpush.bf16.msra.mxu0 %v625
    %706 = vmatpush.bf16.msra.mxu0 %v621
    %707 = vmatpush.bf16.msra.mxu0 %v617
    %708 = vmatmul.bf16.gmra.mxu0 %v93
    %v709 = vpop.f32.mrf.mxu0
    %v710 = vadd.f32 %v409, %v709
    %v711 = vpop.f32.mrf.mxu0
    %v712 = vadd.f32 %v411, %v711
    %713 = vdwg.mxu0
    %714 = vmatpush.bf16.msra.mxu0 0
    %715 = vmatpush.bf16.msra.mxu0 0
    %716 = vmatpush.bf16.msra.mxu0 0
    %717 = vmatpush.bf16.msra.mxu0 0
    %718 = vmatpush.bf16.msra.mxu0 0
    %719 = vmatpush.bf16.msra.mxu0 0
    %720 = vmatpush.bf16.msra.mxu0 %v653
    %721 = vmatpush.bf16.msra.mxu0 %v649
    %722 = vmatmul.bf16.gmra.mxu0 %v698
    %v723 = vpop.f32.mrf.mxu0
    %v724 = vadd.f32 %v710, %v723
    %v725 = vpop.f32.mrf.mxu0
    %v726 = vadd.f32 %v712, %v725
    %727 = vdwg.mxu0
    %728 = vmatpush.bf16.msra.mxu0 %v646
    %729 = vmatpush.bf16.msra.mxu0 %v642
    %730 = vmatpush.bf16.msra.mxu0 %v638
    %731 = vmatpush.bf16.msra.mxu0 %v634
    %732 = vmatpush.bf16.msra.mxu0 %v630
    %733 = vmatpush.bf16.msra.mxu0 %v626
    %734 = vmatpush.bf16.msra.mxu0 %v622
    %735 = vmatpush.bf16.msra.mxu0 %v618
    %736 = vmatmul.bf16.gmra.mxu0 %v93
    %v737 = vpop.f32.mrf.mxu0
    %v738 = vadd.f32 %v437, %v737
    %v739 = vpop.f32.mrf.mxu0
    %v740 = vadd.f32 %v439, %v739
    %741 = vdwg.mxu0
    %742 = vmatpush.bf16.msra.mxu0 0
    %743 = vmatpush.bf16.msra.mxu0 0
    %744 = vmatpush.bf16.msra.mxu0 0
    %745 = vmatpush.bf16.msra.mxu0 0
    %746 = vmatpush.bf16.msra.mxu0 0
    %747 = vmatpush.bf16.msra.mxu0 0
    %748 = vmatpush.bf16.msra.mxu0 %v654
    %749 = vmatpush.bf16.msra.mxu0 %v650
    %750 = vmatmul.bf16.gmra.mxu0 %v698
    %v751 = vpop.f32.mrf.mxu0
    %v752 = vadd.f32 %v738, %v751
    %v753 = vpop.f32.mrf.mxu0
    %v754 = vadd.f32 %v740, %v753
    %755 = vdwg.mxu0
    %756 = vmatpush.bf16.msra.mxu0 %v647
    %757 = vmatpush.bf16.msra.mxu0 %v643
    %758 = vmatpush.bf16.msra.mxu0 %v639
    %759 = vmatpush.bf16.msra.mxu0 %v635
    %760 = vmatpush.bf16.msra.mxu0 %v631
    %761 = vmatpush.bf16.msra.mxu0 %v627
    %762 = vmatpush.bf16.msra.mxu0 %v623
    %763 = vmatpush.bf16.msra.mxu0 %v619
    %764 = vmatmul.bf16.gmra.mxu0 %v93
    %v765 = vpop.f32.mrf.mxu0
    %v766 = vadd.f32 %v465, %v765
    %v767 = vpop.f32.mrf.mxu0
    %v768 = vadd.f32 %v467, %v767
    %769 = vdwg.mxu0
    %770 = vmatpush.bf16.msra.mxu0 0
    %771 = vmatpush.bf16.msra.mxu0 0
    %772 = vmatpush.bf16.msra.mxu0 0
    %773 = vmatpush.bf16.msra.mxu0 0
    %774 = vmatpush.bf16.msra.mxu0 0
    %775 = vmatpush.bf16.msra.mxu0 0
    %776 = vmatpush.bf16.msra.mxu0 %v655
    %777 = vmatpush.bf16.msra.mxu0 %v651
    %778 = vmatmul.bf16.gmra.mxu0 %v698
    %v779 = vpop.f32.mrf.mxu0
    %v780 = vadd.f32 %v766, %v779
    %v781 = vpop.f32.mrf.mxu0
    %v782 = vadd.f32 %v768, %v781
    %783 = vdwg.mxu0
    %784 = vmatpush.bf16.msra.mxu0 %v648
    %785 = vmatpush.bf16.msra.mxu0 %v644
    %786 = vmatpush.bf16.msra.mxu0 %v640
    %787 = vmatpush.bf16.msra.mxu0 %v636
    %788 = vmatpush.bf16.msra.mxu0 %v632
    %789 = vmatpush.bf16.msra.mxu0 %v628
    %790 = vmatpush.bf16.msra.mxu0 %v624
    %791 = vmatpush.bf16.msra.mxu0 %v620
    %792 = vmatmul.bf16.gmra.mxu0 %v93
    %v793 = vpop.f32.mrf.mxu0
    %v794 = vadd.f32 %v493, %v793
    %v795 = vpop.f32.mrf.mxu0
    %v796 = vadd.f32 %v495, %v795
    %797 = vdwg.mxu0
    %798 = vmatpush.bf16.msra.mxu0 0
    %799 = vmatpush.bf16.msra.mxu0 0
    %800 = vmatpush.bf16.msra.mxu0 0
    %801 = vmatpush.bf16.msra.mxu0 0
    %802 = vmatpush.bf16.msra.mxu0 0
    %803 = vmatpush.bf16.msra.mxu0 0
    %804 = vmatpush.bf16.msra.mxu0 %v656
    %805 = vmatpush.bf16.msra.mxu0 %v652
    %806 = vmatmul.bf16.gmra.mxu0 %v698
    %v807 = vpop.f32.mrf.mxu0
    %v808 = vadd.f32 %v794, %v807
    %v809 = vpop.f32.mrf.mxu0
    %v810 = vadd.f32 %v796, %v809
    %811 = vdwg.mxu0
    %812 = vst [vmem:[%s6] sm:$0xff] %v724
    %813 = vst [vmem:[%s6 + $0x8] sm:$0xff] %v752
    %814 = vst [vmem:[%s6 + $0x10] sm:$0xff] %v780
    %vm815 = vcmask 785408
    %816 = vst.msk [vmem:[%s6 + $0x18] sm:$0xff] %vm815, %v808
    %817 = vst [vmem:[%s6 + $0x20] sm:$0xff] %v726
    %818 = vst [vmem:[%s6 + $0x28] sm:$0xff] %v754
    %819 = vst [vmem:[%s6 + $0x30] sm:$0xff] %v782
    %820 = vst.msk [vmem:[%s6 + $0x38] sm:$0xff] %vm815, %v810
    %v821 = vld [vmem:[#allocation6] sm:$0xff]
    %v822 = vld [vmem:[#allocation6 + $0x8] sm:$0xff]
    %v823 = vld [vmem:[#allocation6 + $0x10] sm:$0xff]
    %v824 = vld [vmem:[#allocation6 + $0x18] sm:$0xff]
    %v825 = vld [vmem:[#allocation6 + $0x20] sm:$0xff]
    %v826 = vld [vmem:[#allocation6 + $0x28] sm:$0xff]
    %v827 = vld [vmem:[#allocation6 + $0x30] sm:$0xff]
    %v828 = vld [vmem:[#allocation6 + $0x38] sm:$0xff]
    %v829 = vld [vmem:[#allocation6 + $0x40] sm:$0xff]
    %v830 = vld [vmem:[#allocation6 + $0x48] sm:$0xff]
    %v831 = vld [vmem:[#allocation6 + $0x50] sm:$0xff]
    %v832 = vld [vmem:[#allocation6 + $0x58] sm:$0xff]
    %v833 = vld [vmem:[#allocation6 + $0x60] sm:$0xff]
    %v834 = vld [vmem:[#allocation6 + $0x68] sm:$0xff]
    %v835 = vld [vmem:[#allocation6 + $0x70] sm:$0xff]
    %v836 = vld [vmem:[#allocation6 + $0x78] sm:$0xff]
    %v837 = vld [vmem:[#allocation6 + $0x80] sm:$0xff]
    %v838 = vld [vmem:[#allocation6 + $0x88] sm:$0xff]
    %v839 = vld [vmem:[#allocation6 + $0x90] sm:$0xff]
    %v840 = vld [vmem:[#allocation6 + $0x98] sm:$0xff]
    %v841 = vld [vmem:[#allocation6 + $0xa0] sm:$0xff]
    %v842 = vld [vmem:[#allocation6 + $0xa8] sm:$0xff]
    %v843 = vld [vmem:[#allocation6 + $0xb0] sm:$0xff]
    %v844 = vld [vmem:[#allocation6 + $0xb8] sm:$0xff]
    %v845 = vld [vmem:[#allocation6 + $0xc0] sm:$0xff]
    %v846 = vld [vmem:[#allocation6 + $0xc8] sm:$0xff]
    %v847 = vld [vmem:[#allocation6 + $0xd0] sm:$0xff]
    %v848 = vld [vmem:[#allocation6 + $0xd8] sm:$0xff]
    %v849 = vld [vmem:[#allocation6 + $0xe0] sm:$0xff]
    %v850 = vld [vmem:[#allocation6 + $0xe8] sm:$0xff]
    %v851 = vld [vmem:[#allocation6 + $0xf0] sm:$0xff]
    %v852 = vld [vmem:[#allocation6 + $0xf8] sm:$0xff]
    %v853 = vld [vmem:[#allocation6 + $0x100] sm:$0xff]
    %v854 = vld [vmem:[#allocation6 + $0x108] sm:$0xff]
    %v855 = vld [vmem:[#allocation6 + $0x110] sm:$0xff]
    %v856 = vld [vmem:[#allocation6 + $0x118] sm:$0xff]
    %v857 = vld [vmem:[#allocation6 + $0x120] sm:$0xff]
    %v858 = vld [vmem:[#allocation6 + $0x128] sm:$0xff]
    %v859 = vld [vmem:[#allocation6 + $0x130] sm:$0xff]
    %v860 = vld [vmem:[#allocation6 + $0x138] sm:$0xff]
    %v861 = vld [vmem:[#allocation7] sm:$0xff]
    %v862 = vld [vmem:[#allocation7 + $0x8] sm:$0xff]
    %v863 = vld [vmem:[#allocation7 + $0x10] sm:$0xff]
    %v864 = vld [vmem:[#allocation7 + $0x18] sm:$0xff]
    %v865 = vld [vmem:[#allocation7 + $0x20] sm:$0xff]
    %v866 = vld [vmem:[#allocation7 + $0x28] sm:$0xff]
    %v867 = vld [vmem:[#allocation7 + $0x30] sm:$0xff]
    %v868 = vld [vmem:[#allocation7 + $0x38] sm:$0xff]
    %v869 = vld [vmem:[#allocation7 + $0x40] sm:$0xff]
    %v870 = vld [vmem:[#allocation7 + $0x48] sm:$0xff]
    %v871 = vld [vmem:[#allocation7 + $0x50] sm:$0xff]
    %v872 = vld [vmem:[#allocation7 + $0x58] sm:$0xff]
    %v873 = vld [vmem:[#allocation7 + $0x60] sm:$0xff]
    %v874 = vld [vmem:[#allocation7 + $0x68] sm:$0xff]
    %v875 = vld [vmem:[#allocation7 + $0x70] sm:$0xff]
    %v876 = vld [vmem:[#allocation7 + $0x78] sm:$0xff]
    %v877 = vld [vmem:[#allocation7 + $0x80] sm:$0xff]
    %v878 = vld [vmem:[#allocation7 + $0x88] sm:$0xff]
    %v879 = vld [vmem:[#allocation7 + $0x90] sm:$0xff]
    %v880 = vld [vmem:[#allocation7 + $0x98] sm:$0xff]
    %v881 = vld [vmem:[#allocation7 + $0xa0] sm:$0xff]
    %v882 = vld [vmem:[#allocation7 + $0xa8] sm:$0xff]
    %v883 = vld [vmem:[#allocation7 + $0xb0] sm:$0xff]
    %v884 = vld [vmem:[#allocation7 + $0xb8] sm:$0xff]
    %v885 = vld [vmem:[#allocation7 + $0xc0] sm:$0xff]
    %v886 = vld [vmem:[#allocation7 + $0xc8] sm:$0xff]
    %v887 = vld [vmem:[#allocation7 + $0xd0] sm:$0xff]
    %v888 = vld [vmem:[#allocation7 + $0xd8] sm:$0xff]
    %v889 = vld [vmem:[#allocation7 + $0xe0] sm:$0xff]
    %v890 = vld [vmem:[#allocation7 + $0xe8] sm:$0xff]
    %v891 = vld [vmem:[#allocation7 + $0xf0] sm:$0xff]
    %v892 = vld [vmem:[#allocation7 + $0xf8] sm:$0xff]
    %v893 = vld [vmem:[#allocation7 + $0x100] sm:$0xff]
    %v894 = vld [vmem:[#allocation7 + $0x108] sm:$0xff]
    %v895 = vld [vmem:[#allocation7 + $0x110] sm:$0xff]
    %v896 = vld [vmem:[#allocation7 + $0x118] sm:$0xff]
    %v897 = vld [vmem:[#allocation7 + $0x120] sm:$0xff]
    %v898 = vld [vmem:[#allocation7 + $0x128] sm:$0xff]
    %v899 = vld [vmem:[#allocation7 + $0x130] sm:$0xff]
    %v900 = vld [vmem:[#allocation7 + $0x138] sm:$0xff]
    %v941 = vunpack.c.l.b16 %v861
    %v942 = vunpack.c.h.b16 %v861
    %v943 = vunpack.c.l.b16 %v862
    %v944 = vunpack.c.h.b16 %v862
    %v945 = vunpack.c.l.b16 %v863
    %v946 = vunpack.c.h.b16 %v863
    %v947 = vunpack.c.l.b16 %v864
    %v948 = vunpack.c.h.b16 %v864
    %v949 = vunpack.c.l.b16 %v865
    %v950 = vunpack.c.h.b16 %v865
    %v951 = vunpack.c.l.b16 %v866
    %v952 = vunpack.c.h.b16 %v866
    %v953 = vunpack.c.l.b16 %v867
    %v954 = vunpack.c.h.b16 %v867
    %v955 = vunpack.c.l.b16 %v868
    %v956 = vunpack.c.h.b16 %v868
    %v957 = vunpack.c.l.b16 %v869
    %v958 = vunpack.c.h.b16 %v869
    %v959 = vunpack.c.l.b16 %v870
    %v960 = vunpack.c.h.b16 %v870
    %v961 = vunpack.c.l.b16 %v871
    %v962 = vunpack.c.h.b16 %v871
    %v963 = vunpack.c.l.b16 %v872
    %v964 = vunpack.c.h.b16 %v872
    %v965 = vunpack.c.l.b16 %v873
    %v966 = vunpack.c.h.b16 %v873
    %v967 = vunpack.c.l.b16 %v874
    %v968 = vunpack.c.h.b16 %v874
    %v969 = vunpack.c.l.b16 %v875
    %v970 = vunpack.c.h.b16 %v875
    %v971 = vunpack.c.l.b16 %v876
    %v972 = vunpack.c.h.b16 %v876
    %v973 = vunpack.c.l.b16 %v877
    %v974 = vunpack.c.h.b16 %v877
    %v975 = vunpack.c.l.b16 %v878
    %v976 = vunpack.c.h.b16 %v878
    %v977 = vunpack.c.l.b16 %v879
    %v978 = vunpack.c.h.b16 %v879
    %v979 = vunpack.c.l.b16 %v880
    %v980 = vunpack.c.h.b16 %v880
    %v981 = vunpack.c.l.b16 %v881
    %v982 = vunpack.c.h.b16 %v881
    %v983 = vunpack.c.l.b16 %v882
    %v984 = vunpack.c.h.b16 %v882
    %v985 = vunpack.c.l.b16 %v883
    %v986 = vunpack.c.h.b16 %v883
    %v987 = vunpack.c.l.b16 %v884
    %v988 = vunpack.c.h.b16 %v884
    %v989 = vunpack.c.l.b16 %v885
    %v990 = vunpack.c.h.b16 %v885
    %v991 = vunpack.c.l.b16 %v886
    %v992 = vunpack.c.h.b16 %v886
    %v993 = vunpack.c.l.b16 %v887
    %v994 = vunpack.c.h.b16 %v887
    %v995 = vunpack.c.l.b16 %v888
    %v996 = vunpack.c.h.b16 %v888
    %v997 = vunpack.c.l.b16 %v889
    %v998 = vunpack.c.h.b16 %v889
    %v999 = vunpack.c.l.b16 %v890
    %v1000 = vunpack.c.h.b16 %v890
    %v1001 = vunpack.c.l.b16 %v891
    %v1002 = vunpack.c.h.b16 %v891
    %v1003 = vunpack.c.l.b16 %v892
    %v1004 = vunpack.c.h.b16 %v892
    %v1005 = vunpack.c.l.b16 %v893
    %v1006 = vunpack.c.h.b16 %v893
    %v1007 = vunpack.c.l.b16 %v894
    %v1008 = vunpack.c.h.b16 %v894
    %v1009 = vunpack.c.l.b16 %v895
    %v1010 = vunpack.c.h.b16 %v895
    %v1011 = vunpack.c.l.b16 %v896
    %v1012 = vunpack.c.h.b16 %v896
    %v1013 = vunpack.c.l.b16 %v897
    %v1014 = vunpack.c.h.b16 %v897
    %v1015 = vunpack.c.l.b16 %v898
    %v1016 = vunpack.c.h.b16 %v898
    %v1017 = vunpack.c.l.b16 %v899
    %v1018 = vunpack.c.h.b16 %v899
    %v1019 = vunpack.c.l.b16 %v900
    %v1020 = vunpack.c.h.b16 %v900
    %v1021 = vpack.c.b16 %v945, %v941
    %v1022 = vpack.c.b16 %v946, %v942
    %v1023 = vpack.c.b16 %v947, %v943
    %v1024 = vpack.c.b16 %v948, %v944
    %v1025 = vpack.c.b16 %v953, %v949
    %v1026 = vpack.c.b16 %v954, %v950
    %v1027 = vpack.c.b16 %v955, %v951
    %v1028 = vpack.c.b16 %v956, %v952
    %v1029 = vpack.c.b16 %v961, %v957
    %v1030 = vpack.c.b16 %v962, %v958
    %v1031 = vpack.c.b16 %v963, %v959
    %v1032 = vpack.c.b16 %v964, %v960
    %v1033 = vpack.c.b16 %v969, %v965
    %v1034 = vpack.c.b16 %v970, %v966
    %v1035 = vpack.c.b16 %v971, %v967
    %v1036 = vpack.c.b16 %v972, %v968
    %v1037 = vpack.c.b16 %v977, %v973
    %v1038 = vpack.c.b16 %v978, %v974
    %v1039 = vpack.c.b16 %v979, %v975
    %v1040 = vpack.c.b16 %v980, %v976
    %v1041 = vpack.c.b16 %v985, %v981
    %v1042 = vpack.c.b16 %v986, %v982
    %v1043 = vpack.c.b16 %v987, %v983
    %v1044 = vpack.c.b16 %v988, %v984
    %v1045 = vpack.c.b16 %v993, %v989
    %v1046 = vpack.c.b16 %v994, %v990
    %v1047 = vpack.c.b16 %v995, %v991
    %v1048 = vpack.c.b16 %v996, %v992
    %v1049 = vpack.c.b16 %v1001, %v997
    %v1050 = vpack.c.b16 %v1002, %v998
    %v1051 = vpack.c.b16 %v1003, %v999
    %v1052 = vpack.c.b16 %v1004, %v1000
    %v1053 = vpack.c.b16 %v1009, %v1005
    %v1054 = vpack.c.b16 %v1010, %v1006
    %v1055 = vpack.c.b16 %v1011, %v1007
    %v1056 = vpack.c.b16 %v1012, %v1008
    %v1057 = vpack.c.b16 %v1017, %v1013
    %v1058 = vpack.c.b16 %v1018, %v1014
    %v1059 = vpack.c.b16 %v1019, %v1015
    %v1060 = vpack.c.b16 %v1020, %v1016
    %1101 = vmatpush.bf16.msra.mxu0 %v1049
    %1102 = vmatpush.bf16.msra.mxu0 %v1045
    %1103 = vmatpush.bf16.msra.mxu0 %v1041
    %1104 = vmatpush.bf16.msra.mxu0 %v1037
    %1105 = vmatpush.bf16.msra.mxu0 %v1033
    %1106 = vmatpush.bf16.msra.mxu0 %v1029
    %1107 = vmatpush.bf16.msra.mxu0 %v1025
    %1108 = vmatpush.bf16.msra.mxu0 %v1021
    %1109 = vmatmul.bf16.gmra.mxu0 %v99
    %v1110 = vpop.f32.mrf.mxu0
    %v1111 = vadd.f32 0.0, %v1110
    %v1112 = vpop.f32.mrf.mxu0
    %v1113 = vadd.f32 0.0, %v1112
    %1114 = vdwg.mxu0
    %1115 = vmatpush.bf16.msra.mxu0 0
    %1116 = vmatpush.bf16.msra.mxu0 0
    %1117 = vmatpush.bf16.msra.mxu0 0
    %1118 = vmatpush.bf16.msra.mxu0 0
    %1119 = vmatpush.bf16.msra.mxu0 0
    %1120 = vmatpush.bf16.msra.mxu0 0
    %1121 = vmatpush.bf16.msra.mxu0 %v1057
    %1122 = vmatpush.bf16.msra.mxu0 %v1053
    %1123 = vmatmul.bf16.gmra.mxu0 %v383
    %v1124 = vpop.f32.mrf.mxu0
    %v1125 = vadd.f32 %v1111, %v1124
    %v1126 = vpop.f32.mrf.mxu0
    %v1127 = vadd.f32 %v1113, %v1126
    %1128 = vdwg.mxu0
    %1129 = vmatpush.bf16.msra.mxu0 %v1050
    %1130 = vmatpush.bf16.msra.mxu0 %v1046
    %1131 = vmatpush.bf16.msra.mxu0 %v1042
    %1132 = vmatpush.bf16.msra.mxu0 %v1038
    %1133 = vmatpush.bf16.msra.mxu0 %v1034
    %1134 = vmatpush.bf16.msra.mxu0 %v1030
    %1135 = vmatpush.bf16.msra.mxu0 %v1026
    %1136 = vmatpush.bf16.msra.mxu0 %v1022
    %1137 = vmatmul.bf16.gmra.mxu0 %v99
    %v1138 = vpop.f32.mrf.mxu0
    %v1139 = vadd.f32 0.0, %v1138
    %v1140 = vpop.f32.mrf.mxu0
    %v1141 = vadd.f32 0.0, %v1140
    %1142 = vdwg.mxu0
    %1143 = vmatpush.bf16.msra.mxu0 0
    %1144 = vmatpush.bf16.msra.mxu0 0
    %1145 = vmatpush.bf16.msra.mxu0 0
    %1146 = vmatpush.bf16.msra.mxu0 0
    %1147 = vmatpush.bf16.msra.mxu0 0
    %1148 = vmatpush.bf16.msra.mxu0 0
    %1149 = vmatpush.bf16.msra.mxu0 %v1058
    %1150 = vmatpush.bf16.msra.mxu0 %v1054
    %1151 = vmatmul.bf16.gmra.mxu0 %v383
    %v1152 = vpop.f32.mrf.mxu0
    %v1153 = vadd.f32 %v1139, %v1152
    %v1154 = vpop.f32.mrf.mxu0
    %v1155 = vadd.f32 %v1141, %v1154
    %1156 = vdwg.mxu0
    %1157 = vmatpush.bf16.msra.mxu0 %v1051
    %1158 = vmatpush.bf16.msra.mxu0 %v1047
    %1159 = vmatpush.bf16.msra.mxu0 %v1043
    %1160 = vmatpush.bf16.msra.mxu0 %v1039
    %1161 = vmatpush.bf16.msra.mxu0 %v1035
    %1162 = vmatpush.bf16.msra.mxu0 %v1031
    %1163 = vmatpush.bf16.msra.mxu0 %v1027
    %1164 = vmatpush.bf16.msra.mxu0 %v1023
    %1165 = vmatmul.bf16.gmra.mxu0 %v99
    %v1166 = vpop.f32.mrf.mxu0
    %v1167 = vadd.f32 0.0, %v1166
    %v1168 = vpop.f32.mrf.mxu0
    %v1169 = vadd.f32 0.0, %v1168
    %1170 = vdwg.mxu0
    %1171 = vmatpush.bf16.msra.mxu0 0
    %1172 = vmatpush.bf16.msra.mxu0 0
    %1173 = vmatpush.bf16.msra.mxu0 0
    %1174 = vmatpush.bf16.msra.mxu0 0
    %1175 = vmatpush.bf16.msra.mxu0 0
    %1176 = vmatpush.bf16.msra.mxu0 0
    %1177 = vmatpush.bf16.msra.mxu0 %v1059
    %1178 = vmatpush.bf16.msra.mxu0 %v1055
    %1179 = vmatmul.bf16.gmra.mxu0 %v383
    %v1180 = vpop.f32.mrf.mxu0
    %v1181 = vadd.f32 %v1167, %v1180
    %v1182 = vpop.f32.mrf.mxu0
    %v1183 = vadd.f32 %v1169, %v1182
    %1184 = vdwg.mxu0
    %1185 = vmatpush.bf16.msra.mxu0 %v1052
    %1186 = vmatpush.bf16.msra.mxu0 %v1048
    %1187 = vmatpush.bf16.msra.mxu0 %v1044
    %1188 = vmatpush.bf16.msra.mxu0 %v1040
    %1189 = vmatpush.bf16.msra.mxu0 %v1036
    %1190 = vmatpush.bf16.msra.mxu0 %v1032
    %1191 = vmatpush.bf16.msra.mxu0 %v1028
    %1192 = vmatpush.bf16.msra.mxu0 %v1024
    %1193 = vmatmul.bf16.gmra.mxu0 %v99
    %v1194 = vpop.f32.mrf.mxu0
    %v1195 = vadd.f32 0.0, %v1194
    %v1196 = vpop.f32.mrf.mxu0
    %v1197 = vadd.f32 0.0, %v1196
    %1198 = vdwg.mxu0
    %1199 = vmatpush.bf16.msra.mxu0 0
    %1200 = vmatpush.bf16.msra.mxu0 0
    %1201 = vmatpush.bf16.msra.mxu0 0
    %1202 = vmatpush.bf16.msra.mxu0 0
    %1203 = vmatpush.bf16.msra.mxu0 0
    %1204 = vmatpush.bf16.msra.mxu0 0
    %1205 = vmatpush.bf16.msra.mxu0 %v1060
    %1206 = vmatpush.bf16.msra.mxu0 %v1056
    %1207 = vmatmul.bf16.gmra.mxu0 %v383
    %v1208 = vpop.f32.mrf.mxu0
    %v1209 = vadd.f32 %v1195, %v1208
    %v1210 = vpop.f32.mrf.mxu0
    %v1211 = vadd.f32 %v1197, %v1210
    %1212 = vdwg.mxu0
    %v1253 = vunpack.c.l.b16 %v821
    %v1254 = vunpack.c.h.b16 %v821
    %v1255 = vunpack.c.l.b16 %v822
    %v1256 = vunpack.c.h.b16 %v822
    %v1257 = vunpack.c.l.b16 %v823
    %v1258 = vunpack.c.h.b16 %v823
    %v1259 = vunpack.c.l.b16 %v824
    %v1260 = vunpack.c.h.b16 %v824
    %v1261 = vunpack.c.l.b16 %v825
    %v1262 = vunpack.c.h.b16 %v825
    %v1263 = vunpack.c.l.b16 %v826
    %v1264 = vunpack.c.h.b16 %v826
    %v1265 = vunpack.c.l.b16 %v827
    %v1266 = vunpack.c.h.b16 %v827
    %v1267 = vunpack.c.l.b16 %v828
    %v1268 = vunpack.c.h.b16 %v828
    %v1269 = vunpack.c.l.b16 %v829
    %v1270 = vunpack.c.h.b16 %v829
    %v1271 = vunpack.c.l.b16 %v830
    %v1272 = vunpack.c.h.b16 %v830
    %v1273 = vunpack.c.l.b16 %v831
    %v1274 = vunpack.c.h.b16 %v831
    %v1275 = vunpack.c.l.b16 %v832
    %v1276 = vunpack.c.h.b16 %v832
    %v1277 = vunpack.c.l.b16 %v833
    %v1278 = vunpack.c.h.b16 %v833
    %v1279 = vunpack.c.l.b16 %v834
    %v1280 = vunpack.c.h.b16 %v834
    %v1281 = vunpack.c.l.b16 %v835
    %v1282 = vunpack.c.h.b16 %v835
    %v1283 = vunpack.c.l.b16 %v836
    %v1284 = vunpack.c.h.b16 %v836
    %v1285 = vunpack.c.l.b16 %v837
    %v1286 = vunpack.c.h.b16 %v837
    %v1287 = vunpack.c.l.b16 %v838
    %v1288 = vunpack.c.h.b16 %v838
    %v1289 = vunpack.c.l.b16 %v839
    %v1290 = vunpack.c.h.b16 %v839
    %v1291 = vunpack.c.l.b16 %v840
    %v1292 = vunpack.c.h.b16 %v840
    %v1293 = vunpack.c.l.b16 %v841
    %v1294 = vunpack.c.h.b16 %v841
    %v1295 = vunpack.c.l.b16 %v842
    %v1296 = vunpack.c.h.b16 %v842
    %v1297 = vunpack.c.l.b16 %v843
    %v1298 = vunpack.c.h.b16 %v843
    %v1299 = vunpack.c.l.b16 %v844
    %v1300 = vunpack.c.h.b16 %v844
    %v1301 = vunpack.c.l.b16 %v845
    %v1302 = vunpack.c.h.b16 %v845
    %v1303 = vunpack.c.l.b16 %v846
    %v1304 = vunpack.c.h.b16 %v846
    %v1305 = vunpack.c.l.b16 %v847
    %v1306 = vunpack.c.h.b16 %v847
    %v1307 = vunpack.c.l.b16 %v848
    %v1308 = vunpack.c.h.b16 %v848
    %v1309 = vunpack.c.l.b16 %v849
    %v1310 = vunpack.c.h.b16 %v849
    %v1311 = vunpack.c.l.b16 %v850
    %v1312 = vunpack.c.h.b16 %v850
    %v1313 = vunpack.c.l.b16 %v851
    %v1314 = vunpack.c.h.b16 %v851
    %v1315 = vunpack.c.l.b16 %v852
    %v1316 = vunpack.c.h.b16 %v852
    %v1317 = vunpack.c.l.b16 %v853
    %v1318 = vunpack.c.h.b16 %v853
    %v1319 = vunpack.c.l.b16 %v854
    %v1320 = vunpack.c.h.b16 %v854
    %v1321 = vunpack.c.l.b16 %v855
    %v1322 = vunpack.c.h.b16 %v855
    %v1323 = vunpack.c.l.b16 %v856
    %v1324 = vunpack.c.h.b16 %v856
    %v1325 = vunpack.c.l.b16 %v857
    %v1326 = vunpack.c.h.b16 %v857
    %v1327 = vunpack.c.l.b16 %v858
    %v1328 = vunpack.c.h.b16 %v858
    %v1329 = vunpack.c.l.b16 %v859
    %v1330 = vunpack.c.h.b16 %v859
    %v1331 = vunpack.c.l.b16 %v860
    %v1332 = vunpack.c.h.b16 %v860
    %v1333 = vpack.c.b16 %v1257, %v1253
    %v1334 = vpack.c.b16 %v1258, %v1254
    %v1335 = vpack.c.b16 %v1259, %v1255
    %v1336 = vpack.c.b16 %v1260, %v1256
    %v1337 = vpack.c.b16 %v1265, %v1261
    %v1338 = vpack.c.b16 %v1266, %v1262
    %v1339 = vpack.c.b16 %v1267, %v1263
    %v1340 = vpack.c.b16 %v1268, %v1264
    %v1341 = vpack.c.b16 %v1273, %v1269
    %v1342 = vpack.c.b16 %v1274, %v1270
    %v1343 = vpack.c.b16 %v1275, %v1271
    %v1344 = vpack.c.b16 %v1276, %v1272
    %v1345 = vpack.c.b16 %v1281, %v1277
    %v1346 = vpack.c.b16 %v1282, %v1278
    %v1347 = vpack.c.b16 %v1283, %v1279
    %v1348 = vpack.c.b16 %v1284, %v1280
    %v1349 = vpack.c.b16 %v1289, %v1285
    %v1350 = vpack.c.b16 %v1290, %v1286
    %v1351 = vpack.c.b16 %v1291, %v1287
    %v1352 = vpack.c.b16 %v1292, %v1288
    %v1353 = vpack.c.b16 %v1297, %v1293
    %v1354 = vpack.c.b16 %v1298, %v1294
    %v1355 = vpack.c.b16 %v1299, %v1295
    %v1356 = vpack.c.b16 %v1300, %v1296
    %v1357 = vpack.c.b16 %v1305, %v1301
    %v1358 = vpack.c.b16 %v1306, %v1302
    %v1359 = vpack.c.b16 %v1307, %v1303
    %v1360 = vpack.c.b16 %v1308, %v1304
    %v1361 = vpack.c.b16 %v1313, %v1309
    %v1362 = vpack.c.b16 %v1314, %v1310
    %v1363 = vpack.c.b16 %v1315, %v1311
    %v1364 = vpack.c.b16 %v1316, %v1312
    %v1365 = vpack.c.b16 %v1321, %v1317
    %v1366 = vpack.c.b16 %v1322, %v1318
    %v1367 = vpack.c.b16 %v1323, %v1319
    %v1368 = vpack.c.b16 %v1324, %v1320
    %v1369 = vpack.c.b16 %v1329, %v1325
    %v1370 = vpack.c.b16 %v1330, %v1326
    %v1371 = vpack.c.b16 %v1331, %v1327
    %v1372 = vpack.c.b16 %v1332, %v1328
    %1413 = vmatpush.bf16.msra.mxu0 %v1361
    %1414 = vmatpush.bf16.msra.mxu0 %v1357
    %1415 = vmatpush.bf16.msra.mxu0 %v1353
    %1416 = vmatpush.bf16.msra.mxu0 %v1349
    %1417 = vmatpush.bf16.msra.mxu0 %v1345
    %1418 = vmatpush.bf16.msra.mxu0 %v1341
    %1419 = vmatpush.bf16.msra.mxu0 %v1337
    %1420 = vmatpush.bf16.msra.mxu0 %v1333
    %1421 = vmatmul.bf16.gmra.mxu0 %v93
    %v1422 = vpop.f32.mrf.mxu0
    %v1423 = vadd.f32 %v1125, %v1422
    %v1424 = vpop.f32.mrf.mxu0
    %v1425 = vadd.f32 %v1127, %v1424
    %1426 = vdwg.mxu0
    %1427 = vmatpush.bf16.msra.mxu0 0
    %1428 = vmatpush.bf16.msra.mxu0 0
    %1429 = vmatpush.bf16.msra.mxu0 0
    %1430 = vmatpush.bf16.msra.mxu0 0
    %1431 = vmatpush.bf16.msra.mxu0 0
    %1432 = vmatpush.bf16.msra.mxu0 0
    %1433 = vmatpush.bf16.msra.mxu0 %v1369
    %1434 = vmatpush.bf16.msra.mxu0 %v1365
    %1435 = vmatmul.bf16.gmra.mxu0 %v698
    %v1436 = vpop.f32.mrf.mxu0
    %v1437 = vadd.f32 %v1423, %v1436
    %v1438 = vpop.f32.mrf.mxu0
    %v1439 = vadd.f32 %v1425, %v1438
    %1440 = vdwg.mxu0
    %1441 = vmatpush.bf16.msra.mxu0 %v1362
    %1442 = vmatpush.bf16.msra.mxu0 %v1358
    %1443 = vmatpush.bf16.msra.mxu0 %v1354
    %1444 = vmatpush.bf16.msra.mxu0 %v1350
    %1445 = vmatpush.bf16.msra.mxu0 %v1346
    %1446 = vmatpush.bf16.msra.mxu0 %v1342
    %1447 = vmatpush.bf16.msra.mxu0 %v1338
    %1448 = vmatpush.bf16.msra.mxu0 %v1334
    %1449 = vmatmul.bf16.gmra.mxu0 %v93
    %v1450 = vpop.f32.mrf.mxu0
    %v1451 = vadd.f32 %v1153, %v1450
    %v1452 = vpop.f32.mrf.mxu0
    %v1453 = vadd.f32 %v1155, %v1452
    %1454 = vdwg.mxu0
    %1455 = vmatpush.bf16.msra.mxu0 0
    %1456 = vmatpush.bf16.msra.mxu0 0
    %1457 = vmatpush.bf16.msra.mxu0 0
    %1458 = vmatpush.bf16.msra.mxu0 0
    %1459 = vmatpush.bf16.msra.mxu0 0
    %1460 = vmatpush.bf16.msra.mxu0 0
    %1461 = vmatpush.bf16.msra.mxu0 %v1370
    %1462 = vmatpush.bf16.msra.mxu0 %v1366
    %1463 = vmatmul.bf16.gmra.mxu0 %v698
    %v1464 = vpop.f32.mrf.mxu0
    %v1465 = vadd.f32 %v1451, %v1464
    %v1466 = vpop.f32.mrf.mxu0
    %v1467 = vadd.f32 %v1453, %v1466
    %1468 = vdwg.mxu0
    %1469 = vmatpush.bf16.msra.mxu0 %v1363
    %1470 = vmatpush.bf16.msra.mxu0 %v1359
    %1471 = vmatpush.bf16.msra.mxu0 %v1355
    %1472 = vmatpush.bf16.msra.mxu0 %v1351
    %1473 = vmatpush.bf16.msra.mxu0 %v1347
    %1474 = vmatpush.bf16.msra.mxu0 %v1343
    %1475 = vmatpush.bf16.msra.mxu0 %v1339
    %1476 = vmatpush.bf16.msra.mxu0 %v1335
    %1477 = vmatmul.bf16.gmra.mxu0 %v93
    %v1478 = vpop.f32.mrf.mxu0
    %v1479 = vadd.f32 %v1181, %v1478
    %v1480 = vpop.f32.mrf.mxu0
    %v1481 = vadd.f32 %v1183, %v1480
    %1482 = vdwg.mxu0
    %1483 = vmatpush.bf16.msra.mxu0 0
    %1484 = vmatpush.bf16.msra.mxu0 0
    %1485 = vmatpush.bf16.msra.mxu0 0
    %1486 = vmatpush.bf16.msra.mxu0 0
    %1487 = vmatpush.bf16.msra.mxu0 0
    %1488 = vmatpush.bf16.msra.mxu0 0
    %1489 = vmatpush.bf16.msra.mxu0 %v1371
    %1490 = vmatpush.bf16.msra.mxu0 %v1367
    %1491 = vmatmul.bf16.gmra.mxu0 %v698
    %v1492 = vpop.f32.mrf.mxu0
    %v1493 = vadd.f32 %v1479, %v1492
    %v1494 = vpop.f32.mrf.mxu0
    %v1495 = vadd.f32 %v1481, %v1494
    %1496 = vdwg.mxu0
    %1497 = vmatpush.bf16.msra.mxu0 %v1364
    %1498 = vmatpush.bf16.msra.mxu0 %v1360
    %1499 = vmatpush.bf16.msra.mxu0 %v1356
    %1500 = vmatpush.bf16.msra.mxu0 %v1352
    %1501 = vmatpush.bf16.msra.mxu0 %v1348
    %1502 = vmatpush.bf16.msra.mxu0 %v1344
    %1503 = vmatpush.bf16.msra.mxu0 %v1340
    %1504 = vmatpush.bf16.msra.mxu0 %v1336
    %1505 = vmatmul.bf16.gmra.mxu0 %v93
    %v1506 = vpop.f32.mrf.mxu0
    %v1507 = vadd.f32 %v1209, %v1506
    %v1508 = vpop.f32.mrf.mxu0
    %v1509 = vadd.f32 %v1211, %v1508
    %1510 = vdwg.mxu0
    %1511 = vmatpush.bf16.msra.mxu0 0
    %1512 = vmatpush.bf16.msra.mxu0 0
    %1513 = vmatpush.bf16.msra.mxu0 0
    %1514 = vmatpush.bf16.msra.mxu0 0
    %1515 = vmatpush.bf16.msra.mxu0 0
    %1516 = vmatpush.bf16.msra.mxu0 0
    %1517 = vmatpush.bf16.msra.mxu0 %v1372
    %1518 = vmatpush.bf16.msra.mxu0 %v1368
    %1519 = vmatmul.bf16.gmra.mxu0 %v698
    %v1520 = vpop.f32.mrf.mxu0
    %v1521 = vadd.f32 %v1507, %v1520
    %v1522 = vpop.f32.mrf.mxu0
    %v1523 = vadd.f32 %v1509, %v1522
    %1524 = vdwg.mxu0
    %1525 = vst [vmem:[%s7] sm:$0xff] %v1437
    %1526 = vst [vmem:[%s7 + $0x8] sm:$0xff] %v1465
    %1527 = vst [vmem:[%s7 + $0x10] sm:$0xff] %v1493
    %1528 = vst.msk [vmem:[%s7 + $0x18] sm:$0xff] %vm815, %v1521
    %1529 = vst [vmem:[%s7 + $0x20] sm:$0xff] %v1439
    %1530 = vst [vmem:[%s7 + $0x28] sm:$0xff] %v1467
    %1531 = vst [vmem:[%s7 + $0x30] sm:$0xff] %v1495
    %1532 = vst.msk [vmem:[%s7 + $0x38] sm:$0xff] %vm815, %v1523
    // Predicated region
    $region42: #{voicefixer_forward.11} parent=1 // pred_check
      _
    $region43: #{voicefixer_forward.11} parent=1 // pred_check_branch
      %1534 = sbr.rel (0) target = $region45
    $region44: #{voicefixer_forward.11} parent=1 // pred_region
      _
    $region45: #{voicefixer_forward.11} parent=1 // pred_fallthru
      _
    // Predicated region
    $region46: #{voicefixer_forward.11} parent=1 // pred_check
      _
    $region47: #{voicefixer_forward.11} parent=1 // pred_check_branch
      %1536 = sbr.rel (0) target = $region49
    $region48: #{voicefixer_forward.11} parent=1 // pred_region
      _
    $region49: #{voicefixer_forward.11} parent=1 // pred_fallthru
      _
    // Predicated region
    $region50: #{voicefixer_forward.11} parent=1 // pred_check
      _
    $region51: #{voicefixer_forward.11} parent=1 // pred_check_branch
      %1538 = sbr.rel (0) target = $region53
    $region52: #{voicefixer_forward.11} parent=1 // pred_region
      _
    $region53: #{voicefixer_forward.11} parent=1 // pred_fallthru
      _
    // Predicated region
    $region54: #{voicefixer_forward.11} parent=1 // pred_check
      _
    $region55: #{voicefixer_forward.11} parent=1 // pred_check_branch
      %1540 = sbr.rel (0) target = $region57
    $region56: #{voicefixer_forward.11} parent=1 // pred_region
      _
    $region57: #{voicefixer_forward.11} parent=1 // pred_fallthru
      _
    %1541 = vsyncpa [#allocation3], 1
    %1542 = vsyncpa [#allocation5], 1
    %1543 = vsyncpa [#allocation8], 1

// kernel: voicefixer_forward.12
$region0: #{voicefixer_forward.12}
  #allocation0 [shape = 'u32[]', space=smem, size = 0x4, offset = 0x4, fixed_abs, tag = 'smem constant byte address 0x4 - core index']
  #allocation1 [shape = 'u32[72,128]{1,0:T(1,128)}', space=vmem, size = 0x9000, scoped, tag = 'internal scratch']
  %s0 = inlined_call_operand.vmem [shape: f32[8,2,480], index: 0, kind: input, shape index: {}]
  %s1 = inlined_call_operand.vmem [shape: f32[8,2,480], index: 1, kind: input, shape index: {}]
  %s2 = inlined_call_operand.vmem [shape: f32[160,480], index: 2, kind: input, shape index: {}]
  %s3 = inlined_call_operand.hbm [shape: f32[160,480], index: 3, kind: input, shape index: {}]
  %s4 = inlined_call_operand.vmem [shape: f32[8,2,160], index: 4, kind: output, shape index: {0}]
  %s5 = inlined_call_operand.vmem [shape: f32[8,2,160], index: 5, kind: output, shape index: {1}]
  %6 = xla_tuple %s4, %s5
  %s7 = sld [smem:[#allocation0]]
  $region45: #{voicefixer_forward.12} parent=0
    _
  %s9 = ssub.s32 1, %s7
  %s10 = scalar_select 0, %s9, %s7
  $region1: #{voicefixer_forward.12} parent=0
    #allocation2 [shape = 'u8[327680]{0}', space=vmem, size = 0x50000, scoped, tag = 'input window, operand 3, single buffered']
    #allocation3 [shape = 's32[1]{0}', space=sflag, size = 0x4, scoped, tag = 'scoped memory for voicefixer_forward.12']
    %11 = vsyncpa [#allocation3], 0
    // Predicated region
    $region2: #{voicefixer_forward.12} parent=1 // pred_check
      _
    $region3: #{voicefixer_forward.12} parent=1 // pred_check_branch
      %13 = sbr.rel (0) target = $region5
    $region4: #{voicefixer_forward.12} parent=1 // pred_region
      _
    $region5: #{voicefixer_forward.12} parent=1 // pred_fallthru
      _
    // Predicated region
    $region6: #{voicefixer_forward.12} parent=1 // pred_check
      _
    $region7: #{voicefixer_forward.12} parent=1 // pred_check_branch
      %15 = sbr.rel (0) target = $region9
    $region8: #{voicefixer_forward.12} parent=1 // pred_region
      _
    $region9: #{voicefixer_forward.12} parent=1 // pred_fallthru
      _
    // Predicated region
    $region10: #{voicefixer_forward.12} parent=1 // pred_check
      _
    $region11: #{voicefixer_forward.12} parent=1 // pred_check_branch
      %17 = sbr.rel (0) target = $region13
    $region12: #{voicefixer_forward.12} parent=1 // pred_region
      _
    $region13: #{voicefixer_forward.12} parent=1 // pred_fallthru
      _
    // Predicated region
    $region14: #{voicefixer_forward.12} parent=1 // pred_check
      _
    $region15: #{voicefixer_forward.12} parent=1 // pred_check_branch
      %19 = sbr.rel (0) target = $region17
    $region16: #{voicefixer_forward.12} parent=1 // pred_region
      %21 = vsyncadd [#allocation3], 0
      %s22 = sshll.u32 %s3, 4
      %s23 = int_to_ptr.hbm [resolvable:$true] %s22
      %s24 = sshll.u32 [#allocation2], 4
      %s25 = int_to_ptr.vmem [resolvable:$true] %s24
      %30 = dma.hbm_to_vmem [thread:$0]  %s23, 10240, %s25, [#allocation3], 512, 512, 32
    $region17: #{voicefixer_forward.12} parent=1 // pred_fallthru
      _
    // Predicated region
    $region18: #{voicefixer_forward.12} parent=1 // pred_check
      _
    $region19: #{voicefixer_forward.12} parent=1 // pred_check_branch
      %32 = sbr.rel (0) target = $region21
    $region20: #{voicefixer_forward.12} parent=1 // pred_region
      %34 = dma.done [#allocation3], 10240
    $region21: #{voicefixer_forward.12} parent=1 // pred_fallthru
      _
    loop: start=0, step=1, limit=8
    $region22: #{voicefixer_forward.12} parent=1 // loop_pre_header
      _
    $region23: #{voicefixer_forward.12} parent=1 // loop_header
      %s36 = sphi 0, %s40
      %p37 = scmp.ge.s32.totalorder %s36, 8
      %v41 = vphi 0.0, %v630
      %v42 = vphi 0.0, %v711
    $region24: #{voicefixer_forward.12} parent=1 // loop_header_branch
      %39 = sbr.rel (%p37) target = $region28
    $region25: #{voicefixer_forward.12} parent=1 // loop_body
      %s43 = ssub.s32 7, %s36
      %s44 = smul.u32 %s36, 4
      %s45 = smul.addr %s44, 2
      %s46 = scalar_lea.vmem %s0, %s45
      %v47 = vld [vmem:[%s46] sm:$0xff]
      %s48 = smul.u32 %s43, 4
      %s49 = smul.addr %s48, 2
      %s50 = scalar_lea.vmem %s1, %s49
      %v51 = vld [vmem:[%s50] sm:$0xff]
      %v52 = vld [vmem:[%s2] sm:$0xff]
      %v53 = vld [vmem:[%s2 + $0x8] sm:$0xff]
      %v54 = vld [vmem:[%s2 + $0x10] sm:$0xff]
      %v55 = vld [vmem:[%s2 + $0x18] sm:$0xff]
      %v56 = vld [vmem:[%s2 + $0x20] sm:$0xff]
      %v57 = vld [vmem:[%s2 + $0x28] sm:$0xff]
      %v58 = vld [vmem:[%s2 + $0x30] sm:$0xff]
      %v59 = vld [vmem:[%s2 + $0x38] sm:$0xff]
      %v60 = vld [vmem:[%s2 + $0x40] sm:$0xff]
      %v61 = vld [vmem:[%s2 + $0x48] sm:$0xff]
      %v62 = vld [vmem:[%s2 + $0x50] sm:$0xff]
      %v63 = vld [vmem:[%s2 + $0x58] sm:$0xff]
      %v64 = vld [vmem:[%s2 + $0x60] sm:$0xff]
      %v65 = vld [vmem:[%s2 + $0x68] sm:$0xff]
      %v66 = vld [vmem:[%s2 + $0x70] sm:$0xff]
      %v67 = vld [vmem:[%s2 + $0x78] sm:$0xff]
      %v68 = vld [vmem:[%s2 + $0x80] sm:$0xff]
      %v69 = vld [vmem:[%s2 + $0x88] sm:$0xff]
      %v70 = vld [vmem:[%s2 + $0x90] sm:$0xff]
      %v71 = vld [vmem:[%s2 + $0x98] sm:$0xff]
      %v72 = vld [vmem:[%s2 + $0xa0] sm:$0xff]
      %v73 = vld [vmem:[%s2 + $0xa8] sm:$0xff]
      %v74 = vld [vmem:[%s2 + $0xb0] sm:$0xff]
      %v75 = vld [vmem:[%s2 + $0xb8] sm:$0xff]
      %v76 = vld [vmem:[%s2 + $0xc0] sm:$0xff]
      %v77 = vld [vmem:[%s2 + $0xc8] sm:$0xff]
      %v78 = vld [vmem:[%s2 + $0xd0] sm:$0xff]
      %v79 = vld [vmem:[%s2 + $0xd8] sm:$0xff]
      %v80 = vld [vmem:[%s2 + $0xe0] sm:$0xff]
      %v81 = vld [vmem:[%s2 + $0xe8] sm:$0xff]
      %v82 = vld [vmem:[%s2 + $0xf0] sm:$0xff]
      %v83 = vld [vmem:[%s2 + $0xf8] sm:$0xff]
      %v84 = vld [vmem:[%s2 + $0x100] sm:$0xff]
      %v85 = vld [vmem:[%s2 + $0x108] sm:$0xff]
      %v86 = vld [vmem:[%s2 + $0x110] sm:$0xff]
      %v87 = vld [vmem:[%s2 + $0x118] sm:$0xff]
      %v88 = vld [vmem:[%s2 + $0x120] sm:$0xff]
      %v89 = vld [vmem:[%s2 + $0x128] sm:$0xff]
      %v90 = vld [vmem:[%s2 + $0x130] sm:$0xff]
      %v91 = vld [vmem:[%s2 + $0x138] sm:$0xff]
      %v92 = vld [vmem:[%s2 + $0x140] sm:$0xff]
      %v93 = vld [vmem:[%s2 + $0x148] sm:$0xff]
      %v94 = vld [vmem:[%s2 + $0x150] sm:$0xff]
      %v95 = vld [vmem:[%s2 + $0x158] sm:$0xff]
      %v96 = vld [vmem:[%s2 + $0x160] sm:$0xff]
      %v97 = vld [vmem:[%s2 + $0x168] sm:$0xff]
      %v98 = vld [vmem:[%s2 + $0x170] sm:$0xff]
      %v99 = vld [vmem:[%s2 + $0x178] sm:$0xff]
      %v100 = vld [vmem:[%s2 + $0x180] sm:$0xff]
      %v101 = vld [vmem:[%s2 + $0x188] sm:$0xff]
      %v102 = vld [vmem:[%s2 + $0x190] sm:$0xff]
      %v103 = vld [vmem:[%s2 + $0x198] sm:$0xff]
      %v104 = vld [vmem:[%s2 + $0x1a0] sm:$0xff]
      %v105 = vld [vmem:[%s2 + $0x1a8] sm:$0xff]
      %v106 = vld [vmem:[%s2 + $0x1b0] sm:$0xff]
      %v107 = vld [vmem:[%s2 + $0x1b8] sm:$0xff]
      %v108 = vld [vmem:[%s2 + $0x1c0] sm:$0xff]
      %v109 = vld [vmem:[%s2 + $0x1c8] sm:$0xff]
      %v110 = vld [vmem:[%s2 + $0x1d0] sm:$0xff]
      %v111 = vld [vmem:[%s2 + $0x1d8] sm:$0xff]
      %v112 = vld [vmem:[%s2 + $0x1e0] sm:$0xff]
      %v113 = vld [vmem:[%s2 + $0x1e8] sm:$0xff]
      %v114 = vld [vmem:[%s2 + $0x1f0] sm:$0xff]
      %v115 = vld [vmem:[%s2 + $0x1f8] sm:$0xff]
      %v116 = vld [vmem:[%s2 + $0x200] sm:$0xff]
      %v117 = vld [vmem:[%s2 + $0x208] sm:$0xff]
      %v118 = vld [vmem:[%s2 + $0x210] sm:$0xff]
      %v119 = vld [vmem:[%s2 + $0x218] sm:$0xff]
      %v120 = vld [vmem:[%s2 + $0x220] sm:$0xff]
      %v121 = vld [vmem:[%s2 + $0x228] sm:$0xff]
      %v122 = vld [vmem:[%s2 + $0x230] sm:$0xff]
      %v123 = vld [vmem:[%s2 + $0x238] sm:$0xff]
      %v124 = vld [vmem:[%s2 + $0x240] sm:$0xff]
      %v125 = vld [vmem:[%s2 + $0x248] sm:$0xff]
      %v126 = vld [vmem:[%s2 + $0x250] sm:$0xff]
      %v127 = vld [vmem:[%s2 + $0x258] sm:$0xff]
      %v128 = vld [vmem:[%s2 + $0x260] sm:$0xff]
      %v129 = vld [vmem:[%s2 + $0x268] sm:$0xff]
      %v130 = vld [vmem:[%s2 + $0x270] sm:$0xff]
      %v131 = vld [vmem:[%s2 + $0x278] sm:$0xff]
      %133 = vst [vmem:[#allocation1] ss:$4 sm:$0xff] %v41
      %v134 = vld.sshfl [vmem:[#allocation1] sm:$0xff pattern:$0x73625140]
      %v135 = vld.sshfl [vmem:[#allocation1 + $0x8] sm:$0xff pattern:$0x73625140]
      %vm137 = vcmask 261120
      %v138 = vsel %vm137, %v135, 0
      %140 = vmatpush.msra.mxu0 %v112
      %141 = vmatpush.msra.mxu0 %v108
      %142 = vmatpush.msra.mxu0 %v104
      %143 = vmatpush.msra.mxu0 %v100
      %144 = vmatpush.msra.mxu0 %v96
      %145 = vmatpush.msra.mxu0 %v92
      %146 = vmatpush.msra.mxu0 %v88
      %147 = vmatpush.msra.mxu0 %v84
      %148 = vmatpush.msra.mxu0 %v80
      %149 = vmatpush.msra.mxu0 %v76
      %150 = vmatpush.msra.mxu0 %v72
      %151 = vmatpush.msra.mxu0 %v68
      %152 = vmatpush.msra.mxu0 %v64
      %153 = vmatpush.msra.mxu0 %v60
      %154 = vmatpush.msra.mxu0 %v56
      %155 = vmatpush.msra.mxu0 %v52
      %156 = vmatmul.f32.gmra.mxu0 %v134
      %v157 = vpop.f32.mrf.mxu0
      %v158 = vadd.f32 0.0, %v157
      %159 = vdwg.mxu0
      %160 = vmatpush.msra.mxu0 0.0
      %161 = vmatpush.msra.mxu0 0.0
      %162 = vmatpush.msra.mxu0 0.0
      %163 = vmatpush.msra.mxu0 0.0
      %164 = vmatpush.msra.mxu0 0.0
      %165 = vmatpush.msra.mxu0 0.0
      %166 = vmatpush.msra.mxu0 0.0
      %167 = vmatpush.msra.mxu0 0.0
      %168 = vmatpush.msra.mxu0 0.0
      %169 = vmatpush.msra.mxu0 0.0
      %170 = vmatpush.msra.mxu0 0.0
      %171 = vmatpush.msra.mxu0 0.0
      %172 = vmatpush.msra.mxu0 %v128
      %173 = vmatpush.msra.mxu0 %v124
      %174 = vmatpush.msra.mxu0 %v120
      %175 = vmatpush.msra.mxu0 %v116
      %176 = vmatmul.f32.gmra.mxu0 %v138
      %v177 = vpop.f32.mrf.mxu0
      %v178 = vadd.f32 %v158, %v177
      %179 = vdwg.mxu0
      %180 = vmatpush.msra.mxu0 %v113
      %181 = vmatpush.msra.mxu0 %v109
      %182 = vmatpush.msra.mxu0 %v105
      %183 = vmatpush.msra.mxu0 %v101
      %184 = vmatpush.msra.mxu0 %v97
      %185 = vmatpush.msra.mxu0 %v93
      %186 = vmatpush.msra.mxu0 %v89
      %187 = vmatpush.msra.mxu0 %v85
      %188 = vmatpush.msra.mxu0 %v81
      %189 = vmatpush.msra.mxu0 %v77
      %190 = vmatpush.msra.mxu0 %v73
      %191 = vmatpush.msra.mxu0 %v69
      %192 = vmatpush.msra.mxu0 %v65
      %193 = vmatpush.msra.mxu0 %v61
      %194 = vmatpush.msra.mxu0 %v57
      %195 = vmatpush.msra.mxu0 %v53
      %196 = vmatmul.f32.gmra.mxu0 %v134
      %v197 = vpop.f32.mrf.mxu0
      %v198 = vadd.f32 0.0, %v197
      %199 = vdwg.mxu0
      %200 = vmatpush.msra.mxu0 0.0
      %201 = vmatpush.msra.mxu0 0.0
      %202 = vmatpush.msra.mxu0 0.0
      %203 = vmatpush.msra.mxu0 0.0
      %204 = vmatpush.msra.mxu0 0.0
      %205 = vmatpush.msra.mxu0 0.0
      %206 = vmatpush.msra.mxu0 0.0
      %207 = vmatpush.msra.mxu0 0.0
      %208 = vmatpush.msra.mxu0 0.0
      %209 = vmatpush.msra.mxu0 0.0
      %210 = vmatpush.msra.mxu0 0.0
      %211 = vmatpush.msra.mxu0 0.0
      %212 = vmatpush.msra.mxu0 %v129
      %213 = vmatpush.msra.mxu0 %v125
      %214 = vmatpush.msra.mxu0 %v121
      %215 = vmatpush.msra.mxu0 %v117
      %216 = vmatmul.f32.gmra.mxu0 %v138
      %v217 = vpop.f32.mrf.mxu0
      %v218 = vadd.f32 %v198, %v217
      %219 = vdwg.mxu0
      %220 = vmatpush.msra.mxu0 %v114
      %221 = vmatpush.msra.mxu0 %v110
      %222 = vmatpush.msra.mxu0 %v106
      %223 = vmatpush.msra.mxu0 %v102
      %224 = vmatpush.msra.mxu0 %v98
      %225 = vmatpush.msra.mxu0 %v94
      %226 = vmatpush.msra.mxu0 %v90
      %227 = vmatpush.msra.mxu0 %v86
      %228 = vmatpush.msra.mxu0 %v82
      %229 = vmatpush.msra.mxu0 %v78
      %230 = vmatpush.msra.mxu0 %v74
      %231 = vmatpush.msra.mxu0 %v70
      %232 = vmatpush.msra.mxu0 %v66
      %233 = vmatpush.msra.mxu0 %v62
      %234 = vmatpush.msra.mxu0 %v58
      %235 = vmatpush.msra.mxu0 %v54
      %236 = vmatmul.f32.gmra.mxu0 %v134
      %v237 = vpop.f32.mrf.mxu0
      %v238 = vadd.f32 0.0, %v237
      %239 = vdwg.mxu0
      %240 = vmatpush.msra.mxu0 0.0
      %241 = vmatpush.msra.mxu0 0.0
      %242 = vmatpush.msra.mxu0 0.0
      %243 = vmatpush.msra.mxu0 0.0
      %244 = vmatpush.msra.mxu0 0.0
      %245 = vmatpush.msra.mxu0 0.0
      %246 = vmatpush.msra.mxu0 0.0
      %247 = vmatpush.msra.mxu0 0.0
      %248 = vmatpush.msra.mxu0 0.0
      %249 = vmatpush.msra.mxu0 0.0
      %250 = vmatpush.msra.mxu0 0.0
      %251 = vmatpush.msra.mxu0 0.0
      %252 = vmatpush.msra.mxu0 %v130
      %253 = vmatpush.msra.mxu0 %v126
      %254 = vmatpush.msra.mxu0 %v122
      %255 = vmatpush.msra.mxu0 %v118
      %256 = vmatmul.f32.gmra.mxu0 %v138
      %v257 = vpop.f32.mrf.mxu0
      %v258 = vadd.f32 %v238, %v257
      %259 = vdwg.mxu0
      %260 = vmatpush.msra.mxu0 %v115
      %261 = vmatpush.msra.mxu0 %v111
      %262 = vmatpush.msra.mxu0 %v107
      %263 = vmatpush.msra.mxu0 %v103
      %264 = vmatpush.msra.mxu0 %v99
      %265 = vmatpush.msra.mxu0 %v95
      %266 = vmatpush.msra.mxu0 %v91
      %267 = vmatpush.msra.mxu0 %v87
      %268 = vmatpush.msra.mxu0 %v83
      %269 = vmatpush.msra.mxu0 %v79
      %270 = vmatpush.msra.mxu0 %v75
      %271 = vmatpush.msra.mxu0 %v71
      %272 = vmatpush.msra.mxu0 %v67
      %273 = vmatpush.msra.mxu0 %v63
      %274 = vmatpush.msra.mxu0 %v59
      %275 = vmatpush.msra.mxu0 %v55
      %276 = vmatmul.f32.gmra.mxu0 %v134
      %v277 = vpop.f32.mrf.mxu0
      %v278 = vadd.f32 0.0, %v277
      %279 = vdwg.mxu0
      %280 = vmatpush.msra.mxu0 0.0
      %281 = vmatpush.msra.mxu0 0.0
      %282 = vmatpush.msra.mxu0 0.0
      %283 = vmatpush.msra.mxu0 0.0
      %284 = vmatpush.msra.mxu0 0.0
      %285 = vmatpush.msra.mxu0 0.0
      %286 = vmatpush.msra.mxu0 0.0
      %287 = vmatpush.msra.mxu0 0.0
      %288 = vmatpush.msra.mxu0 0.0
      %289 = vmatpush.msra.mxu0 0.0
      %290 = vmatpush.msra.mxu0 0.0
      %291 = vmatpush.msra.mxu0 0.0
      %292 = vmatpush.msra.mxu0 %v131
      %293 = vmatpush.msra.mxu0 %v127
      %294 = vmatpush.msra.mxu0 %v123
      %295 = vmatpush.msra.mxu0 %v119
      %296 = vmatmul.f32.gmra.mxu0 %v138
      %v297 = vpop.f32.mrf.mxu0
      %v298 = vadd.f32 %v278, %v297
      %299 = vdwg.mxu0
      %v300 = vld [vmem:[#allocation2] sm:$0xff]
      %v301 = vld [vmem:[#allocation2 + $0x8] sm:$0xff]
      %v302 = vld [vmem:[#allocation2 + $0x10] sm:$0xff]
      %v303 = vld [vmem:[#allocation2 + $0x18] sm:$0xff]
      %v304 = vld [vmem:[#allocation2 + $0x20] sm:$0xff]
      %v305 = vld [vmem:[#allocation2 + $0x28] sm:$0xff]
      %v306 = vld [vmem:[#allocation2 + $0x30] sm:$0xff]
      %v307 = vld [vmem:[#allocation2 + $0x38] sm:$0xff]
      %v308 = vld [vmem:[#allocation2 + $0x40] sm:$0xff]
      %v309 = vld [vmem:[#allocation2 + $0x48] sm:$0xff]
      %v310 = vld [vmem:[#allocation2 + $0x50] sm:$0xff]
      %v311 = vld [vmem:[#allocation2 + $0x58] sm:$0xff]
      %v312 = vld [vmem:[#allocation2 + $0x60] sm:$0xff]
      %v313 = vld [vmem:[#allocation2 + $0x68] sm:$0xff]
      %v314 = vld [vmem:[#allocation2 + $0x70] sm:$0xff]
      %v315 = vld [vmem:[#allocation2 + $0x78] sm:$0xff]
      %v316 = vld [vmem:[#allocation2 + $0x80] sm:$0xff]
      %v317 = vld [vmem:[#allocation2 + $0x88] sm:$0xff]
      %v318 = vld [vmem:[#allocation2 + $0x90] sm:$0xff]
      %v319 = vld [vmem:[#allocation2 + $0x98] sm:$0xff]
      %v320 = vld [vmem:[#allocation2 + $0xa0] sm:$0xff]
      %v321 = vld [vmem:[#allocation2 + $0xa8] sm:$0xff]
      %v322 = vld [vmem:[#allocation2 + $0xb0] sm:$0xff]
      %v323 = vld [vmem:[#allocation2 + $0xb8] sm:$0xff]
      %v324 = vld [vmem:[#allocation2 + $0xc0] sm:$0xff]
      %v325 = vld [vmem:[#allocation2 + $0xc8] sm:$0xff]
      %v326 = vld [vmem:[#allocation2 + $0xd0] sm:$0xff]
      %v327 = vld [vmem:[#allocation2 + $0xd8] sm:$0xff]
      %v328 = vld [vmem:[#allocation2 + $0xe0] sm:$0xff]
      %v329 = vld [vmem:[#allocation2 + $0xe8] sm:$0xff]
      %v330 = vld [vmem:[#allocation2 + $0xf0] sm:$0xff]
      %v331 = vld [vmem:[#allocation2 + $0xf8] sm:$0xff]
      %v332 = vld [vmem:[#allocation2 + $0x100] sm:$0xff]
      %v333 = vld [vmem:[#allocation2 + $0x108] sm:$0xff]
      %v334 = vld [vmem:[#allocation2 + $0x110] sm:$0xff]
      %v335 = vld [vmem:[#allocation2 + $0x118] sm:$0xff]
      %v336 = vld [vmem:[#allocation2 + $0x120] sm:$0xff]
      %v337 = vld [vmem:[#allocation2 + $0x128] sm:$0xff]
      %v338 = vld [vmem:[#allocation2 + $0x130] sm:$0xff]
      %v339 = vld [vmem:[#allocation2 + $0x138] sm:$0xff]
      %v340 = vld [vmem:[#allocation2 + $0x140] sm:$0xff]
      %v341 = vld [vmem:[#allocation2 + $0x148] sm:$0xff]
      %v342 = vld [vmem:[#allocation2 + $0x150] sm:$0xff]
      %v343 = vld [vmem:[#allocation2 + $0x158] sm:$0xff]
      %v344 = vld [vmem:[#allocation2 + $0x160] sm:$0xff]
      %v345 = vld [vmem:[#allocation2 + $0x168] sm:$0xff]
      %v346 = vld [vmem:[#allocation2 + $0x170] sm:$0xff]
      %v347 = vld [vmem:[#allocation2 + $0x178] sm:$0xff]
      %v348 = vld [vmem:[#allocation2 + $0x180] sm:$0xff]
      %v349 = vld [vmem:[#allocation2 + $0x188] sm:$0xff]
      %v350 = vld [vmem:[#allocation2 + $0x190] sm:$0xff]
      %v351 = vld [vmem:[#allocation2 + $0x198] sm:$0xff]
      %v352 = vld [vmem:[#allocation2 + $0x1a0] sm:$0xff]
      %v353 = vld [vmem:[#allocation2 + $0x1a8] sm:$0xff]
      %v354 = vld [vmem:[#allocation2 + $0x1b0] sm:$0xff]
      %v355 = vld [vmem:[#allocation2 + $0x1b8] sm:$0xff]
      %v356 = vld [vmem:[#allocation2 + $0x1c0] sm:$0xff]
      %v357 = vld [vmem:[#allocation2 + $0x1c8] sm:$0xff]
      %v358 = vld [vmem:[#allocation2 + $0x1d0] sm:$0xff]
      %v359 = vld [vmem:[#allocation2 + $0x1d8] sm:$0xff]
      %v360 = vld [vmem:[#allocation2 + $0x1e0] sm:$0xff]
      %v361 = vld [vmem:[#allocation2 + $0x1e8] sm:$0xff]
      %v362 = vld [vmem:[#allocation2 + $0x1f0] sm:$0xff]
      %v363 = vld [vmem:[#allocation2 + $0x1f8] sm:$0xff]
      %v364 = vld [vmem:[#allocation2 + $0x200] sm:$0xff]
      %v365 = vld [vmem:[#allocation2 + $0x208] sm:$0xff]
      %v366 = vld [vmem:[#allocation2 + $0x210] sm:$0xff]
      %v367 = vld [vmem:[#allocation2 + $0x218] sm:$0xff]
      %v368 = vld [vmem:[#allocation2 + $0x220] sm:$0xff]
      %v369 = vld [vmem:[#allocation2 + $0x228] sm:$0xff]
      %v370 = vld [vmem:[#allocation2 + $0x230] sm:$0xff]
      %v371 = vld [vmem:[#allocation2 + $0x238] sm:$0xff]
      %v372 = vld [vmem:[#allocation2 + $0x240] sm:$0xff]
      %v373 = vld [vmem:[#allocation2 + $0x248] sm:$0xff]
      %v374 = vld [vmem:[#allocation2 + $0x250] sm:$0xff]
      %v375 = vld [vmem:[#allocation2 + $0x258] sm:$0xff]
      %v376 = vld [vmem:[#allocation2 + $0x260] sm:$0xff]
      %v377 = vld [vmem:[#allocation2 + $0x268] sm:$0xff]
      %v378 = vld [vmem:[#allocation2 + $0x270] sm:$0xff]
      %v379 = vld [vmem:[#allocation2 + $0x278] sm:$0xff]
      %381 = vst [vmem:[#allocation1] ss:$4 sm:$0xff] %v42
      %v382 = vld.sshfl [vmem:[#allocation1] sm:$0xff pattern:$0x73625140]
      %v383 = vld.sshfl [vmem:[#allocation1 + $0x8] sm:$0xff pattern:$0x73625140]
      %v385 = vsel %vm137, %v383, 0
      %387 = vmatpush.msra.mxu0 %v360
      %388 = vmatpush.msra.mxu0 %v356
      %389 = vmatpush.msra.mxu0 %v352
      %390 = vmatpush.msra.mxu0 %v348
      %391 = vmatpush.msra.mxu0 %v344
      %392 = vmatpush.msra.mxu0 %v340
      %393 = vmatpush.msra.mxu0 %v336
      %394 = vmatpush.msra.mxu0 %v332
      %395 = vmatpush.msra.mxu0 %v328
      %396 = vmatpush.msra.mxu0 %v324
      %397 = vmatpush.msra.mxu0 %v320
      %398 = vmatpush.msra.mxu0 %v316
      %399 = vmatpush.msra.mxu0 %v312
      %400 = vmatpush.msra.mxu0 %v308
      %401 = vmatpush.msra.mxu0 %v304
      %402 = vmatpush.msra.mxu0 %v300
      %403 = vmatmul.f32.gmra.mxu0 %v382
      %v404 = vpop.f32.mrf.mxu0
      %v405 = vadd.f32 0.0, %v404
      %406 = vdwg.mxu0
      %407 = vmatpush.msra.mxu0 0.0
      %408 = vmatpush.msra.mxu0 0.0
      %409 = vmatpush.msra.mxu0 0.0
      %410 = vmatpush.msra.mxu0 0.0
      %411 = vmatpush.msra.mxu0 0.0
      %412 = vmatpush.msra.mxu0 0.0
      %413 = vmatpush.msra.mxu0 0.0
      %414 = vmatpush.msra.mxu0 0.0
      %415 = vmatpush.msra.mxu0 0.0
      %416 = vmatpush.msra.mxu0 0.0
      %417 = vmatpush.msra.mxu0 0.0
      %418 = vmatpush.msra.mxu0 0.0
      %419 = vmatpush.msra.mxu0 %v376
      %420 = vmatpush.msra.mxu0 %v372
      %421 = vmatpush.msra.mxu0 %v368
      %422 = vmatpush.msra.mxu0 %v364
      %423 = vmatmul.f32.gmra.mxu0 %v385
      %v424 = vpop.f32.mrf.mxu0
      %v425 = vadd.f32 %v405, %v424
      %426 = vdwg.mxu0
      %427 = vmatpush.msra.mxu0 %v361
      %428 = vmatpush.msra.mxu0 %v357
      %429 = vmatpush.msra.mxu0 %v353
      %430 = vmatpush.msra.mxu0 %v349
      %431 = vmatpush.msra.mxu0 %v345
      %432 = vmatpush.msra.mxu0 %v341
      %433 = vmatpush.msra.mxu0 %v337
      %434 = vmatpush.msra.mxu0 %v333
      %435 = vmatpush.msra.mxu0 %v329
      %436 = vmatpush.msra.mxu0 %v325
      %437 = vmatpush.msra.mxu0 %v321
      %438 = vmatpush.msra.mxu0 %v317
      %439 = vmatpush.msra.mxu0 %v313
      %440 = vmatpush.msra.mxu0 %v309
      %441 = vmatpush.msra.mxu0 %v305
      %442 = vmatpush.msra.mxu0 %v301
      %443 = vmatmul.f32.gmra.mxu0 %v382
      %v444 = vpop.f32.mrf.mxu0
      %v445 = vadd.f32 0.0, %v444
      %446 = vdwg.mxu0
      %447 = vmatpush.msra.mxu0 0.0
      %448 = vmatpush.msra.mxu0 0.0
      %449 = vmatpush.msra.mxu0 0.0
      %450 = vmatpush.msra.mxu0 0.0
      %451 = vmatpush.msra.mxu0 0.0
      %452 = vmatpush.msra.mxu0 0.0
      %453 = vmatpush.msra.mxu0 0.0
      %454 = vmatpush.msra.mxu0 0.0
      %455 = vmatpush.msra.mxu0 0.0
      %456 = vmatpush.msra.mxu0 0.0
      %457 = vmatpush.msra.mxu0 0.0
      %458 = vmatpush.msra.mxu0 0.0
      %459 = vmatpush.msra.mxu0 %v377
      %460 = vmatpush.msra.mxu0 %v373
      %461 = vmatpush.msra.mxu0 %v369
      %462 = vmatpush.msra.mxu0 %v365
      %463 = vmatmul.f32.gmra.mxu0 %v385
      %v464 = vpop.f32.mrf.mxu0
      %v465 = vadd.f32 %v445, %v464
      %466 = vdwg.mxu0
      %467 = vmatpush.msra.mxu0 %v362
      %468 = vmatpush.msra.mxu0 %v358
      %469 = vmatpush.msra.mxu0 %v354
      %470 = vmatpush.msra.mxu0 %v350
      %471 = vmatpush.msra.mxu0 %v346
      %472 = vmatpush.msra.mxu0 %v342
      %473 = vmatpush.msra.mxu0 %v338
      %474 = vmatpush.msra.mxu0 %v334
      %475 = vmatpush.msra.mxu0 %v330
      %476 = vmatpush.msra.mxu0 %v326
      %477 = vmatpush.msra.mxu0 %v322
      %478 = vmatpush.msra.mxu0 %v318
      %479 = vmatpush.msra.mxu0 %v314
      %480 = vmatpush.msra.mxu0 %v310
      %481 = vmatpush.msra.mxu0 %v306
      %482 = vmatpush.msra.mxu0 %v302
      %483 = vmatmul.f32.gmra.mxu0 %v382
      %v484 = vpop.f32.mrf.mxu0
      %v485 = vadd.f32 0.0, %v484
      %486 = vdwg.mxu0
      %487 = vmatpush.msra.mxu0 0.0
      %488 = vmatpush.msra.mxu0 0.0
      %489 = vmatpush.msra.mxu0 0.0
      %490 = vmatpush.msra.mxu0 0.0
      %491 = vmatpush.msra.mxu0 0.0
      %492 = vmatpush.msra.mxu0 0.0
      %493 = vmatpush.msra.mxu0 0.0
      %494 = vmatpush.msra.mxu0 0.0
      %495 = vmatpush.msra.mxu0 0.0
      %496 = vmatpush.msra.mxu0 0.0
      %497 = vmatpush.msra.mxu0 0.0
      %498 = vmatpush.msra.mxu0 0.0
      %499 = vmatpush.msra.mxu0 %v378
      %500 = vmatpush.msra.mxu0 %v374
      %501 = vmatpush.msra.mxu0 %v370
      %502 = vmatpush.msra.mxu0 %v366
      %503 = vmatmul.f32.gmra.mxu0 %v385
      %v504 = vpop.f32.mrf.mxu0
      %v505 = vadd.f32 %v485, %v504
      %506 = vdwg.mxu0
      %507 = vmatpush.msra.mxu0 %v363
      %508 = vmatpush.msra.mxu0 %v359
      %509 = vmatpush.msra.mxu0 %v355
      %510 = vmatpush.msra.mxu0 %v351
      %511 = vmatpush.msra.mxu0 %v347
      %512 = vmatpush.msra.mxu0 %v343
      %513 = vmatpush.msra.mxu0 %v339
      %514 = vmatpush.msra.mxu0 %v335
      %515 = vmatpush.msra.mxu0 %v331
      %516 = vmatpush.msra.mxu0 %v327
      %517 = vmatpush.msra.mxu0 %v323
      %518 = vmatpush.msra.mxu0 %v319
      %519 = vmatpush.msra.mxu0 %v315
      %520 = vmatpush.msra.mxu0 %v311
      %521 = vmatpush.msra.mxu0 %v307
      %522 = vmatpush.msra.mxu0 %v303
      %523 = vmatmul.f32.gmra.mxu0 %v382
      %v524 = vpop.f32.mrf.mxu0
      %v525 = vadd.f32 0.0, %v524
      %526 = vdwg.mxu0
      %527 = vmatpush.msra.mxu0 0.0
      %528 = vmatpush.msra.mxu0 0.0
      %529 = vmatpush.msra.mxu0 0.0
      %530 = vmatpush.msra.mxu0 0.0
      %531 = vmatpush.msra.mxu0 0.0
      %532 = vmatpush.msra.mxu0 0.0
      %533 = vmatpush.msra.mxu0 0.0
      %534 = vmatpush.msra.mxu0 0.0
      %535 = vmatpush.msra.mxu0 0.0
      %536 = vmatpush.msra.mxu0 0.0
      %537 = vmatpush.msra.mxu0 0.0
      %538 = vmatpush.msra.mxu0 0.0
      %539 = vmatpush.msra.mxu0 %v379
      %540 = vmatpush.msra.mxu0 %v375
      %541 = vmatpush.msra.mxu0 %v371
      %542 = vmatpush.msra.mxu0 %v367
      %543 = vmatmul.f32.gmra.mxu0 %v385
      %v544 = vpop.f32.mrf.mxu0
      %v545 = vadd.f32 %v525, %v544
      %546 = vdwg.mxu0
      %v549 = vrot.slane %v218, 6
      %vm550 = vcmask 1041408
      %v551 = vsel %vm550, %v178, %v549
      %v553 = vadd.f32 %v47, %v551
      %v554 = vxor.u32 %v553, 2147483648
      %v555 = vmul.f32 %v554, 1.442695
      %v556 = vpow.pop %v555
      %v557 = vadd.f32 %v556, 1.0
      %v558 = vrcp.pop %v557
      %v559 = vmul.f32 %v557, %v558
      %v560 = vsub.f32 1.0, %v559
      %v561 = vmul.f32 %v558, %v560
      %v562 = vadd.f32 %v558, %v561
      %vm563 = vweird.f32 %v557
      %vm564 = vweird.f32 %v558
      %vm565 = vmor %vm563, %vm564
      %v566 = vsel %vm565, %v558, %v562
      %v567 = vand.u32 2147483647, %v557
      %vm568 = vcmp.eq.f32.partialorder %v567, 8.507059e+37
      %v569 = vand.u32 %v557, 2147483648
      %v570 = vor.u32 1.1754944e-38, %v569
      %v571 = vsel %vm568, %v570, %v566
      %v572 = vmul.f32 1.0, %v571
      %574 = vrot.lane.b32.xlu0 %v47, 96
      %v575 = vpop.permute.xlu0 %574
      %v576 = vrot.slane %v575, 2
      %v577 = vrot.slane %v575, 4
      %vm578 = vcmask 785408
      %v579 = vsel %vm578, %v576, %v577
      %v582 = vrot.slane %v258, 6
      %v583 = vsel %vm550, %v218, %v582
      %584 = vrot.lane.b32.xlu0 %v583, 96
      %v585 = vpop.permute.xlu0 %584
      %v586 = vrot.slane %v585, 2
      %v587 = vsel %vm578, %v585, %v586
      %v589 = vadd.f32 %v579, %v587
      %v590 = vxor.u32 %v589, 2147483648
      %v591 = vmul.f32 %v590, 1.442695
      %v592 = vpow.pop %v591
      %v593 = vadd.f32 %v592, 1.0
      %v594 = vrcp.pop %v593
      %v595 = vmul.f32 %v593, %v594
      %v596 = vsub.f32 1.0, %v595
      %v597 = vmul.f32 %v594, %v596
      %v598 = vadd.f32 %v594, %v597
      %vm599 = vweird.f32 %v593
      %vm600 = vweird.f32 %v594
      %vm601 = vmor %vm599, %vm600
      %v602 = vsel %vm601, %v594, %v598
      %v603 = vand.u32 2147483647, %v593
      %vm604 = vcmp.eq.f32.partialorder %v603, 8.507059e+37
      %v605 = vand.u32 %v593, 2147483648
      %v606 = vor.u32 1.1754944e-38, %v605
      %v607 = vsel %vm604, %v606, %v602
      %v608 = vmul.f32 1.0, %v607
      %v610 = vrot.slane %v298, 6
      %v611 = vsel %vm550, %v258, %v610
      %612 = vrot.lane.b32.xlu0 %v611, 64
      %v613 = vpop.permute.xlu0 %612
      %v614 = vrot.slane %v613, 2
      %vm615 = vcmask 523264
      %v616 = vsel %vm615, %v613, %v614
      %v618 = vmul.f32 %v572, %v616
      %619 = vrot.lane.b32.xlu0 %v47, 64
      %v620 = vpop.permute.xlu0 %619
      %v621 = vrot.slane %v620, 4
      %v622 = vrot.slane %v620, 6
      %v623 = vsel %vm615, %v621, %v622
      %v625 = vadd.f32 %v623, %v618
      %v626 = vtanh.pop %v625
      %v627 = vsub.f32 1.0, %v608
      %v628 = vmul.f32 %v627, %v626
      %v629 = vmul.f32 %v608, %v41
      %v630 = vadd.f32 %v628, %v629
      %v633 = vrot.slane %v465, 6
      %v634 = vsel %vm550, %v425, %v633
      %v636 = vadd.f32 %v51, %v634
      %v637 = vxor.u32 %v636, 2147483648
      %v638 = vmul.f32 %v637, 1.442695
      %v639 = vpow.pop %v638
      %v640 = vadd.f32 %v639, 1.0
      %v641 = vrcp.pop %v640
      %v642 = vmul.f32 %v640, %v641
      %v643 = vsub.f32 1.0, %v642
      %v644 = vmul.f32 %v641, %v643
      %v645 = vadd.f32 %v641, %v644
      %vm646 = vweird.f32 %v640
      %vm647 = vweird.f32 %v641
      %vm648 = vmor %vm646, %vm647
      %v649 = vsel %vm648, %v641, %v645
      %v650 = vand.u32 2147483647, %v640
      %vm651 = vcmp.eq.f32.partialorder %v650, 8.507059e+37
      %v652 = vand.u32 %v640, 2147483648
      %v653 = vor.u32 1.1754944e-38, %v652
      %v654 = vsel %vm651, %v653, %v649
      %v655 = vmul.f32 1.0, %v654
      %657 = vrot.lane.b32.xlu0 %v51, 96
      %v658 = vpop.permute.xlu0 %657
      %v659 = vrot.slane %v658, 2
      %v660 = vrot.slane %v658, 4
      %v661 = vsel %vm578, %v659, %v660
      %v664 = vrot.slane %v505, 6
      %v665 = vsel %vm550, %v465, %v664
      %666 = vrot.lane.b32.xlu0 %v665, 96
      %v667 = vpop.permute.xlu0 %666
      %v668 = vrot.slane %v667, 2
      %v669 = vsel %vm578, %v667, %v668
      %v671 = vadd.f32 %v661, %v669
      %v672 = vxor.u32 %v671, 2147483648
      %v673 = vmul.f32 %v672, 1.442695
      %v674 = vpow.pop %v673
      %v675 = vadd.f32 %v674, 1.0
      %v676 = vrcp.pop %v675
      %v677 = vmul.f32 %v675, %v676
      %v678 = vsub.f32 1.0, %v677
      %v679 = vmul.f32 %v676, %v678
      %v680 = vadd.f32 %v676, %v679
      %vm681 = vweird.f32 %v675
      %vm682 = vweird.f32 %v676
      %vm683 = vmor %vm681, %vm682
      %v684 = vsel %vm683, %v676, %v680
      %v685 = vand.u32 2147483647, %v675
      %vm686 = vcmp.eq.f32.partialorder %v685, 8.507059e+37
      %v687 = vand.u32 %v675, 2147483648
      %v688 = vor.u32 1.1754944e-38, %v687
      %v689 = vsel %vm686, %v688, %v684
      %v690 = vmul.f32 1.0, %v689
      %v692 = vrot.slane %v545, 6
      %v693 = vsel %vm550, %v505, %v692
      %694 = vrot.lane.b32.xlu0 %v693, 64
      %v695 = vpop.permute.xlu0 %694
      %v696 = vrot.slane %v695, 2
      %v697 = vsel %vm615, %v695, %v696
      %v699 = vmul.f32 %v655, %v697
      %700 = vrot.lane.b32.xlu0 %v51, 64
      %v701 = vpop.permute.xlu0 %700
      %v702 = vrot.slane %v701, 4
      %v703 = vrot.slane %v701, 6
      %v704 = vsel %vm615, %v702, %v703
      %v706 = vadd.f32 %v704, %v699
      %v707 = vtanh.pop %v706
      %v708 = vsub.f32 1.0, %v690
      %v709 = vmul.f32 %v708, %v707
      %v710 = vmul.f32 %v690, %v42
      %v711 = vadd.f32 %v709, %v710
      %s712 = smul.u32 %s36, 2
      %s713 = smul.addr %s712, 2
      %s714 = scalar_lea.vmem %s4, %s713
      %vm715 = vcmask 257026
      %vm716 = vmor %vm715, %vm550
      %717 = vst.msk [vmem:[%s714] sm:$0xf] %vm716, %v630
      %s718 = smul.u32 %s43, 2
      %s719 = smul.addr %s718, 2
      %s720 = scalar_lea.vmem %s5, %s719
      %721 = vst.msk [vmem:[%s720] sm:$0xf] %vm716, %v711
    $region26: #{voicefixer_forward.12} parent=1 // loop_footer
      %s40 = sadd.s32 1, %s36
    $region27: #{voicefixer_forward.12} parent=1 // loop_footer_branch
      %35 = sbr.rel target = $region23
    $region28: #{voicefixer_forward.12} parent=1 // loop_exit
      _
    // Predicated region
    $region29: #{voicefixer_forward.12} parent=1 // pred_check
      _
    $region30: #{voicefixer_forward.12} parent=1 // pred_check_branch
      %723 = sbr.rel (0) target = $region32
    $region31: #{voicefixer_forward.12} parent=1 // pred_region
      _
    $region32: #{voicefixer_forward.12} parent=1 // pred_fallthru
      _
    // Predicated region
    $region33: #{voicefixer_forward.12} parent=1 // pred_check
      _
    $region34: #{voicefixer_forward.12} parent=1 // pred_check_branch
      %725 = sbr.rel (0) target = $region36
    $region35: #{voicefixer_forward.12} parent=1 // pred_region
      _
    $region36: #{voicefixer_forward.12} parent=1 // pred_fallthru
      _
    // Predicated region
    $region37: #{voicefixer_forward.12} parent=1 // pred_check
      _
    $region38: #{voicefixer_forward.12} parent=1 // pred_check_branch
      %727 = sbr.rel (0) target = $region40
    $region39: #{voicefixer_forward.12} parent=1 // pred_region
      _
    $region40: #{voicefixer_forward.12} parent=1 // pred_fallthru
      _
    // Predicated region
    $region41: #{voicefixer_forward.12} parent=1 // pred_check
      _
    $region42: #{voicefixer_forward.12} parent=1 // pred_check_branch
      %729 = sbr.rel (0) target = $region44
    $region43: #{voicefixer_forward.12} parent=1 // pred_region
      _
    $region44: #{voicefixer_forward.12} parent=1 // pred_fallthru
      _
    %730 = vsyncpa [#allocation3], 1

// kernel: voicefixer_forward.9
$region0: #{voicefixer_forward.9}
  #allocation0 [shape = 'u32[]', space=smem, size = 0x4, offset = 0x4, fixed_abs, tag = 'smem constant byte address 0x4 - core index']
  #allocation1 [shape = 'u32[72,128]{1,0:T(1,128)}', space=vmem, size = 0x9000, scoped, tag = 'internal scratch']
  %s0 = inlined_call_operand.vmem [shape: f32[16,80], index: 0, kind: input, shape index: {}]
  %s1 = inlined_call_operand.hbm [shape: bf16[80,160], index: 1, kind: input, shape index: {}]
  %s2 = inlined_call_operand.vmem [shape: f32[1,160], index: 2, kind: input, shape index: {}]
  %s3 = inlined_call_operand.hbm [shape: bf16[160,320], index: 3, kind: input, shape index: {}]
  %s4 = inlined_call_operand.vmem [shape: f32[1,320], index: 4, kind: input, shape index: {}]
  %s5 = inlined_call_operand.hbm [shape: bf16[320,480], index: 5, kind: input, shape index: {}]
  %s6 = inlined_call_operand.hbm [shape: bf16[320,480], index: 6, kind: input, shape index: {}]
  %s7 = inlined_call_operand.vmem [shape: f32[16,480], index: 7, kind: output, shape index: {0}]
  %s8 = inlined_call_operand.vmem [shape: f32[16,480], index: 8, kind: output, shape index: {1}]
  %9 = xla_tuple %s7, %s8
  %s10 = sld [smem:[#allocation0]]
  $region62: #{voicefixer_forward.9} parent=0
    _
  %s12 = ssub.s32 1, %s10
  %s13 = scalar_select 0, %s12, %s10
  $region1: #{voicefixer_forward.9} parent=0
    #allocation2 [shape = 'u8[40960]{0}', space=vmem, size = 0xa000, scoped, tag = 'input window, operand 1, single buffered']
    #allocation3 [shape = 's32[1]{0}', space=sflag, size = 0x4, scoped, tag = 'scoped memory for voicefixer_forward.9']
    #allocation4 [shape = 'u8[122880]{0}', space=vmem, size = 0x1e000, scoped, tag = 'input window, operand 3, single buffered']
    #allocation5 [shape = 's32[1]{0}', space=sflag, size = 0x4, scoped, tag = 'scoped memory for voicefixer_forward.9']
    #allocation6 [shape = 'u8[327680]{0}', space=vmem, size = 0x50000, scoped, tag = 'input window, operand 5, single buffered']
    #allocation7 [shape = 'u8[327680]{0}', space=vmem, size = 0x50000, scoped, tag = 'input window, operand 6, single buffered']
    #allocation8 [shape = 's32[1]{0}', space=sflag, size = 0x4, scoped, tag = 'scoped memory for voicefixer_forward.9']
    %14 = vsyncpa [#allocation3], 0
    %15 = vsyncpa [#allocation5], 0
    %16 = vsyncpa [#allocation8], 0
    // Predicated region
    $region2: #{voicefixer_forward.9} parent=1 // pred_check
      _
    $region3: #{voicefixer_forward.9} parent=1 // pred_check_branch
      %18 = sbr.rel (0) target = $region5
    $region4: #{voicefixer_forward.9} parent=1 // pred_region
      _
    $region5: #{voicefixer_forward.9} parent=1 // pred_fallthru
      _
    // Predicated region
    $region6: #{voicefixer_forward.9} parent=1 // pred_check
      _
    $region7: #{voicefixer_forward.9} parent=1 // pred_check_branch
      %20 = sbr.rel (0) target = $region9
    $region8: #{voicefixer_forward.9} parent=1 // pred_region
      %22 = vsyncadd [#allocation3], 0
      %s23 = sshll.u32 %s1, 4
      %s24 = int_to_ptr.hbm [resolvable:$true] %s23
      %s25 = sshll.u32 [#allocation2], 4
      %s26 = int_to_ptr.vmem [resolvable:$true] %s25
      %31 = dma.hbm_to_vmem [thread:$0]  %s24, 1280, %s26, [#allocation3], 128, 128, 8
    $region9: #{voicefixer_forward.9} parent=1 // pred_fallthru
      _
    // Predicated region
    $region10: #{voicefixer_forward.9} parent=1 // pred_check
      _
    $region11: #{voicefixer_forward.9} parent=1 // pred_check_branch
      %33 = sbr.rel (0) target = $region13
    $region12: #{voicefixer_forward.9} parent=1 // pred_region
      _
    $region13: #{voicefixer_forward.9} parent=1 // pred_fallthru
      _
    // Predicated region
    $region14: #{voicefixer_forward.9} parent=1 // pred_check
      _
    $region15: #{voicefixer_forward.9} parent=1 // pred_check_branch
      %35 = sbr.rel (0) target = $region17
    $region16: #{voicefixer_forward.9} parent=1 // pred_region
      %37 = vsyncadd [#allocation5], 0
      %s38 = sshll.u32 %s3, 4
      %s39 = int_to_ptr.hbm [resolvable:$true] %s38
      %s40 = sshll.u32 [#allocation4], 4
      %s41 = int_to_ptr.vmem [resolvable:$true] %s40
      %46 = dma.hbm_to_vmem [thread:$0]  %s39, 3840, %s41, [#allocation5], 192, 192, 12
    $region17: #{voicefixer_forward.9} parent=1 // pred_fallthru
      _
    // Predicated region
    $region18: #{voicefixer_forward.9} parent=1 // pred_check
      _
    $region19: #{voicefixer_forward.9} parent=1 // pred_check_branch
      %48 = sbr.rel (0) target = $region21
    $region20: #{voicefixer_forward.9} parent=1 // pred_region
      _
    $region21: #{voicefixer_forward.9} parent=1 // pred_fallthru
      _
    // Predicated region
    $region22: #{voicefixer_forward.9} parent=1 // pred_check
      _
    $region23: #{voicefixer_forward.9} parent=1 // pred_check_branch
      %50 = sbr.rel (0) target = $region25
    $region24: #{voicefixer_forward.9} parent=1 // pred_region
      %52 = vsyncadd [#allocation5], 0
      %s53 = sshll.u32 %s5, 4
      %s54 = int_to_ptr.hbm [resolvable:$true] %s53
      %s55 = sshll.u32 [#allocation6], 4
      %s56 = int_to_ptr.vmem [resolvable:$true] %s55
      %61 = dma.hbm_to_vmem [thread:$0]  %s54, 10240, %s56, [#allocation5], 256, 256, 16
    $region25: #{voicefixer_forward.9} parent=1 // pred_fallthru
      _
    // Predicated region
    $region26: #{voicefixer_forward.9} parent=1 // pred_check
      _
    $region27: #{voicefixer_forward.9} parent=1 // pred_check_branch
      %63 = sbr.rel (0) target = $region29
    $region28: #{voicefixer_forward.9} parent=1 // pred_region
      %65 = vsyncadd [#allocation8], 0
      %s66 = sshll.u32 %s6, 4
      %s67 = int_to_ptr.hbm [resolvable:$true] %s66
      %s68 = sshll.u32 [#allocation7], 4
      %s69 = int_to_ptr.vmem [resolvable:$true] %s68
      %74 = dma.hbm_to_vmem [thread:$0]  %s67, 10240, %s69, [#allocation8], 256, 256, 16
    $region29: #{voicefixer_forward.9} parent=1 // pred_fallthru
      _
    // Predicated region
    $region30: #{voicefixer_forward.9} parent=1 // pred_check
      _
    $region31: #{voicefixer_forward.9} parent=1 // pred_check_branch
      %76 = sbr.rel (0) target = $region33
    $region32: #{voicefixer_forward.9} parent=1 // pred_region
      %78 = dma.done [#allocation3], 1280
    $region33: #{voicefixer_forward.9} parent=1 // pred_fallthru
      _
    // Predicated region
    $region34: #{voicefixer_forward.9} parent=1 // pred_check
      _
    $region35: #{voicefixer_forward.9} parent=1 // pred_check_branch
      %80 = sbr.rel (0) target = $region37
    $region36: #{voicefixer_forward.9} parent=1 // pred_region
      %82 = dma.done [#allocation5], 3840
    $region37: #{voicefixer_forward.9} parent=1 // pred_fallthru
      _
    // Predicated region
    $region38: #{voicefixer_forward.9} parent=1 // pred_check
      _
    $region39: #{voicefixer_forward.9} parent=1 // pred_check_branch
      %84 = sbr.rel (0) target = $region41
    $region40: #{voicefixer_forward.9} parent=1 // pred_region
      %86 = dma.done [#allocation5], 10240
    $region41: #{voicefixer_forward.9} parent=1 // pred_fallthru
      _
    // Predicated region
    $region42: #{voicefixer_forward.9} parent=1 // pred_check
      _
    $region43: #{voicefixer_forward.9} parent=1 // pred_check_branch
      %88 = sbr.rel (0) target = $region45
    $region44: #{voicefixer_forward.9} parent=1 // pred_region
      %90 = dma.done [#allocation8], 10240
    $region45: #{voicefixer_forward.9} parent=1 // pred_fallthru
      _
    %v92 = vld [vmem:[%s0] sm:$0xff]
    %v93 = vld [vmem:[%s0 + $0x8] sm:$0xff]
    %v94 = vpack.c.bf16 %v93, %v92
    %v95 = vld [vmem:[#allocation2] sm:$0xff]
    %v96 = vld [vmem:[#allocation2 + $0x8] sm:$0xff]
    %v97 = vld [vmem:[#allocation2 + $0x10] sm:$0xff]
    %v98 = vld [vmem:[#allocation2 + $0x18] sm:$0xff]
    %v99 = vld [vmem:[#allocation2 + $0x20] sm:$0xff]
    %v100 = vld [vmem:[#allocation2 + $0x28] sm:$0xff]
    %v101 = vld [vmem:[#allocation2 + $0x30] sm:$0xff]
    %v102 = vld [vmem:[#allocation2 + $0x38] sm:$0xff]
    %v103 = vld [vmem:[#allocation2 + $0x40] sm:$0xff]
    %v104 = vld [vmem:[#allocation2 + $0x48] sm:$0xff]
    %v105 = vld [vmem:[%s2] sm:$0x3]
    %v107 = vperm.slane %v105, 0
    %v108 = vperm.slane %v105, 1
    %v121 = vunpack.c.l.b16 %v95
    %v122 = vunpack.c.h.b16 %v95
    %v123 = vunpack.c.l.b16 %v96
    %v124 = vunpack.c.h.b16 %v96
    %v125 = vunpack.c.l.b16 %v97
    %v126 = vunpack.c.h.b16 %v97
    %v127 = vunpack.c.l.b16 %v98
    %v128 = vunpack.c.h.b16 %v98
    %v129 = vunpack.c.l.b16 %v99
    %v130 = vunpack.c.h.b16 %v99
    %v131 = vunpack.c.l.b16 %v100
    %v132 = vunpack.c.h.b16 %v100
    %v133 = vunpack.c.l.b16 %v101
    %v134 = vunpack.c.h.b16 %v101
    %v135 = vunpack.c.l.b16 %v102
    %v136 = vunpack.c.h.b16 %v102
    %v137 = vunpack.c.l.b16 %v103
    %v138 = vunpack.c.h.b16 %v103
    %v139 = vunpack.c.l.b16 %v104
    %v140 = vunpack.c.h.b16 %v104
    %v141 = vpack.c.b16 %v123, %v121
    %v142 = vpack.c.b16 %v124, %v122
    %v143 = vpack.c.b16 %v127, %v125
    %v144 = vpack.c.b16 %v128, %v126
    %v145 = vpack.c.b16 %v131, %v129
    %v146 = vpack.c.b16 %v132, %v130
    %v147 = vpack.c.b16 %v135, %v133
    %v148 = vpack.c.b16 %v136, %v134
    %v149 = vpack.c.b16 %v139, %v137
    %v150 = vpack.c.b16 %v140, %v138
    %vm161 = vcmask 654336
    %v163 = vsel %vm161, %v94, 0
    %165 = vmatpush.bf16.msra.mxu0 0
    %166 = vmatpush.bf16.msra.mxu0 0
    %167 = vmatpush.bf16.msra.mxu0 0
    %168 = vmatpush.bf16.msra.mxu0 %v149
    %169 = vmatpush.bf16.msra.mxu0 %v147
    %170 = vmatpush.bf16.msra.mxu0 %v145
    %171 = vmatpush.bf16.msra.mxu0 %v143
    %172 = vmatpush.bf16.msra.mxu0 %v141
    %173 = vmatmul.bf16.gmra.mxu0 %v163
    %v174 = vpop.f32.mrf.mxu0
    %v175 = vadd.f32 %v107, %v174
    %v176 = vpop.f32.mrf.mxu0
    %v177 = vadd.f32 %v107, %v176
    %178 = vdwg.mxu0
    %179 = vmatpush.bf16.msra.mxu0 0
    %180 = vmatpush.bf16.msra.mxu0 0
    %181 = vmatpush.bf16.msra.mxu0 0
    %182 = vmatpush.bf16.msra.mxu0 %v150
    %183 = vmatpush.bf16.msra.mxu0 %v148
    %184 = vmatpush.bf16.msra.mxu0 %v146
    %185 = vmatpush.bf16.msra.mxu0 %v144
    %186 = vmatpush.bf16.msra.mxu0 %v142
    %187 = vmatmul.bf16.gmra.mxu0 %v163
    %v188 = vpop.f32.mrf.mxu0
    %v189 = vadd.f32 %v108, %v188
    %v190 = vpop.f32.mrf.mxu0
    %v191 = vadd.f32 %v108, %v190
    %192 = vdwg.mxu0
    %v193 = vmax.f32 %v175, 0.0
    %v194 = vmax.f32 %v189, 0.0
    %v195 = vmax.f32 %v177, 0.0
    %v196 = vmax.f32 %v191, 0.0
    %v197 = vpack.c.bf16 %v195, %v193
    %v198 = vpack.c.bf16 %v196, %v194
    %v199 = vld [vmem:[#allocation4] sm:$0xff]
    %v200 = vld [vmem:[#allocation4 + $0x8] sm:$0xf]
    %v201 = vld [vmem:[#allocation4 + $0xc] sm:$0xff]
    %v202 = vld [vmem:[#allocation4 + $0x14] sm:$0xf]
    %v203 = vld [vmem:[#allocation4 + $0x18] sm:$0xff]
    %v204 = vld [vmem:[#allocation4 + $0x20] sm:$0xf]
    %v205 = vld [vmem:[#allocation4 + $0x24] sm:$0xff]
    %v206 = vld [vmem:[#allocation4 + $0x2c] sm:$0xf]
    %v207 = vld [vmem:[#allocation4 + $0x30] sm:$0xff]
    %v208 = vld [vmem:[#allocation4 + $0x38] sm:$0xf]
    %v209 = vld [vmem:[#allocation4 + $0x3c] sm:$0xff]
    %v210 = vld [vmem:[#allocation4 + $0x44] sm:$0xf]
    %v211 = vld [vmem:[#allocation4 + $0x48] sm:$0xff]
    %v212 = vld [vmem:[#allocation4 + $0x50] sm:$0xf]
    %v213 = vld [vmem:[#allocation4 + $0x54] sm:$0xff]
    %v214 = vld [vmem:[#allocation4 + $0x5c] sm:$0xf]
    %v215 = vld [vmem:[#allocation4 + $0x60] sm:$0xff]
    %v216 = vld [vmem:[#allocation4 + $0x68] sm:$0xf]
    %v217 = vld [vmem:[#allocation4 + $0x6c] sm:$0xff]
    %v218 = vld [vmem:[#allocation4 + $0x74] sm:$0xf]
    %v219 = vld [vmem:[#allocation4 + $0x78] sm:$0xff]
    %v220 = vld [vmem:[#allocation4 + $0x80] sm:$0xf]
    %v221 = vld [vmem:[#allocation4 + $0x84] sm:$0xff]
    %v222 = vld [vmem:[#allocation4 + $0x8c] sm:$0xf]
    %v223 = vld [vmem:[#allocation4 + $0x90] sm:$0xff]
    %v224 = vld [vmem:[#allocation4 + $0x98] sm:$0xf]
    %v225 = vld [vmem:[#allocation4 + $0x9c] sm:$0xff]
    %v226 = vld [vmem:[#allocation4 + $0xa4] sm:$0xf]
    %v227 = vld [vmem:[#allocation4 + $0xa8] sm:$0xff]
    %v228 = vld [vmem:[#allocation4 + $0xb0] sm:$0xf]
    %v229 = vld [vmem:[#allocation4 + $0xb4] sm:$0xff]
    %v230 = vld [vmem:[#allocation4 + $0xbc] sm:$0xf]
    %v231 = vld [vmem:[#allocation4 + $0xc0] sm:$0xff]
    %v232 = vld [vmem:[#allocation4 + $0xc8] sm:$0xf]
    %v233 = vld [vmem:[#allocation4 + $0xcc] sm:$0xff]
    %v234 = vld [vmem:[#allocation4 + $0xd4] sm:$0xf]
    %v235 = vld [vmem:[#allocation4 + $0xd8] sm:$0xff]
    %v236 = vld [vmem:[#allocation4 + $0xe0] sm:$0xf]
    %v237 = vld [vmem:[#allocation4 + $0xe4] sm:$0xff]
    %v238 = vld [vmem:[#allocation4 + $0xec] sm:$0xf]
    %v239 = vld [vmem:[%s4] sm:$0x7]
    %v241 = vperm.slane %v239, 0
    %v242 = vperm.slane %v239, 1
    %v243 = vperm.slane %v239, 2
    %v287 = vunpack.c.l.b16 %v199
    %v288 = vunpack.c.h.b16 %v199
    %v289 = vunpack.c.l.b16 %v200
    %v290 = vunpack.c.l.b16 %v201
    %v291 = vunpack.c.h.b16 %v201
    %v292 = vunpack.c.l.b16 %v202
    %v293 = vunpack.c.l.b16 %v203
    %v294 = vunpack.c.h.b16 %v203
    %v295 = vunpack.c.l.b16 %v204
    %v296 = vunpack.c.l.b16 %v205
    %v297 = vunpack.c.h.b16 %v205
    %v298 = vunpack.c.l.b16 %v206
    %v299 = vunpack.c.l.b16 %v207
    %v300 = vunpack.c.h.b16 %v207
    %v301 = vunpack.c.l.b16 %v208
    %v302 = vunpack.c.l.b16 %v209
    %v303 = vunpack.c.h.b16 %v209
    %v304 = vunpack.c.l.b16 %v210
    %v305 = vunpack.c.l.b16 %v211
    %v306 = vunpack.c.h.b16 %v211
    %v307 = vunpack.c.l.b16 %v212
    %v308 = vunpack.c.l.b16 %v213
    %v309 = vunpack.c.h.b16 %v213
    %v310 = vunpack.c.l.b16 %v214
    %v311 = vunpack.c.l.b16 %v215
    %v312 = vunpack.c.h.b16 %v215
    %v313 = vunpack.c.l.b16 %v216
    %v314 = vunpack.c.l.b16 %v217
    %v315 = vunpack.c.h.b16 %v217
    %v316 = vunpack.c.l.b16 %v218
    %v317 = vunpack.c.l.b16 %v219
    %v318 = vunpack.c.h.b16 %v219
    %v319 = vunpack.c.l.b16 %v220
    %v320 = vunpack.c.l.b16 %v221
    %v321 = vunpack.c.h.b16 %v221
    %v322 = vunpack.c.l.b16 %v222
    %v323 = vunpack.c.l.b16 %v223
    %v324 = vunpack.c.h.b16 %v223
    %v325 = vunpack.c.l.b16 %v224
    %v326 = vunpack.c.l.b16 %v225
    %v327 = vunpack.c.h.b16 %v225
    %v328 = vunpack.c.l.b16 %v226
    %v329 = vunpack.c.l.b16 %v227
    %v330 = vunpack.c.h.b16 %v227
    %v331 = vunpack.c.l.b16 %v228
    %v332 = vunpack.c.l.b16 %v229
    %v333 = vunpack.c.h.b16 %v229
    %v334 = vunpack.c.l.b16 %v230
    %v335 = vunpack.c.l.b16 %v231
    %v336 = vunpack.c.h.b16 %v231
    %v337 = vunpack.c.l.b16 %v232
    %v338 = vunpack.c.l.b16 %v233
    %v339 = vunpack.c.h.b16 %v233
    %v340 = vunpack.c.l.b16 %v234
    %v341 = vunpack.c.l.b16 %v235
    %v342 = vunpack.c.h.b16 %v235
    %v343 = vunpack.c.l.b16 %v236
    %v344 = vunpack.c.l.b16 %v237
    %v345 = vunpack.c.h.b16 %v237
    %v346 = vunpack.c.l.b16 %v238
    %v347 = vpack.c.b16 %v290, %v287
    %v348 = vpack.c.b16 %v291, %v288
    %v349 = vpack.c.b16 %v292, %v289
    %v350 = vpack.c.b16 %v296, %v293
    %v351 = vpack.c.b16 %v297, %v294
    %v352 = vpack.c.b16 %v298, %v295
    %v353 = vpack.c.b16 %v302, %v299
    %v354 = vpack.c.b16 %v303, %v300
    %v355 = vpack.c.b16 %v304, %v301
    %v356 = vpack.c.b16 %v308, %v305
    %v357 = vpack.c.b16 %v309, %v306
    %v358 = vpack.c.b16 %v310, %v307
    %v359 = vpack.c.b16 %v314, %v311
    %v360 = vpack.c.b16 %v315, %v312
    %v361 = vpack.c.b16 %v316, %v313
    %v362 = vpack.c.b16 %v320, %v317
    %v363 = vpack.c.b16 %v321, %v318
    %v364 = vpack.c.b16 %v322, %v319
    %v365 = vpack.c.b16 %v326, %v323
    %v366 = vpack.c.b16 %v327, %v324
    %v367 = vpack.c.b16 %v328, %v325
    %v368 = vpack.c.b16 %v332, %v329
    %v369 = vpack.c.b16 %v333, %v330
    %v370 = vpack.c.b16 %v334, %v331
    %v371 = vpack.c.b16 %v338, %v335
    %v372 = vpack.c.b16 %v339, %v336
    %v373 = vpack.c.b16 %v340, %v337
    %v374 = vpack.c.b16 %v344, %v341
    %v375 = vpack.c.b16 %v345, %v342
    %v376 = vpack.c.b16 %v346, %v343
    %vm407 = vcmask 261120
    %v409 = vsel %vm407, %v198, 0
    %411 = vmatpush.bf16.msra.mxu0 %v368
    %412 = vmatpush.bf16.msra.mxu0 %v365
    %413 = vmatpush.bf16.msra.mxu0 %v362
    %414 = vmatpush.bf16.msra.mxu0 %v359
    %415 = vmatpush.bf16.msra.mxu0 %v356
    %416 = vmatpush.bf16.msra.mxu0 %v353
    %417 = vmatpush.bf16.msra.mxu0 %v350
    %418 = vmatpush.bf16.msra.mxu0 %v347
    %419 = vmatmul.bf16.gmra.mxu0 %v197
    %v420 = vpop.f32.mrf.mxu0
    %v421 = vadd.f32 %v241, %v420
    %v422 = vpop.f32.mrf.mxu0
    %v423 = vadd.f32 %v241, %v422
    %424 = vdwg.mxu0
    %425 = vmatpush.bf16.msra.mxu0 0
    %426 = vmatpush.bf16.msra.mxu0 0
    %427 = vmatpush.bf16.msra.mxu0 0
    %428 = vmatpush.bf16.msra.mxu0 0
    %429 = vmatpush.bf16.msra.mxu0 0
    %430 = vmatpush.bf16.msra.mxu0 0
    %431 = vmatpush.bf16.msra.mxu0 %v374
    %432 = vmatpush.bf16.msra.mxu0 %v371
    %433 = vmatmul.bf16.gmra.mxu0 %v409
    %v434 = vpop.f32.mrf.mxu0
    %v435 = vadd.f32 %v421, %v434
    %v436 = vpop.f32.mrf.mxu0
    %v437 = vadd.f32 %v423, %v436
    %438 = vdwg.mxu0
    %439 = vmatpush.bf16.msra.mxu0 %v369
    %440 = vmatpush.bf16.msra.mxu0 %v366
    %441 = vmatpush.bf16.msra.mxu0 %v363
    %442 = vmatpush.bf16.msra.mxu0 %v360
    %443 = vmatpush.bf16.msra.mxu0 %v357
    %444 = vmatpush.bf16.msra.mxu0 %v354
    %445 = vmatpush.bf16.msra.mxu0 %v351
    %446 = vmatpush.bf16.msra.mxu0 %v348
    %447 = vmatmul.bf16.gmra.mxu0 %v197
    %v448 = vpop.f32.mrf.mxu0
    %v449 = vadd.f32 %v242, %v448
    %v450 = vpop.f32.mrf.mxu0
    %v451 = vadd.f32 %v242, %v450
    %452 = vdwg.mxu0
    %453 = vmatpush.bf16.msra.mxu0 0
    %454 = vmatpush.bf16.msra.mxu0 0
    %455 = vmatpush.bf16.msra.mxu0 0
    %456 = vmatpush.bf16.msra.mxu0 0
    %457 = vmatpush.bf16.msra.mxu0 0
    %458 = vmatpush.bf16.msra.mxu0 0
    %459 = vmatpush.bf16.msra.mxu0 %v375
    %460 = vmatpush.bf16.msra.mxu0 %v372
    %461 = vmatmul.bf16.gmra.mxu0 %v409
    %v462 = vpop.f32.mrf.mxu0
    %v463 = vadd.f32 %v449, %v462
    %v464 = vpop.f32.mrf.mxu0
    %v465 = vadd.f32 %v451, %v464
    %466 = vdwg.mxu0
    %467 = vmatpush.bf16.msra.mxu0 %v370
    %468 = vmatpush.bf16.msra.mxu0 %v367
    %469 = vmatpush.bf16.msra.mxu0 %v364
    %470 = vmatpush.bf16.msra.mxu0 %v361
    %471 = vmatpush.bf16.msra.mxu0 %v358
    %472 = vmatpush.bf16.msra.mxu0 %v355
    %473 = vmatpush.bf16.msra.mxu0 %v352
    %474 = vmatpush.bf16.msra.mxu0 %v349
    %475 = vmatmul.bf16.gmra.mxu0 %v197
    %v476 = vpop.f32.mrf.mxu0
    %v477 = vadd.f32 %v243, %v476
    %v478 = vpop.f32.mrf.mxu0
    %v479 = vadd.f32 %v243, %v478
    %480 = vdwg.mxu0
    %481 = vmatpush.bf16.msra.mxu0 0
    %482 = vmatpush.bf16.msra.mxu0 0
    %483 = vmatpush.bf16.msra.mxu0 0
    %484 = vmatpush.bf16.msra.mxu0 0
    %485 = vmatpush.bf16.msra.mxu0 0
    %486 = vmatpush.bf16.msra.mxu0 0
    %487 = vmatpush.bf16.msra.mxu0 %v376
    %488 = vmatpush.bf16.msra.mxu0 %v373
    %489 = vmatmul.bf16.gmra.mxu0 %v409
    %v490 = vpop.f32.mrf.mxu0
    %v491 = vadd.f32 %v477, %v490
    %v492 = vpop.f32.mrf.mxu0
    %v493 = vadd.f32 %v479, %v492
    %494 = vdwg.mxu0
    %v495 = vmax.f32 %v435, 0.0
    %v496 = vmax.f32 %v463, 0.0
    %v497 = vmax.f32 %v491, 0.0
    %v498 = vmax.f32 %v437, 0.0
    %v499 = vmax.f32 %v465, 0.0
    %v500 = vmax.f32 %v493, 0.0
    %v501 = vpack.c.bf16 %v498, %v495
    %v502 = vpack.c.bf16 %v499, %v496
    %v503 = vpack.c.bf16 %v500, %v497
    %v504 = vld [vmem:[#allocation6] sm:$0xff]
    %v505 = vld [vmem:[#allocation6 + $0x8] sm:$0xff]
    %v506 = vld [vmem:[#allocation6 + $0x10] sm:$0xff]
    %v507 = vld [vmem:[#allocation6 + $0x18] sm:$0xff]
    %v508 = vld [vmem:[#allocation6 + $0x20] sm:$0xff]
    %v509 = vld [vmem:[#allocation6 + $0x28] sm:$0xff]
    %v510 = vld [vmem:[#allocation6 + $0x30] sm:$0xff]
    %v511 = vld [vmem:[#allocation6 + $0x38] sm:$0xff]
    %v512 = vld [vmem:[#allocation6 + $0x40] sm:$0xff]
    %v513 = vld [vmem:[#allocation6 + $0x48] sm:$0xff]
    %v514 = vld [vmem:[#allocation6 + $0x50] sm:$0xff]
    %v515 = vld [vmem:[#allocation6 + $0x58] sm:$0xff]
    %v516 = vld [vmem:[#allocation6 + $0x60] sm:$0xff]
    %v517 = vld [vmem:[#allocation6 + $0x68] sm:$0xff]
    %v518 = vld [vmem:[#allocation6 + $0x70] sm:$0xff]
    %v519 = vld [vmem:[#allocation6 + $0x78] sm:$0xff]
    %v520 = vld [vmem:[#allocation6 + $0x80] sm:$0xff]
    %v521 = vld [vmem:[#allocation6 + $0x88] sm:$0xff]
    %v522 = vld [vmem:[#allocation6 + $0x90] sm:$0xff]
    %v523 = vld [vmem:[#allocation6 + $0x98] sm:$0xff]
    %v524 = vld [vmem:[#allocation6 + $0xa0] sm:$0xff]
    %v525 = vld [vmem:[#allocation6 + $0xa8] sm:$0xff]
    %v526 = vld [vmem:[#allocation6 + $0xb0] sm:$0xff]
    %v527 = vld [vmem:[#allocation6 + $0xb8] sm:$0xff]
    %v528 = vld [vmem:[#allocation6 + $0xc0] sm:$0xff]
    %v529 = vld [vmem:[#allocation6 + $0xc8] sm:$0xff]
    %v530 = vld [vmem:[#allocation6 + $0xd0] sm:$0xff]
    %v531 = vld [vmem:[#allocation6 + $0xd8] sm:$0xff]
    %v532 = vld [vmem:[#allocation6 + $0xe0] sm:$0xff]
    %v533 = vld [vmem:[#allocation6 + $0xe8] sm:$0xff]
    %v534 = vld [vmem:[#allocation6 + $0xf0] sm:$0xff]
    %v535 = vld [vmem:[#allocation6 + $0xf8] sm:$0xff]
    %v536 = vld [vmem:[#allocation6 + $0x100] sm:$0xff]
    %v537 = vld [vmem:[#allocation6 + $0x108] sm:$0xff]
    %v538 = vld [vmem:[#allocation6 + $0x110] sm:$0xff]
    %v539 = vld [vmem:[#allocation6 + $0x118] sm:$0xff]
    %v540 = vld [vmem:[#allocation6 + $0x120] sm:$0xff]
    %v541 = vld [vmem:[#allocation6 + $0x128] sm:$0xff]
    %v542 = vld [vmem:[#allocation6 + $0x130] sm:$0xff]
    %v543 = vld [vmem:[#allocation6 + $0x138] sm:$0xff]
    %v544 = vld [vmem:[#allocation6 + $0x140] sm:$0xff]
    %v545 = vld [vmem:[#allocation6 + $0x148] sm:$0xff]
    %v546 = vld [vmem:[#allocation6 + $0x150] sm:$0xff]
    %v547 = vld [vmem:[#allocation6 + $0x158] sm:$0xff]
    %v548 = vld [vmem:[#allocation6 + $0x160] sm:$0xff]
    %v549 = vld [vmem:[#allocation6 + $0x168] sm:$0xff]
    %v550 = vld [vmem:[#allocation6 + $0x170] sm:$0xff]
    %v551 = vld [vmem:[#allocation6 + $0x178] sm:$0xff]
    %v552 = vld [vmem:[#allocation6 + $0x180] sm:$0xff]
    %v553 = vld [vmem:[#allocation6 + $0x188] sm:$0xff]
    %v554 = vld [vmem:[#allocation6 + $0x190] sm:$0xff]
    %v555 = vld [vmem:[#allocation6 + $0x198] sm:$0xff]
    %v556 = vld [vmem:[#allocation6 + $0x1a0] sm:$0xff]
    %v557 = vld [vmem:[#allocation6 + $0x1a8] sm:$0xff]
    %v558 = vld [vmem:[#allocation6 + $0x1b0] sm:$0xff]
    %v559 = vld [vmem:[#allocation6 + $0x1b8] sm:$0xff]
    %v560 = vld [vmem:[#allocation6 + $0x1c0] sm:$0xff]
    %v561 = vld [vmem:[#allocation6 + $0x1c8] sm:$0xff]
    %v562 = vld [vmem:[#allocation6 + $0x1d0] sm:$0xff]
    %v563 = vld [vmem:[#allocation6 + $0x1d8] sm:$0xff]
    %v564 = vld [vmem:[#allocation6 + $0x1e0] sm:$0xff]
    %v565 = vld [vmem:[#allocation6 + $0x1e8] sm:$0xff]
    %v566 = vld [vmem:[#allocation6 + $0x1f0] sm:$0xff]
    %v567 = vld [vmem:[#allocation6 + $0x1f8] sm:$0xff]
    %v568 = vld [vmem:[#allocation6 + $0x200] sm:$0xff]
    %v569 = vld [vmem:[#allocation6 + $0x208] sm:$0xff]
    %v570 = vld [vmem:[#allocation6 + $0x210] sm:$0xff]
    %v571 = vld [vmem:[#allocation6 + $0x218] sm:$0xff]
    %v572 = vld [vmem:[#allocation6 + $0x220] sm:$0xff]
    %v573 = vld [vmem:[#allocation6 + $0x228] sm:$0xff]
    %v574 = vld [vmem:[#allocation6 + $0x230] sm:$0xff]
    %v575 = vld [vmem:[#allocation6 + $0x238] sm:$0xff]
    %v576 = vld [vmem:[#allocation6 + $0x240] sm:$0xff]
    %v577 = vld [vmem:[#allocation6 + $0x248] sm:$0xff]
    %v578 = vld [vmem:[#allocation6 + $0x250] sm:$0xff]
    %v579 = vld [vmem:[#allocation6 + $0x258] sm:$0xff]
    %v580 = vld [vmem:[#allocation6 + $0x260] sm:$0xff]
    %v581 = vld [vmem:[#allocation6 + $0x268] sm:$0xff]
    %v582 = vld [vmem:[#allocation6 + $0x270] sm:$0xff]
    %v583 = vld [vmem:[#allocation6 + $0x278] sm:$0xff]
    %v664 = vunpack.c.l.b16 %v504
    %v665 = vunpack.c.h.b16 %v504
    %v666 = vunpack.c.l.b16 %v505
    %v667 = vunpack.c.h.b16 %v505
    %v668 = vunpack.c.l.b16 %v506
    %v669 = vunpack.c.h.b16 %v506
    %v670 = vunpack.c.l.b16 %v507
    %v671 = vunpack.c.h.b16 %v507
    %v672 = vunpack.c.l.b16 %v508
    %v673 = vunpack.c.h.b16 %v508
    %v674 = vunpack.c.l.b16 %v509
    %v675 = vunpack.c.h.b16 %v509
    %v676 = vunpack.c.l.b16 %v510
    %v677 = vunpack.c.h.b16 %v510
    %v678 = vunpack.c.l.b16 %v511
    %v679 = vunpack.c.h.b16 %v511
    %v680 = vunpack.c.l.b16 %v512
    %v681 = vunpack.c.h.b16 %v512
    %v682 = vunpack.c.l.b16 %v513
    %v683 = vunpack.c.h.b16 %v513
    %v684 = vunpack.c.l.b16 %v514
    %v685 = vunpack.c.h.b16 %v514
    %v686 = vunpack.c.l.b16 %v515
    %v687 = vunpack.c.h.b16 %v515
    %v688 = vunpack.c.l.b16 %v516
    %v689 = vunpack.c.h.b16 %v516
    %v690 = vunpack.c.l.b16 %v517
    %v691 = vunpack.c.h.b16 %v517
    %v692 = vunpack.c.l.b16 %v518
    %v693 = vunpack.c.h.b16 %v518
    %v694 = vunpack.c.l.b16 %v519
    %v695 = vunpack.c.h.b16 %v519
    %v696 = vunpack.c.l.b16 %v520
    %v697 = vunpack.c.h.b16 %v520
    %v698 = vunpack.c.l.b16 %v521
    %v699 = vunpack.c.h.b16 %v521
    %v700 = vunpack.c.l.b16 %v522
    %v701 = vunpack.c.h.b16 %v522
    %v702 = vunpack.c.l.b16 %v523
    %v703 = vunpack.c.h.b16 %v523
    %v704 = vunpack.c.l.b16 %v524
    %v705 = vunpack.c.h.b16 %v524
    %v706 = vunpack.c.l.b16 %v525
    %v707 = vunpack.c.h.b16 %v525
    %v708 = vunpack.c.l.b16 %v526
    %v709 = vunpack.c.h.b16 %v526
    %v710 = vunpack.c.l.b16 %v527
    %v711 = vunpack.c.h.b16 %v527
    %v712 = vunpack.c.l.b16 %v528
    %v713 = vunpack.c.h.b16 %v528
    %v714 = vunpack.c.l.b16 %v529
    %v715 = vunpack.c.h.b16 %v529
    %v716 = vunpack.c.l.b16 %v530
    %v717 = vunpack.c.h.b16 %v530
    %v718 = vunpack.c.l.b16 %v531
    %v719 = vunpack.c.h.b16 %v531
    %v720 = vunpack.c.l.b16 %v532
    %v721 = vunpack.c.h.b16 %v532
    %v722 = vunpack.c.l.b16 %v533
    %v723 = vunpack.c.h.b16 %v533
    %v724 = vunpack.c.l.b16 %v534
    %v725 = vunpack.c.h.b16 %v534
    %v726 = vunpack.c.l.b16 %v535
    %v727 = vunpack.c.h.b16 %v535
    %v728 = vunpack.c.l.b16 %v536
    %v729 = vunpack.c.h.b16 %v536
    %v730 = vunpack.c.l.b16 %v537
    %v731 = vunpack.c.h.b16 %v537
    %v732 = vunpack.c.l.b16 %v538
    %v733 = vunpack.c.h.b16 %v538
    %v734 = vunpack.c.l.b16 %v539
    %v735 = vunpack.c.h.b16 %v539
    %v736 = vunpack.c.l.b16 %v540
    %v737 = vunpack.c.h.b16 %v540
    %v738 = vunpack.c.l.b16 %v541
    %v739 = vunpack.c.h.b16 %v541
    %v740 = vunpack.c.l.b16 %v542
    %v741 = vunpack.c.h.b16 %v542
    %v742 = vunpack.c.l.b16 %v543
    %v743 = vunpack.c.h.b16 %v543
    %v744 = vunpack.c.l.b16 %v544
    %v745 = vunpack.c.h.b16 %v544
    %v746 = vunpack.c.l.b16 %v545
    %v747 = vunpack.c.h.b16 %v545
    %v748 = vunpack.c.l.b16 %v546
    %v749 = vunpack.c.h.b16 %v546
    %v750 = vunpack.c.l.b16 %v547
    %v751 = vunpack.c.h.b16 %v547
    %v752 = vunpack.c.l.b16 %v548
    %v753 = vunpack.c.h.b16 %v548
    %v754 = vunpack.c.l.b16 %v549
    %v755 = vunpack.c.h.b16 %v549
    %v756 = vunpack.c.l.b16 %v550
    %v757 = vunpack.c.h.b16 %v550
    %v758 = vunpack.c.l.b16 %v551
    %v759 = vunpack.c.h.b16 %v551
    %v760 = vunpack.c.l.b16 %v552
    %v761 = vunpack.c.h.b16 %v552
    %v762 = vunpack.c.l.b16 %v553
    %v763 = vunpack.c.h.b16 %v553
    %v764 = vunpack.c.l.b16 %v554
    %v765 = vunpack.c.h.b16 %v554
    %v766 = vunpack.c.l.b16 %v555
    %v767 = vunpack.c.h.b16 %v555
    %v768 = vunpack.c.l.b16 %v556
    %v769 = vunpack.c.h.b16 %v556
    %v770 = vunpack.c.l.b16 %v557
    %v771 = vunpack.c.h.b16 %v557
    %v772 = vunpack.c.l.b16 %v558
    %v773 = vunpack.c.h.b16 %v558
    %v774 = vunpack.c.l.b16 %v559
    %v775 = vunpack.c.h.b16 %v559
    %v776 = vunpack.c.l.b16 %v560
    %v777 = vunpack.c.h.b16 %v560
    %v778 = vunpack.c.l.b16 %v561
    %v779 = vunpack.c.h.b16 %v561
    %v780 = vunpack.c.l.b16 %v562
    %v781 = vunpack.c.h.b16 %v562
    %v782 = vunpack.c.l.b16 %v563
    %v783 = vunpack.c.h.b16 %v563
    %v784 = vunpack.c.l.b16 %v564
    %v785 = vunpack.c.h.b16 %v564
    %v786 = vunpack.c.l.b16 %v565
    %v787 = vunpack.c.h.b16 %v565
    %v788 = vunpack.c.l.b16 %v566
    %v789 = vunpack.c.h.b16 %v566
    %v790 = vunpack.c.l.b16 %v567
    %v791 = vunpack.c.h.b16 %v567
    %v792 = vunpack.c.l.b16 %v568
    %v793 = vunpack.c.h.b16 %v568
    %v794 = vunpack.c.l.b16 %v569
    %v795 = vunpack.c.h.b16 %v569
    %v796 = vunpack.c.l.b16 %v570
    %v797 = vunpack.c.h.b16 %v570
    %v798 = vunpack.c.l.b16 %v571
    %v799 = vunpack.c.h.b16 %v571
    %v800 = vunpack.c.l.b16 %v572
    %v801 = vunpack.c.h.b16 %v572
    %v802 = vunpack.c.l.b16 %v573
    %v803 = vunpack.c.h.b16 %v573
    %v804 = vunpack.c.l.b16 %v574
    %v805 = vunpack.c.h.b16 %v574
    %v806 = vunpack.c.l.b16 %v575
    %v807 = vunpack.c.h.b16 %v575
    %v808 = vunpack.c.l.b16 %v576
    %v809 = vunpack.c.h.b16 %v576
    %v810 = vunpack.c.l.b16 %v577
    %v811 = vunpack.c.h.b16 %v577
    %v812 = vunpack.c.l.b16 %v578
    %v813 = vunpack.c.h.b16 %v578
    %v814 = vunpack.c.l.b16 %v579
    %v815 = vunpack.c.h.b16 %v579
    %v816 = vunpack.c.l.b16 %v580
    %v817 = vunpack.c.h.b16 %v580
    %v818 = vunpack.c.l.b16 %v581
    %v819 = vunpack.c.h.b16 %v581
    %v820 = vunpack.c.l.b16 %v582
    %v821 = vunpack.c.h.b16 %v582
    %v822 = vunpack.c.l.b16 %v583
    %v823 = vunpack.c.h.b16 %v583
    %v824 = vpack.c.b16 %v668, %v664
    %v825 = vpack.c.b16 %v669, %v665
    %v826 = vpack.c.b16 %v670, %v666
    %v827 = vpack.c.b16 %v671, %v667
    %v828 = vpack.c.b16 %v676, %v672
    %v829 = vpack.c.b16 %v677, %v673
    %v830 = vpack.c.b16 %v678, %v674
    %v831 = vpack.c.b16 %v679, %v675
    %v832 = vpack.c.b16 %v684, %v680
    %v833 = vpack.c.b16 %v685, %v681
    %v834 = vpack.c.b16 %v686, %v682
    %v835 = vpack.c.b16 %v687, %v683
    %v836 = vpack.c.b16 %v692, %v688
    %v837 = vpack.c.b16 %v693, %v689
    %v838 = vpack.c.b16 %v694, %v690
    %v839 = vpack.c.b16 %v695, %v691
    %v840 = vpack.c.b16 %v700, %v696
    %v841 = vpack.c.b16 %v701, %v697
    %v842 = vpack.c.b16 %v702, %v698
    %v843 = vpack.c.b16 %v703, %v699
    %v844 = vpack.c.b16 %v708, %v704
    %v845 = vpack.c.b16 %v709, %v705
    %v846 = vpack.c.b16 %v710, %v706
    %v847 = vpack.c.b16 %v711, %v707
    %v848 = vpack.c.b16 %v716, %v712
    %v849 = vpack.c.b16 %v717, %v713
    %v850 = vpack.c.b16 %v718, %v714
    %v851 = vpack.c.b16 %v719, %v715
    %v852 = vpack.c.b16 %v724, %v720
    %v853 = vpack.c.b16 %v725, %v721
    %v854 = vpack.c.b16 %v726, %v722
    %v855 = vpack.c.b16 %v727, %v723
    %v856 = vpack.c.b16 %v732, %v728
    %v857 = vpack.c.b16 %v733, %v729
    %v858 = vpack.c.b16 %v734, %v730
    %v859 = vpack.c.b16 %v735, %v731
    %v860 = vpack.c.b16 %v740, %v736
    %v861 = vpack.c.b16 %v741, %v737
    %v862 = vpack.c.b16 %v742, %v738
    %v863 = vpack.c.b16 %v743, %v739
    %v864 = vpack.c.b16 %v748, %v744
    %v865 = vpack.c.b16 %v749, %v745
    %v866 = vpack.c.b16 %v750, %v746
    %v867 = vpack.c.b16 %v751, %v747
    %v868 = vpack.c.b16 %v756, %v752
    %v869 = vpack.c.b16 %v757, %v753
    %v870 = vpack.c.b16 %v758, %v754
    %v871 = vpack.c.b16 %v759, %v755
    %v872 = vpack.c.b16 %v764, %v760
    %v873 = vpack.c.b16 %v765, %v761
    %v874 = vpack.c.b16 %v766, %v762
    %v875 = vpack.c.b16 %v767, %v763
    %v876 = vpack.c.b16 %v772, %v768
    %v877 = vpack.c.b16 %v773, %v769
    %v878 = vpack.c.b16 %v774, %v770
    %v879 = vpack.c.b16 %v775, %v771
    %v880 = vpack.c.b16 %v780, %v776
    %v881 = vpack.c.b16 %v781, %v777
    %v882 = vpack.c.b16 %v782, %v778
    %v883 = vpack.c.b16 %v783, %v779
    %v884 = vpack.c.b16 %v788, %v784
    %v885 = vpack.c.b16 %v789, %v785
    %v886 = vpack.c.b16 %v790, %v786
    %v887 = vpack.c.b16 %v791, %v787
    %v888 = vpack.c.b16 %v796, %v792
    %v889 = vpack.c.b16 %v797, %v793
    %v890 = vpack.c.b16 %v798, %v794
    %v891 = vpack.c.b16 %v799, %v795
    %v892 = vpack.c.b16 %v804, %v800
    %v893 = vpack.c.b16 %v805, %v801
    %v894 = vpack.c.b16 %v806, %v802
    %v895 = vpack.c.b16 %v807, %v803
    %v896 = vpack.c.b16 %v812, %v808
    %v897 = vpack.c.b16 %v813, %v809
    %v898 = vpack.c.b16 %v814, %v810
    %v899 = vpack.c.b16 %v815, %v811
    %v900 = vpack.c.b16 %v820, %v816
    %v901 = vpack.c.b16 %v821, %v817
    %v902 = vpack.c.b16 %v822, %v818
    %v903 = vpack.c.b16 %v823, %v819
    %vm984 = vcmask 523264
    %v986 = vsel %vm984, %v503, 0
    %988 = vmatpush.bf16.msra.mxu0 %v852
    %989 = vmatpush.bf16.msra.mxu0 %v848
    %990 = vmatpush.bf16.msra.mxu0 %v844
    %991 = vmatpush.bf16.msra.mxu0 %v840
    %992 = vmatpush.bf16.msra.mxu0 %v836
    %993 = vmatpush.bf16.msra.mxu0 %v832
    %994 = vmatpush.bf16.msra.mxu0 %v828
    %995 = vmatpush.bf16.msra.mxu0 %v824
    %996 = vmatmul.bf16.gmra.mxu0 %v501
    %v997 = vpop.f32.mrf.mxu0
    %v998 = vadd.f32 0.0, %v997
    %v999 = vpop.f32.mrf.mxu0
    %v1000 = vadd.f32 0.0, %v999
    %1001 = vdwg.mxu0
    %1002 = vmatpush.bf16.msra.mxu0 %v884
    %1003 = vmatpush.bf16.msra.mxu0 %v880
    %1004 = vmatpush.bf16.msra.mxu0 %v876
    %1005 = vmatpush.bf16.msra.mxu0 %v872
    %1006 = vmatpush.bf16.msra.mxu0 %v868
    %1007 = vmatpush.bf16.msra.mxu0 %v864
    %1008 = vmatpush.bf16.msra.mxu0 %v860
    %1009 = vmatpush.bf16.msra.mxu0 %v856
    %1010 = vmatmul.bf16.gmra.mxu0 %v502
    %v1011 = vpop.f32.mrf.mxu0
    %v1012 = vadd.f32 %v998, %v1011
    %v1013 = vpop.f32.mrf.mxu0
    %v1014 = vadd.f32 %v1000, %v1013
    %1015 = vdwg.mxu0
    %1016 = vmatpush.bf16.msra.mxu0 0
    %1017 = vmatpush.bf16.msra.mxu0 0
    %1018 = vmatpush.bf16.msra.mxu0 0
    %1019 = vmatpush.bf16.msra.mxu0 0
    %1020 = vmatpush.bf16.msra.mxu0 %v900
    %1021 = vmatpush.bf16.msra.mxu0 %v896
    %1022 = vmatpush.bf16.msra.mxu0 %v892
    %1023 = vmatpush.bf16.msra.mxu0 %v888
    %1024 = vmatmul.bf16.gmra.mxu0 %v986
    %v1025 = vpop.f32.mrf.mxu0
    %v1026 = vadd.f32 %v1012, %v1025
    %v1027 = vpop.f32.mrf.mxu0
    %v1028 = vadd.f32 %v1014, %v1027
    %1029 = vdwg.mxu0
    %1030 = vmatpush.bf16.msra.mxu0 %v853
    %1031 = vmatpush.bf16.msra.mxu0 %v849
    %1032 = vmatpush.bf16.msra.mxu0 %v845
    %1033 = vmatpush.bf16.msra.mxu0 %v841
    %1034 = vmatpush.bf16.msra.mxu0 %v837
    %1035 = vmatpush.bf16.msra.mxu0 %v833
    %1036 = vmatpush.bf16.msra.mxu0 %v829
    %1037 = vmatpush.bf16.msra.mxu0 %v825
    %1038 = vmatmul.bf16.gmra.mxu0 %v501
    %v1039 = vpop.f32.mrf.mxu0
    %v1040 = vadd.f32 0.0, %v1039
    %v1041 = vpop.f32.mrf.mxu0
    %v1042 = vadd.f32 0.0, %v1041
    %1043 = vdwg.mxu0
    %1044 = vmatpush.bf16.msra.mxu0 %v885
    %1045 = vmatpush.bf16.msra.mxu0 %v881
    %1046 = vmatpush.bf16.msra.mxu0 %v877
    %1047 = vmatpush.bf16.msra.mxu0 %v873
    %1048 = vmatpush.bf16.msra.mxu0 %v869
    %1049 = vmatpush.bf16.msra.mxu0 %v865
    %1050 = vmatpush.bf16.msra.mxu0 %v861
    %1051 = vmatpush.bf16.msra.mxu0 %v857
    %1052 = vmatmul.bf16.gmra.mxu0 %v502
    %v1053 = vpop.f32.mrf.mxu0
    %v1054 = vadd.f32 %v1040, %v1053
    %v1055 = vpop.f32.mrf.mxu0
    %v1056 = vadd.f32 %v1042, %v1055
    %1057 = vdwg.mxu0
    %1058 = vmatpush.bf16.msra.mxu0 0
    %1059 = vmatpush.bf16.msra.mxu0 0
    %1060 = vmatpush.bf16.msra.mxu0 0
    %1061 = vmatpush.bf16.msra.mxu0 0
    %1062 = vmatpush.bf16.msra.mxu0 %v901
    %1063 = vmatpush.bf16.msra.mxu0 %v897
    %1064 = vmatpush.bf16.msra.mxu0 %v893
    %1065 = vmatpush.bf16.msra.mxu0 %v889
    %1066 = vmatmul.bf16.gmra.mxu0 %v986
    %v1067 = vpop.f32.mrf.mxu0
    %v1068 = vadd.f32 %v1054, %v1067
    %v1069 = vpop.f32.mrf.mxu0
    %v1070 = vadd.f32 %v1056, %v1069
    %1071 = vdwg.mxu0
    %1072 = vmatpush.bf16.msra.mxu0 %v854
    %1073 = vmatpush.bf16.msra.mxu0 %v850
    %1074 = vmatpush.bf16.msra.mxu0 %v846
    %1075 = vmatpush.bf16.msra.mxu0 %v842
    %1076 = vmatpush.bf16.msra.mxu0 %v838
    %1077 = vmatpush.bf16.msra.mxu0 %v834
    %1078 = vmatpush.bf16.msra.mxu0 %v830
    %1079 = vmatpush.bf16.msra.mxu0 %v826
    %1080 = vmatmul.bf16.gmra.mxu0 %v501
    %v1081 = vpop.f32.mrf.mxu0
    %v1082 = vadd.f32 0.0, %v1081
    %v1083 = vpop.f32.mrf.mxu0
    %v1084 = vadd.f32 0.0, %v1083
    %1085 = vdwg.mxu0
    %1086 = vmatpush.bf16.msra.mxu0 %v886
    %1087 = vmatpush.bf16.msra.mxu0 %v882
    %1088 = vmatpush.bf16.msra.mxu0 %v878
    %1089 = vmatpush.bf16.msra.mxu0 %v874
    %1090 = vmatpush.bf16.msra.mxu0 %v870
    %1091 = vmatpush.bf16.msra.mxu0 %v866
    %1092 = vmatpush.bf16.msra.mxu0 %v862
    %1093 = vmatpush.bf16.msra.mxu0 %v858
    %1094 = vmatmul.bf16.gmra.mxu0 %v502
    %v1095 = vpop.f32.mrf.mxu0
    %v1096 = vadd.f32 %v1082, %v1095
    %v1097 = vpop.f32.mrf.mxu0
    %v1098 = vadd.f32 %v1084, %v1097
    %1099 = vdwg.mxu0
    %1100 = vmatpush.bf16.msra.mxu0 0
    %1101 = vmatpush.bf16.msra.mxu0 0
    %1102 = vmatpush.bf16.msra.mxu0 0
    %1103 = vmatpush.bf16.msra.mxu0 0
    %1104 = vmatpush.bf16.msra.mxu0 %v902
    %1105 = vmatpush.bf16.msra.mxu0 %v898
    %1106 = vmatpush.bf16.msra.mxu0 %v894
    %1107 = vmatpush.bf16.msra.mxu0 %v890
    %1108 = vmatmul.bf16.gmra.mxu0 %v986
    %v1109 = vpop.f32.mrf.mxu0
    %v1110 = vadd.f32 %v1096, %v1109
    %v1111 = vpop.f32.mrf.mxu0
    %v1112 = vadd.f32 %v1098, %v1111
    %1113 = vdwg.mxu0
    %1114 = vmatpush.bf16.msra.mxu0 %v855
    %1115 = vmatpush.bf16.msra.mxu0 %v851
    %1116 = vmatpush.bf16.msra.mxu0 %v847
    %1117 = vmatpush.bf16.msra.mxu0 %v843
    %1118 = vmatpush.bf16.msra.mxu0 %v839
    %1119 = vmatpush.bf16.msra.mxu0 %v835
    %1120 = vmatpush.bf16.msra.mxu0 %v831
    %1121 = vmatpush.bf16.msra.mxu0 %v827
    %1122 = vmatmul.bf16.gmra.mxu0 %v501
    %v1123 = vpop.f32.mrf.mxu0
    %v1124 = vadd.f32 0.0, %v1123
    %v1125 = vpop.f32.mrf.mxu0
    %v1126 = vadd.f32 0.0, %v1125
    %1127 = vdwg.mxu0
    %1128 = vmatpush.bf16.msra.mxu0 %v887
    %1129 = vmatpush.bf16.msra.mxu0 %v883
    %1130 = vmatpush.bf16.msra.mxu0 %v879
    %1131 = vmatpush.bf16.msra.mxu0 %v875
    %1132 = vmatpush.bf16.msra.mxu0 %v871
    %1133 = vmatpush.bf16.msra.mxu0 %v867
    %1134 = vmatpush.bf16.msra.mxu0 %v863
    %1135 = vmatpush.bf16.msra.mxu0 %v859
    %1136 = vmatmul.bf16.gmra.mxu0 %v502
    %v1137 = vpop.f32.mrf.mxu0
    %v1138 = vadd.f32 %v1124, %v1137
    %v1139 = vpop.f32.mrf.mxu0
    %v1140 = vadd.f32 %v1126, %v1139
    %1141 = vdwg.mxu0
    %1142 = vmatpush.bf16.msra.mxu0 0
    %1143 = vmatpush.bf16.msra.mxu0 0
    %1144 = vmatpush.bf16.msra.mxu0 0
    %1145 = vmatpush.bf16.msra.mxu0 0
    %1146 = vmatpush.bf16.msra.mxu0 %v903
    %1147 = vmatpush.bf16.msra.mxu0 %v899
    %1148 = vmatpush.bf16.msra.mxu0 %v895
    %1149 = vmatpush.bf16.msra.mxu0 %v891
    %1150 = vmatmul.bf16.gmra.mxu0 %v986
    %v1151 = vpop.f32.mrf.mxu0
    %v1152 = vadd.f32 %v1138, %v1151
    %v1153 = vpop.f32.mrf.mxu0
    %v1154 = vadd.f32 %v1140, %v1153
    %1155 = vdwg.mxu0
    %1156 = vst [vmem:[%s7] sm:$0xff] %v1026
    %1157 = vst [vmem:[%s7 + $0x8] sm:$0xff] %v1068
    %1158 = vst [vmem:[%s7 + $0x10] sm:$0xff] %v1110
    %vm1159 = vcmask 785408
    %1160 = vst.msk [vmem:[%s7 + $0x18] sm:$0xff] %vm1159, %v1152
    %1161 = vst [vmem:[%s7 + $0x20] sm:$0xff] %v1028
    %1162 = vst [vmem:[%s7 + $0x28] sm:$0xff] %v1070
    %1163 = vst [vmem:[%s7 + $0x30] sm:$0xff] %v1112
    %1164 = vst.msk [vmem:[%s7 + $0x38] sm:$0xff] %vm1159, %v1154
    %v1165 = vld [vmem:[#allocation7] sm:$0xff]
    %v1166 = vld [vmem:[#allocation7 + $0x8] sm:$0xff]
    %v1167 = vld [vmem:[#allocation7 + $0x10] sm:$0xff]
    %v1168 = vld [vmem:[#allocation7 + $0x18] sm:$0xff]
    %v1169 = vld [vmem:[#allocation7 + $0x20] sm:$0xff]
    %v1170 = vld [vmem:[#allocation7 + $0x28] sm:$0xff]
    %v1171 = vld [vmem:[#allocation7 + $0x30] sm:$0xff]
    %v1172 = vld [vmem:[#allocation7 + $0x38] sm:$0xff]
    %v1173 = vld [vmem:[#allocation7 + $0x40] sm:$0xff]
    %v1174 = vld [vmem:[#allocation7 + $0x48] sm:$0xff]
    %v1175 = vld [vmem:[#allocation7 + $0x50] sm:$0xff]
    %v1176 = vld [vmem:[#allocation7 + $0x58] sm:$0xff]
    %v1177 = vld [vmem:[#allocation7 + $0x60] sm:$0xff]
    %v1178 = vld [vmem:[#allocation7 + $0x68] sm:$0xff]
    %v1179 = vld [vmem:[#allocation7 + $0x70] sm:$0xff]
    %v1180 = vld [vmem:[#allocation7 + $0x78] sm:$0xff]
    %v1181 = vld [vmem:[#allocation7 + $0x80] sm:$0xff]
    %v1182 = vld [vmem:[#allocation7 + $0x88] sm:$0xff]
    %v1183 = vld [vmem:[#allocation7 + $0x90] sm:$0xff]
    %v1184 = vld [vmem:[#allocation7 + $0x98] sm:$0xff]
    %v1185 = vld [vmem:[#allocation7 + $0xa0] sm:$0xff]
    %v1186 = vld [vmem:[#allocation7 + $0xa8] sm:$0xff]
    %v1187 = vld [vmem:[#allocation7 + $0xb0] sm:$0xff]
    %v1188 = vld [vmem:[#allocation7 + $0xb8] sm:$0xff]
    %v1189 = vld [vmem:[#allocation7 + $0xc0] sm:$0xff]
    %v1190 = vld [vmem:[#allocation7 + $0xc8] sm:$0xff]
    %v1191 = vld [vmem:[#allocation7 + $0xd0] sm:$0xff]
    %v1192 = vld [vmem:[#allocation7 + $0xd8] sm:$0xff]
    %v1193 = vld [vmem:[#allocation7 + $0xe0] sm:$0xff]
    %v1194 = vld [vmem:[#allocation7 + $0xe8] sm:$0xff]
    %v1195 = vld [vmem:[#allocation7 + $0xf0] sm:$0xff]
    %v1196 = vld [vmem:[#allocation7 + $0xf8] sm:$0xff]
    %v1197 = vld [vmem:[#allocation7 + $0x100] sm:$0xff]
    %v1198 = vld [vmem:[#allocation7 + $0x108] sm:$0xff]
    %v1199 = vld [vmem:[#allocation7 + $0x110] sm:$0xff]
    %v1200 = vld [vmem:[#allocation7 + $0x118] sm:$0xff]
    %v1201 = vld [vmem:[#allocation7 + $0x120] sm:$0xff]
    %v1202 = vld [vmem:[#allocation7 + $0x128] sm:$0xff]
    %v1203 = vld [vmem:[#allocation7 + $0x130] sm:$0xff]
    %v1204 = vld [vmem:[#allocation7 + $0x138] sm:$0xff]
    %v1205 = vld [vmem:[#allocation7 + $0x140] sm:$0xff]
    %v1206 = vld [vmem:[#allocation7 + $0x148] sm:$0xff]
    %v1207 = vld [vmem:[#allocation7 + $0x150] sm:$0xff]
    %v1208 = vld [vmem:[#allocation7 + $0x158] sm:$0xff]
    %v1209 = vld [vmem:[#allocation7 + $0x160] sm:$0xff]
    %v1210 = vld [vmem:[#allocation7 + $0x168] sm:$0xff]
    %v1211 = vld [vmem:[#allocation7 + $0x170] sm:$0xff]
    %v1212 = vld [vmem:[#allocation7 + $0x178] sm:$0xff]
    %v1213 = vld [vmem:[#allocation7 + $0x180] sm:$0xff]
    %v1214 = vld [vmem:[#allocation7 + $0x188] sm:$0xff]
    %v1215 = vld [vmem:[#allocation7 + $0x190] sm:$0xff]
    %v1216 = vld [vmem:[#allocation7 + $0x198] sm:$0xff]
    %v1217 = vld [vmem:[#allocation7 + $0x1a0] sm:$0xff]
    %v1218 = vld [vmem:[#allocation7 + $0x1a8] sm:$0xff]
    %v1219 = vld [vmem:[#allocation7 + $0x1b0] sm:$0xff]
    %v1220 = vld [vmem:[#allocation7 + $0x1b8] sm:$0xff]
    %v1221 = vld [vmem:[#allocation7 + $0x1c0] sm:$0xff]
    %v1222 = vld [vmem:[#allocation7 + $0x1c8] sm:$0xff]
    %v1223 = vld [vmem:[#allocation7 + $0x1d0] sm:$0xff]
    %v1224 = vld [vmem:[#allocation7 + $0x1d8] sm:$0xff]
    %v1225 = vld [vmem:[#allocation7 + $0x1e0] sm:$0xff]
    %v1226 = vld [vmem:[#allocation7 + $0x1e8] sm:$0xff]
    %v1227 = vld [vmem:[#allocation7 + $0x1f0] sm:$0xff]
    %v1228 = vld [vmem:[#allocation7 + $0x1f8] sm:$0xff]
    %v1229 = vld [vmem:[#allocation7 + $0x200] sm:$0xff]
    %v1230 = vld [vmem:[#allocation7 + $0x208] sm:$0xff]
    %v1231 = vld [vmem:[#allocation7 + $0x210] sm:$0xff]
    %v1232 = vld [vmem:[#allocation7 + $0x218] sm:$0xff]
    %v1233 = vld [vmem:[#allocation7 + $0x220] sm:$0xff]
    %v1234 = vld [vmem:[#allocation7 + $0x228] sm:$0xff]
    %v1235 = vld [vmem:[#allocation7 + $0x230] sm:$0xff]
    %v1236 = vld [vmem:[#allocation7 + $0x238] sm:$0xff]
    %v1237 = vld [vmem:[#allocation7 + $0x240] sm:$0xff]
    %v1238 = vld [vmem:[#allocation7 + $0x248] sm:$0xff]
    %v1239 = vld [vmem:[#allocation7 + $0x250] sm:$0xff]
    %v1240 = vld [vmem:[#allocation7 + $0x258] sm:$0xff]
    %v1241 = vld [vmem:[#allocation7 + $0x260] sm:$0xff]
    %v1242 = vld [vmem:[#allocation7 + $0x268] sm:$0xff]
    %v1243 = vld [vmem:[#allocation7 + $0x270] sm:$0xff]
    %v1244 = vld [vmem:[#allocation7 + $0x278] sm:$0xff]
    %v1325 = vunpack.c.l.b16 %v1165
    %v1326 = vunpack.c.h.b16 %v1165
    %v1327 = vunpack.c.l.b16 %v1166
    %v1328 = vunpack.c.h.b16 %v1166
    %v1329 = vunpack.c.l.b16 %v1167
    %v1330 = vunpack.c.h.b16 %v1167
    %v1331 = vunpack.c.l.b16 %v1168
    %v1332 = vunpack.c.h.b16 %v1168
    %v1333 = vunpack.c.l.b16 %v1169
    %v1334 = vunpack.c.h.b16 %v1169
    %v1335 = vunpack.c.l.b16 %v1170
    %v1336 = vunpack.c.h.b16 %v1170
    %v1337 = vunpack.c.l.b16 %v1171
    %v1338 = vunpack.c.h.b16 %v1171
    %v1339 = vunpack.c.l.b16 %v1172
    %v1340 = vunpack.c.h.b16 %v1172
    %v1341 = vunpack.c.l.b16 %v1173
    %v1342 = vunpack.c.h.b16 %v1173
    %v1343 = vunpack.c.l.b16 %v1174
    %v1344 = vunpack.c.h.b16 %v1174
    %v1345 = vunpack.c.l.b16 %v1175
    %v1346 = vunpack.c.h.b16 %v1175
    %v1347 = vunpack.c.l.b16 %v1176
    %v1348 = vunpack.c.h.b16 %v1176
    %v1349 = vunpack.c.l.b16 %v1177
    %v1350 = vunpack.c.h.b16 %v1177
    %v1351 = vunpack.c.l.b16 %v1178
    %v1352 = vunpack.c.h.b16 %v1178
    %v1353 = vunpack.c.l.b16 %v1179
    %v1354 = vunpack.c.h.b16 %v1179
    %v1355 = vunpack.c.l.b16 %v1180
    %v1356 = vunpack.c.h.b16 %v1180
    %v1357 = vunpack.c.l.b16 %v1181
    %v1358 = vunpack.c.h.b16 %v1181
    %v1359 = vunpack.c.l.b16 %v1182
    %v1360 = vunpack.c.h.b16 %v1182
    %v1361 = vunpack.c.l.b16 %v1183
    %v1362 = vunpack.c.h.b16 %v1183
    %v1363 = vunpack.c.l.b16 %v1184
    %v1364 = vunpack.c.h.b16 %v1184
    %v1365 = vunpack.c.l.b16 %v1185
    %v1366 = vunpack.c.h.b16 %v1185
    %v1367 = vunpack.c.l.b16 %v1186
    %v1368 = vunpack.c.h.b16 %v1186
    %v1369 = vunpack.c.l.b16 %v1187
    %v1370 = vunpack.c.h.b16 %v1187
    %v1371 = vunpack.c.l.b16 %v1188
    %v1372 = vunpack.c.h.b16 %v1188
    %v1373 = vunpack.c.l.b16 %v1189
    %v1374 = vunpack.c.h.b16 %v1189
    %v1375 = vunpack.c.l.b16 %v1190
    %v1376 = vunpack.c.h.b16 %v1190
    %v1377 = vunpack.c.l.b16 %v1191
    %v1378 = vunpack.c.h.b16 %v1191
    %v1379 = vunpack.c.l.b16 %v1192
    %v1380 = vunpack.c.h.b16 %v1192
    %v1381 = vunpack.c.l.b16 %v1193
    %v1382 = vunpack.c.h.b16 %v1193
    %v1383 = vunpack.c.l.b16 %v1194
    %v1384 = vunpack.c.h.b16 %v1194
    %v1385 = vunpack.c.l.b16 %v1195
    %v1386 = vunpack.c.h.b16 %v1195
    %v1387 = vunpack.c.l.b16 %v1196
    %v1388 = vunpack.c.h.b16 %v1196
    %v1389 = vunpack.c.l.b16 %v1197
    %v1390 = vunpack.c.h.b16 %v1197
    %v1391 = vunpack.c.l.b16 %v1198
    %v1392 = vunpack.c.h.b16 %v1198
    %v1393 = vunpack.c.l.b16 %v1199
    %v1394 = vunpack.c.h.b16 %v1199
    %v1395 = vunpack.c.l.b16 %v1200
    %v1396 = vunpack.c.h.b16 %v1200
    %v1397 = vunpack.c.l.b16 %v1201
    %v1398 = vunpack.c.h.b16 %v1201
    %v1399 = vunpack.c.l.b16 %v1202
    %v1400 = vunpack.c.h.b16 %v1202
    %v1401 = vunpack.c.l.b16 %v1203
    %v1402 = vunpack.c.h.b16 %v1203
    %v1403 = vunpack.c.l.b16 %v1204
    %v1404 = vunpack.c.h.b16 %v1204
    %v1405 = vunpack.c.l.b16 %v1205
    %v1406 = vunpack.c.h.b16 %v1205
    %v1407 = vunpack.c.l.b16 %v1206
    %v1408 = vunpack.c.h.b16 %v1206
    %v1409 = vunpack.c.l.b16 %v1207
    %v1410 = vunpack.c.h.b16 %v1207
    %v1411 = vunpack.c.l.b16 %v1208
    %v1412 = vunpack.c.h.b16 %v1208
    %v1413 = vunpack.c.l.b16 %v1209
    %v1414 = vunpack.c.h.b16 %v1209
    %v1415 = vunpack.c.l.b16 %v1210
    %v1416 = vunpack.c.h.b16 %v1210
    %v1417 = vunpack.c.l.b16 %v1211
    %v1418 = vunpack.c.h.b16 %v1211
    %v1419 = vunpack.c.l.b16 %v1212
    %v1420 = vunpack.c.h.b16 %v1212
    %v1421 = vunpack.c.l.b16 %v1213
    %v1422 = vunpack.c.h.b16 %v1213
    %v1423 = vunpack.c.l.b16 %v1214
    %v1424 = vunpack.c.h.b16 %v1214
    %v1425 = vunpack.c.l.b16 %v1215
    %v1426 = vunpack.c.h.b16 %v1215
    %v1427 = vunpack.c.l.b16 %v1216
    %v1428 = vunpack.c.h.b16 %v1216
    %v1429 = vunpack.c.l.b16 %v1217
    %v1430 = vunpack.c.h.b16 %v1217
    %v1431 = vunpack.c.l.b16 %v1218
    %v1432 = vunpack.c.h.b16 %v1218
    %v1433 = vunpack.c.l.b16 %v1219
    %v1434 = vunpack.c.h.b16 %v1219
    %v1435 = vunpack.c.l.b16 %v1220
    %v1436 = vunpack.c.h.b16 %v1220
    %v1437 = vunpack.c.l.b16 %v1221
    %v1438 = vunpack.c.h.b16 %v1221
    %v1439 = vunpack.c.l.b16 %v1222
    %v1440 = vunpack.c.h.b16 %v1222
    %v1441 = vunpack.c.l.b16 %v1223
    %v1442 = vunpack.c.h.b16 %v1223
    %v1443 = vunpack.c.l.b16 %v1224
    %v1444 = vunpack.c.h.b16 %v1224
    %v1445 = vunpack.c.l.b16 %v1225
    %v1446 = vunpack.c.h.b16 %v1225
    %v1447 = vunpack.c.l.b16 %v1226
    %v1448 = vunpack.c.h.b16 %v1226
    %v1449 = vunpack.c.l.b16 %v1227
    %v1450 = vunpack.c.h.b16 %v1227
    %v1451 = vunpack.c.l.b16 %v1228
    %v1452 = vunpack.c.h.b16 %v1228
    %v1453 = vunpack.c.l.b16 %v1229
    %v1454 = vunpack.c.h.b16 %v1229
    %v1455 = vunpack.c.l.b16 %v1230
    %v1456 = vunpack.c.h.b16 %v1230
    %v1457 = vunpack.c.l.b16 %v1231
    %v1458 = vunpack.c.h.b16 %v1231
    %v1459 = vunpack.c.l.b16 %v1232
    %v1460 = vunpack.c.h.b16 %v1232
    %v1461 = vunpack.c.l.b16 %v1233
    %v1462 = vunpack.c.h.b16 %v1233
    %v1463 = vunpack.c.l.b16 %v1234
    %v1464 = vunpack.c.h.b16 %v1234
    %v1465 = vunpack.c.l.b16 %v1235
    %v1466 = vunpack.c.h.b16 %v1235
    %v1467 = vunpack.c.l.b16 %v1236
    %v1468 = vunpack.c.h.b16 %v1236
    %v1469 = vunpack.c.l.b16 %v1237
    %v1470 = vunpack.c.h.b16 %v1237
    %v1471 = vunpack.c.l.b16 %v1238
    %v1472 = vunpack.c.h.b16 %v1238
    %v1473 = vunpack.c.l.b16 %v1239
    %v1474 = vunpack.c.h.b16 %v1239
    %v1475 = vunpack.c.l.b16 %v1240
    %v1476 = vunpack.c.h.b16 %v1240
    %v1477 = vunpack.c.l.b16 %v1241
    %v1478 = vunpack.c.h.b16 %v1241
    %v1479 = vunpack.c.l.b16 %v1242
    %v1480 = vunpack.c.h.b16 %v1242
    %v1481 = vunpack.c.l.b16 %v1243
    %v1482 = vunpack.c.h.b16 %v1243
    %v1483 = vunpack.c.l.b16 %v1244
    %v1484 = vunpack.c.h.b16 %v1244
    %v1485 = vpack.c.b16 %v1329, %v1325
    %v1486 = vpack.c.b16 %v1330, %v1326
    %v1487 = vpack.c.b16 %v1331, %v1327
    %v1488 = vpack.c.b16 %v1332, %v1328
    %v1489 = vpack.c.b16 %v1337, %v1333
    %v1490 = vpack.c.b16 %v1338, %v1334
    %v1491 = vpack.c.b16 %v1339, %v1335
    %v1492 = vpack.c.b16 %v1340, %v1336
    %v1493 = vpack.c.b16 %v1345, %v1341
    %v1494 = vpack.c.b16 %v1346, %v1342
    %v1495 = vpack.c.b16 %v1347, %v1343
    %v1496 = vpack.c.b16 %v1348, %v1344
    %v1497 = vpack.c.b16 %v1353, %v1349
    %v1498 = vpack.c.b16 %v1354, %v1350
    %v1499 = vpack.c.b16 %v1355, %v1351
    %v1500 = vpack.c.b16 %v1356, %v1352
    %v1501 = vpack.c.b16 %v1361, %v1357
    %v1502 = vpack.c.b16 %v1362, %v1358
    %v1503 = vpack.c.b16 %v1363, %v1359
    %v1504 = vpack.c.b16 %v1364, %v1360
    %v1505 = vpack.c.b16 %v1369, %v1365
    %v1506 = vpack.c.b16 %v1370, %v1366
    %v1507 = vpack.c.b16 %v1371, %v1367
    %v1508 = vpack.c.b16 %v1372, %v1368
    %v1509 = vpack.c.b16 %v1377, %v1373
    %v1510 = vpack.c.b16 %v1378, %v1374
    %v1511 = vpack.c.b16 %v1379, %v1375
    %v1512 = vpack.c.b16 %v1380, %v1376
    %v1513 = vpack.c.b16 %v1385, %v1381
    %v1514 = vpack.c.b16 %v1386, %v1382
    %v1515 = vpack.c.b16 %v1387, %v1383
    %v1516 = vpack.c.b16 %v1388, %v1384
    %v1517 = vpack.c.b16 %v1393, %v1389
    %v1518 = vpack.c.b16 %v1394, %v1390
    %v1519 = vpack.c.b16 %v1395, %v1391
    %v1520 = vpack.c.b16 %v1396, %v1392
    %v1521 = vpack.c.b16 %v1401, %v1397
    %v1522 = vpack.c.b16 %v1402, %v1398
    %v1523 = vpack.c.b16 %v1403, %v1399
    %v1524 = vpack.c.b16 %v1404, %v1400
    %v1525 = vpack.c.b16 %v1409, %v1405
    %v1526 = vpack.c.b16 %v1410, %v1406
    %v1527 = vpack.c.b16 %v1411, %v1407
    %v1528 = vpack.c.b16 %v1412, %v1408
    %v1529 = vpack.c.b16 %v1417, %v1413
    %v1530 = vpack.c.b16 %v1418, %v1414
    %v1531 = vpack.c.b16 %v1419, %v1415
    %v1532 = vpack.c.b16 %v1420, %v1416
    %v1533 = vpack.c.b16 %v1425, %v1421
    %v1534 = vpack.c.b16 %v1426, %v1422
    %v1535 = vpack.c.b16 %v1427, %v1423
    %v1536 = vpack.c.b16 %v1428, %v1424
    %v1537 = vpack.c.b16 %v1433, %v1429
    %v1538 = vpack.c.b16 %v1434, %v1430
    %v1539 = vpack.c.b16 %v1435, %v1431
    %v1540 = vpack.c.b16 %v1436, %v1432
    %v1541 = vpack.c.b16 %v1441, %v1437
    %v1542 = vpack.c.b16 %v1442, %v1438
    %v1543 = vpack.c.b16 %v1443, %v1439
    %v1544 = vpack.c.b16 %v1444, %v1440
    %v1545 = vpack.c.b16 %v1449, %v1445
    %v1546 = vpack.c.b16 %v1450, %v1446
    %v1547 = vpack.c.b16 %v1451, %v1447
    %v1548 = vpack.c.b16 %v1452, %v1448
    %v1549 = vpack.c.b16 %v1457, %v1453
    %v1550 = vpack.c.b16 %v1458, %v1454
    %v1551 = vpack.c.b16 %v1459, %v1455
    %v1552 = vpack.c.b16 %v1460, %v1456
    %v1553 = vpack.c.b16 %v1465, %v1461
    %v1554 = vpack.c.b16 %v1466, %v1462
    %v1555 = vpack.c.b16 %v1467, %v1463
    %v1556 = vpack.c.b16 %v1468, %v1464
    %v1557 = vpack.c.b16 %v1473, %v1469
    %v1558 = vpack.c.b16 %v1474, %v1470
    %v1559 = vpack.c.b16 %v1475, %v1471
    %v1560 = vpack.c.b16 %v1476, %v1472
    %v1561 = vpack.c.b16 %v1481, %v1477
    %v1562 = vpack.c.b16 %v1482, %v1478
    %v1563 = vpack.c.b16 %v1483, %v1479
    %v1564 = vpack.c.b16 %v1484, %v1480
    %1645 = vmatpush.bf16.msra.mxu0 %v1513
    %1646 = vmatpush.bf16.msra.mxu0 %v1509
    %1647 = vmatpush.bf16.msra.mxu0 %v1505
    %1648 = vmatpush.bf16.msra.mxu0 %v1501
    %1649 = vmatpush.bf16.msra.mxu0 %v1497
    %1650 = vmatpush.bf16.msra.mxu0 %v1493
    %1651 = vmatpush.bf16.msra.mxu0 %v1489
    %1652 = vmatpush.bf16.msra.mxu0 %v1485
    %1653 = vmatmul.bf16.gmra.mxu0 %v501
    %v1654 = vpop.f32.mrf.mxu0
    %v1655 = vadd.f32 0.0, %v1654
    %v1656 = vpop.f32.mrf.mxu0
    %v1657 = vadd.f32 0.0, %v1656
    %1658 = vdwg.mxu0
    %1659 = vmatpush.bf16.msra.mxu0 %v1545
    %1660 = vmatpush.bf16.msra.mxu0 %v1541
    %1661 = vmatpush.bf16.msra.mxu0 %v1537
    %1662 = vmatpush.bf16.msra.mxu0 %v1533
    %1663 = vmatpush.bf16.msra.mxu0 %v1529
    %1664 = vmatpush.bf16.msra.mxu0 %v1525
    %1665 = vmatpush.bf16.msra.mxu0 %v1521
    %1666 = vmatpush.bf16.msra.mxu0 %v1517
    %1667 = vmatmul.bf16.gmra.mxu0 %v502
    %v1668 = vpop.f32.mrf.mxu0
    %v1669 = vadd.f32 %v1655, %v1668
    %v1670 = vpop.f32.mrf.mxu0
    %v1671 = vadd.f32 %v1657, %v1670
    %1672 = vdwg.mxu0
    %1673 = vmatpush.bf16.msra.mxu0 0
    %1674 = vmatpush.bf16.msra.mxu0 0
    %1675 = vmatpush.bf16.msra.mxu0 0
    %1676 = vmatpush.bf16.msra.mxu0 0
    %1677 = vmatpush.bf16.msra.mxu0 %v1561
    %1678 = vmatpush.bf16.msra.mxu0 %v1557
    %1679 = vmatpush.bf16.msra.mxu0 %v1553
    %1680 = vmatpush.bf16.msra.mxu0 %v1549
    %1681 = vmatmul.bf16.gmra.mxu0 %v986
    %v1682 = vpop.f32.mrf.mxu0
    %v1683 = vadd.f32 %v1669, %v1682
    %v1684 = vpop.f32.mrf.mxu0
    %v1685 = vadd.f32 %v1671, %v1684
    %1686 = vdwg.mxu0
    %1687 = vmatpush.bf16.msra.mxu0 %v1514
    %1688 = vmatpush.bf16.msra.mxu0 %v1510
    %1689 = vmatpush.bf16.msra.mxu0 %v1506
    %1690 = vmatpush.bf16.msra.mxu0 %v1502
    %1691 = vmatpush.bf16.msra.mxu0 %v1498
    %1692 = vmatpush.bf16.msra.mxu0 %v1494
    %1693 = vmatpush.bf16.msra.mxu0 %v1490
    %1694 = vmatpush.bf16.msra.mxu0 %v1486
    %1695 = vmatmul.bf16.gmra.mxu0 %v501
    %v1696 = vpop.f32.mrf.mxu0
    %v1697 = vadd.f32 0.0, %v1696
    %v1698 = vpop.f32.mrf.mxu0
    %v1699 = vadd.f32 0.0, %v1698
    %1700 = vdwg.mxu0
    %1701 = vmatpush.bf16.msra.mxu0 %v1546
    %1702 = vmatpush.bf16.msra.mxu0 %v1542
    %1703 = vmatpush.bf16.msra.mxu0 %v1538
    %1704 = vmatpush.bf16.msra.mxu0 %v1534
    %1705 = vmatpush.bf16.msra.mxu0 %v1530
    %1706 = vmatpush.bf16.msra.mxu0 %v1526
    %1707 = vmatpush.bf16.msra.mxu0 %v1522
    %1708 = vmatpush.bf16.msra.mxu0 %v1518
    %1709 = vmatmul.bf16.gmra.mxu0 %v502
    %v1710 = vpop.f32.mrf.mxu0
    %v1711 = vadd.f32 %v1697, %v1710
    %v1712 = vpop.f32.mrf.mxu0
    %v1713 = vadd.f32 %v1699, %v1712
    %1714 = vdwg.mxu0
    %1715 = vmatpush.bf16.msra.mxu0 0
    %1716 = vmatpush.bf16.msra.mxu0 0
    %1717 = vmatpush.bf16.msra.mxu0 0
    %1718 = vmatpush.bf16.msra.mxu0 0
    %1719 = vmatpush.bf16.msra.mxu0 %v1562
    %1720 = vmatpush.bf16.msra.mxu0 %v1558
    %1721 = vmatpush.bf16.msra.mxu0 %v1554
    %1722 = vmatpush.bf16.msra.mxu0 %v1550
    %1723 = vmatmul.bf16.gmra.mxu0 %v986
    %v1724 = vpop.f32.mrf.mxu0
    %v1725 = vadd.f32 %v1711, %v1724
    %v1726 = vpop.f32.mrf.mxu0
    %v1727 = vadd.f32 %v1713, %v1726
    %1728 = vdwg.mxu0
    %1729 = vmatpush.bf16.msra.mxu0 %v1515
    %1730 = vmatpush.bf16.msra.mxu0 %v1511
    %1731 = vmatpush.bf16.msra.mxu0 %v1507
    %1732 = vmatpush.bf16.msra.mxu0 %v1503
    %1733 = vmatpush.bf16.msra.mxu0 %v1499
    %1734 = vmatpush.bf16.msra.mxu0 %v1495
    %1735 = vmatpush.bf16.msra.mxu0 %v1491
    %1736 = vmatpush.bf16.msra.mxu0 %v1487
    %1737 = vmatmul.bf16.gmra.mxu0 %v501
    %v1738 = vpop.f32.mrf.mxu0
    %v1739 = vadd.f32 0.0, %v1738
    %v1740 = vpop.f32.mrf.mxu0
    %v1741 = vadd.f32 0.0, %v1740
    %1742 = vdwg.mxu0
    %1743 = vmatpush.bf16.msra.mxu0 %v1547
    %1744 = vmatpush.bf16.msra.mxu0 %v1543
    %1745 = vmatpush.bf16.msra.mxu0 %v1539
    %1746 = vmatpush.bf16.msra.mxu0 %v1535
    %1747 = vmatpush.bf16.msra.mxu0 %v1531
    %1748 = vmatpush.bf16.msra.mxu0 %v1527
    %1749 = vmatpush.bf16.msra.mxu0 %v1523
    %1750 = vmatpush.bf16.msra.mxu0 %v1519
    %1751 = vmatmul.bf16.gmra.mxu0 %v502
    %v1752 = vpop.f32.mrf.mxu0
    %v1753 = vadd.f32 %v1739, %v1752
    %v1754 = vpop.f32.mrf.mxu0
    %v1755 = vadd.f32 %v1741, %v1754
    %1756 = vdwg.mxu0
    %1757 = vmatpush.bf16.msra.mxu0 0
    %1758 = vmatpush.bf16.msra.mxu0 0
    %1759 = vmatpush.bf16.msra.mxu0 0
    %1760 = vmatpush.bf16.msra.mxu0 0
    %1761 = vmatpush.bf16.msra.mxu0 %v1563
    %1762 = vmatpush.bf16.msra.mxu0 %v1559
    %1763 = vmatpush.bf16.msra.mxu0 %v1555
    %1764 = vmatpush.bf16.msra.mxu0 %v1551
    %1765 = vmatmul.bf16.gmra.mxu0 %v986
    %v1766 = vpop.f32.mrf.mxu0
    %v1767 = vadd.f32 %v1753, %v1766
    %v1768 = vpop.f32.mrf.mxu0
    %v1769 = vadd.f32 %v1755, %v1768
    %1770 = vdwg.mxu0
    %1771 = vmatpush.bf16.msra.mxu0 %v1516
    %1772 = vmatpush.bf16.msra.mxu0 %v1512
    %1773 = vmatpush.bf16.msra.mxu0 %v1508
    %1774 = vmatpush.bf16.msra.mxu0 %v1504
    %1775 = vmatpush.bf16.msra.mxu0 %v1500
    %1776 = vmatpush.bf16.msra.mxu0 %v1496
    %1777 = vmatpush.bf16.msra.mxu0 %v1492
    %1778 = vmatpush.bf16.msra.mxu0 %v1488
    %1779 = vmatmul.bf16.gmra.mxu0 %v501
    %v1780 = vpop.f32.mrf.mxu0
    %v1781 = vadd.f32 0.0, %v1780
    %v1782 = vpop.f32.mrf.mxu0
    %v1783 = vadd.f32 0.0, %v1782
    %1784 = vdwg.mxu0
    %1785 = vmatpush.bf16.msra.mxu0 %v1548
    %1786 = vmatpush.bf16.msra.mxu0 %v1544
    %1787 = vmatpush.bf16.msra.mxu0 %v1540
    %1788 = vmatpush.bf16.msra.mxu0 %v1536
    %1789 = vmatpush.bf16.msra.mxu0 %v1532
    %1790 = vmatpush.bf16.msra.mxu0 %v1528
    %1791 = vmatpush.bf16.msra.mxu0 %v1524
    %1792 = vmatpush.bf16.msra.mxu0 %v1520
    %1793 = vmatmul.bf16.gmra.mxu0 %v502
    %v1794 = vpop.f32.mrf.mxu0
    %v1795 = vadd.f32 %v1781, %v1794
    %v1796 = vpop.f32.mrf.mxu0
    %v1797 = vadd.f32 %v1783, %v1796
    %1798 = vdwg.mxu0
    %1799 = vmatpush.bf16.msra.mxu0 0
    %1800 = vmatpush.bf16.msra.mxu0 0
    %1801 = vmatpush.bf16.msra.mxu0 0
    %1802 = vmatpush.bf16.msra.mxu0 0
    %1803 = vmatpush.bf16.msra.mxu0 %v1564
    %1804 = vmatpush.bf16.msra.mxu0 %v1560
    %1805 = vmatpush.bf16.msra.mxu0 %v1556
    %1806 = vmatpush.bf16.msra.mxu0 %v1552
    %1807 = vmatmul.bf16.gmra.mxu0 %v986
    %v1808 = vpop.f32.mrf.mxu0
    %v1809 = vadd.f32 %v1795, %v1808
    %v1810 = vpop.f32.mrf.mxu0
    %v1811 = vadd.f32 %v1797, %v1810
    %1812 = vdwg.mxu0
    %1813 = vst [vmem:[%s8] sm:$0xff] %v1683
    %1814 = vst [vmem:[%s8 + $0x8] sm:$0xff] %v1725
    %1815 = vst [vmem:[%s8 + $0x10] sm:$0xff] %v1767
    %1816 = vst.msk [vmem:[%s8 + $0x18] sm:$0xff] %vm1159, %v1809
    %1817 = vst [vmem:[%s8 + $0x20] sm:$0xff] %v1685
    %1818 = vst [vmem:[%s8 + $0x28] sm:$0xff] %v1727
    %1819 = vst [vmem:[%s8 + $0x30] sm:$0xff] %v1769
    %1820 = vst.msk [vmem:[%s8 + $0x38] sm:$0xff] %vm1159, %v1811
    // Predicated region
    $region46: #{voicefixer_forward.9} parent=1 // pred_check
      _
    $region47: #{voicefixer_forward.9} parent=1 // pred_check_branch
      %1822 = sbr.rel (0) target = $region49
    $region48: #{voicefixer_forward.9} parent=1 // pred_region
      _
    $region49: #{voicefixer_forward.9} parent=1 // pred_fallthru
      _
    // Predicated region
    $region50: #{voicefixer_forward.9} parent=1 // pred_check
      _
    $region51: #{voicefixer_forward.9} parent=1 // pred_check_branch
      %1824 = sbr.rel (0) target = $region53
    $region52: #{voicefixer_forward.9} parent=1 // pred_region
      _
    $region53: #{voicefixer_forward.9} parent=1 // pred_fallthru
      _
    // Predicated region
    $region54: #{voicefixer_forward.9} parent=1 // pred_check
      _
    $region55: #{voicefixer_forward.9} parent=1 // pred_check_branch
      %1826 = sbr.rel (0) target = $region57
    $region56: #{voicefixer_forward.9} parent=1 // pred_region
      _
    $region57: #{voicefixer_forward.9} parent=1 // pred_fallthru
      _
    // Predicated region
    $region58: #{voicefixer_forward.9} parent=1 // pred_check
      _
    $region59: #{voicefixer_forward.9} parent=1 // pred_check_branch
      %1828 = sbr.rel (0) target = $region61
    $region60: #{voicefixer_forward.9} parent=1 // pred_region
      _
    $region61: #{voicefixer_forward.9} parent=1 // pred_fallthru
      _
    %1829 = vsyncpa [#allocation3], 1
    %1830 = vsyncpa [#allocation5], 1
    %1831 = vsyncpa [#allocation8], 1

// kernel: voicefixer_forward.17
$region0: #{voicefixer_forward.17}
  #allocation0 [shape = 'u32[]', space=smem, size = 0x4, offset = 0x4, fixed_abs, tag = 'smem constant byte address 0x4 - core index']
  #allocation1 [shape = 'u32[72,128]{1,0:T(1,128)}', space=vmem, size = 0x9000, scoped, tag = 'internal scratch']
  %s0 = inlined_call_operand.vmem [shape: f32[16,160], index: 0, kind: input, shape index: {}]
  %s1 = inlined_call_operand.vmem [shape: f32[16,160], index: 1, kind: input, shape index: {}]
  %s2 = inlined_call_operand.vmem [shape: f32[16,80], index: 2, kind: input, shape index: {}]
  %s3 = inlined_call_operand.vmem [shape: bf16[160,320], index: 3, kind: input, shape index: {}]
  %s4 = inlined_call_operand.hbm [shape: bf16[160,320], index: 4, kind: input, shape index: {}]
  %s5 = inlined_call_operand.vmem [shape: f32[1,320], index: 5, kind: input, shape index: {}]
  %s6 = inlined_call_operand.vmem [shape: bf16[320,80], index: 6, kind: input, shape index: {}]
  %s7 = inlined_call_operand.vmem [shape: f32[1,80], index: 7, kind: input, shape index: {}]
  %s8 = inlined_call_operand.vmem [shape: f32[16,80], index: 8, kind: output, shape index: {0}]
  %s9 = inlined_call_operand.vmem [shape: f32[16,80], index: 9, kind: output, shape index: {1}]
  %s10 = inlined_call_operand.hbm [shape: f32[16,80], index: 10, kind: output, shape index: {2}]
  %11 = xla_tuple %s8, %s9, %s10
  %s12 = sld [smem:[#allocation0]]
  $region62: #{voicefixer_forward.17} parent=0
    _
  %s14 = ssub.s32 1, %s12
  %s15 = scalar_select 0, %s14, %s12
  $region1: #{voicefixer_forward.17} parent=0
    #allocation2 [shape = 'u8[122880]{0}', space=vmem, size = 0x1e000, scoped, tag = 'input window, operand 4, single buffered']
    #allocation3 [shape = 's32[1]{0}', space=sflag, size = 0x4, scoped, tag = 'scoped memory for voicefixer_forward.17']
    #allocation4 [shape = 's32[1]{0}', space=sflag, size = 0x4, scoped, tag = 'scoped memory for voicefixer_forward.17']
    #allocation5 [shape = 'u8[8192]{0}', space=vmem, size = 0x2000, scoped, tag = 'output window, operand 2, single buffered']
    %16 = vsyncpa [#allocation3], 0
    %17 = vsyncpa [#allocation4], 0
    // Predicated region
    $region2: #{voicefixer_forward.17} parent=1 // pred_check
      _
    $region3: #{voicefixer_forward.17} parent=1 // pred_check_branch
      %19 = sbr.rel (0) target = $region5
    $region4: #{voicefixer_forward.17} parent=1 // pred_region
      _
    $region5: #{voicefixer_forward.17} parent=1 // pred_fallthru
      _
    // Predicated region
    $region6: #{voicefixer_forward.17} parent=1 // pred_check
      _
    $region7: #{voicefixer_forward.17} parent=1 // pred_check_branch
      %21 = sbr.rel (0) target = $region9
    $region8: #{voicefixer_forward.17} parent=1 // pred_region
      _
    $region9: #{voicefixer_forward.17} parent=1 // pred_fallthru
      _
    // Predicated region
    $region10: #{voicefixer_forward.17} parent=1 // pred_check
      _
    $region11: #{voicefixer_forward.17} parent=1 // pred_check_branch
      %23 = sbr.rel (0) target = $region13
    $region12: #{voicefixer_forward.17} parent=1 // pred_region
      _
    $region13: #{voicefixer_forward.17} parent=1 // pred_fallthru
      _
    // Predicated region
    $region14: #{voicefixer_forward.17} parent=1 // pred_check
      _
    $region15: #{voicefixer_forward.17} parent=1 // pred_check_branch
      %25 = sbr.rel (0) target = $region17
    $region16: #{voicefixer_forward.17} parent=1 // pred_region
      _
    $region17: #{voicefixer_forward.17} parent=1 // pred_fallthru
      _
    // Predicated region
    $region18: #{voicefixer_forward.17} parent=1 // pred_check
      _
    $region19: #{voicefixer_forward.17} parent=1 // pred_check_branch
      %27 = sbr.rel (0) target = $region21
    $region20: #{voicefixer_forward.17} parent=1 // pred_region
      %29 = vsyncadd [#allocation3], 0
      %s30 = sshll.u32 %s4, 4
      %s31 = int_to_ptr.hbm [resolvable:$true] %s30
      %s32 = sshll.u32 [#allocation2], 4
      %s33 = int_to_ptr.vmem [resolvable:$true] %s32
      %38 = dma.hbm_to_vmem [thread:$0]  %s31, 3840, %s33, [#allocation3], 192, 192, 12
    $region21: #{voicefixer_forward.17} parent=1 // pred_fallthru
      _
    // Predicated region
    $region22: #{voicefixer_forward.17} parent=1 // pred_check
      _
    $region23: #{voicefixer_forward.17} parent=1 // pred_check_branch
      %40 = sbr.rel (0) target = $region25
    $region24: #{voicefixer_forward.17} parent=1 // pred_region
      _
    $region25: #{voicefixer_forward.17} parent=1 // pred_fallthru
      _
    // Predicated region
    $region26: #{voicefixer_forward.17} parent=1 // pred_check
      _
    $region27: #{voicefixer_forward.17} parent=1 // pred_check_branch
      %42 = sbr.rel (0) target = $region29
    $region28: #{voicefixer_forward.17} parent=1 // pred_region
      _
    $region29: #{voicefixer_forward.17} parent=1 // pred_fallthru
      _
    // Predicated region
    $region30: #{voicefixer_forward.17} parent=1 // pred_check
      _
    $region31: #{voicefixer_forward.17} parent=1 // pred_check_branch
      %44 = sbr.rel (0) target = $region33
    $region32: #{voicefixer_forward.17} parent=1 // pred_region
      _
    $region33: #{voicefixer_forward.17} parent=1 // pred_fallthru
      _
    // Predicated region
    $region34: #{voicefixer_forward.17} parent=1 // pred_check
      _
    $region35: #{voicefixer_forward.17} parent=1 // pred_check_branch
      %46 = sbr.rel (0) target = $region37
    $region36: #{voicefixer_forward.17} parent=1 // pred_region
      %48 = dma.done [#allocation3], 3840
    $region37: #{voicefixer_forward.17} parent=1 // pred_fallthru
      _
    %v50 = vld [vmem:[%s0] sm:$0xff]
    %v51 = vld [vmem:[%s0 + $0x8] sm:$0xff]
    %v52 = vld [vmem:[%s0 + $0x10] sm:$0xff]
    %v53 = vld [vmem:[%s0 + $0x18] sm:$0xff]
    %v54 = vmax.f32 %v50, 0.0
    %v55 = vmax.f32 %v51, 0.0
    %v56 = vmax.f32 %v52, 0.0
    %v57 = vmax.f32 %v53, 0.0
    %v58 = vpack.c.bf16 %v56, %v54
    %v59 = vpack.c.bf16 %v57, %v55
    %v60 = vld [vmem:[%s1] sm:$0xff]
    %v61 = vld [vmem:[%s1 + $0x8] sm:$0xff]
    %v62 = vld [vmem:[%s1 + $0x10] sm:$0xff]
    %v63 = vld [vmem:[%s1 + $0x18] sm:$0xff]
    %v64 = vmax.f32 %v60, 0.0
    %v65 = vmax.f32 %v61, 0.0
    %v66 = vmax.f32 %v62, 0.0
    %v67 = vmax.f32 %v63, 0.0
    %v68 = vpack.c.bf16 %v66, %v64
    %v69 = vpack.c.bf16 %v67, %v65
    %v70 = vld [vmem:[%s3] sm:$0xff]
    %v71 = vld [vmem:[%s3 + $0x8] sm:$0xf]
    %v72 = vld [vmem:[%s3 + $0xc] sm:$0xff]
    %v73 = vld [vmem:[%s3 + $0x14] sm:$0xf]
    %v74 = vld [vmem:[%s3 + $0x18] sm:$0xff]
    %v75 = vld [vmem:[%s3 + $0x20] sm:$0xf]
    %v76 = vld [vmem:[%s3 + $0x24] sm:$0xff]
    %v77 = vld [vmem:[%s3 + $0x2c] sm:$0xf]
    %v78 = vld [vmem:[%s3 + $0x30] sm:$0xff]
    %v79 = vld [vmem:[%s3 + $0x38] sm:$0xf]
    %v80 = vld [vmem:[%s3 + $0x3c] sm:$0xff]
    %v81 = vld [vmem:[%s3 + $0x44] sm:$0xf]
    %v82 = vld [vmem:[%s3 + $0x48] sm:$0xff]
    %v83 = vld [vmem:[%s3 + $0x50] sm:$0xf]
    %v84 = vld [vmem:[%s3 + $0x54] sm:$0xff]
    %v85 = vld [vmem:[%s3 + $0x5c] sm:$0xf]
    %v86 = vld [vmem:[%s3 + $0x60] sm:$0xff]
    %v87 = vld [vmem:[%s3 + $0x68] sm:$0xf]
    %v88 = vld [vmem:[%s3 + $0x6c] sm:$0xff]
    %v89 = vld [vmem:[%s3 + $0x74] sm:$0xf]
    %v90 = vld [vmem:[%s3 + $0x78] sm:$0xff]
    %v91 = vld [vmem:[%s3 + $0x80] sm:$0xf]
    %v92 = vld [vmem:[%s3 + $0x84] sm:$0xff]
    %v93 = vld [vmem:[%s3 + $0x8c] sm:$0xf]
    %v94 = vld [vmem:[%s3 + $0x90] sm:$0xff]
    %v95 = vld [vmem:[%s3 + $0x98] sm:$0xf]
    %v96 = vld [vmem:[%s3 + $0x9c] sm:$0xff]
    %v97 = vld [vmem:[%s3 + $0xa4] sm:$0xf]
    %v98 = vld [vmem:[%s3 + $0xa8] sm:$0xff]
    %v99 = vld [vmem:[%s3 + $0xb0] sm:$0xf]
    %v100 = vld [vmem:[%s3 + $0xb4] sm:$0xff]
    %v101 = vld [vmem:[%s3 + $0xbc] sm:$0xf]
    %v102 = vld [vmem:[%s3 + $0xc0] sm:$0xff]
    %v103 = vld [vmem:[%s3 + $0xc8] sm:$0xf]
    %v104 = vld [vmem:[%s3 + $0xcc] sm:$0xff]
    %v105 = vld [vmem:[%s3 + $0xd4] sm:$0xf]
    %v106 = vld [vmem:[%s3 + $0xd8] sm:$0xff]
    %v107 = vld [vmem:[%s3 + $0xe0] sm:$0xf]
    %v108 = vld [vmem:[%s3 + $0xe4] sm:$0xff]
    %v109 = vld [vmem:[%s3 + $0xec] sm:$0xf]
    %v110 = vld [vmem:[#allocation2] sm:$0xff]
    %v111 = vld [vmem:[#allocation2 + $0x8] sm:$0xf]
    %v112 = vld [vmem:[#allocation2 + $0xc] sm:$0xff]
    %v113 = vld [vmem:[#allocation2 + $0x14] sm:$0xf]
    %v114 = vld [vmem:[#allocation2 + $0x18] sm:$0xff]
    %v115 = vld [vmem:[#allocation2 + $0x20] sm:$0xf]
    %v116 = vld [vmem:[#allocation2 + $0x24] sm:$0xff]
    %v117 = vld [vmem:[#allocation2 + $0x2c] sm:$0xf]
    %v118 = vld [vmem:[#allocation2 + $0x30] sm:$0xff]
    %v119 = vld [vmem:[#allocation2 + $0x38] sm:$0xf]
    %v120 = vld [vmem:[#allocation2 + $0x3c] sm:$0xff]
    %v121 = vld [vmem:[#allocation2 + $0x44] sm:$0xf]
    %v122 = vld [vmem:[#allocation2 + $0x48] sm:$0xff]
    %v123 = vld [vmem:[#allocation2 + $0x50] sm:$0xf]
    %v124 = vld [vmem:[#allocation2 + $0x54] sm:$0xff]
    %v125 = vld [vmem:[#allocation2 + $0x5c] sm:$0xf]
    %v126 = vld [vmem:[#allocation2 + $0x60] sm:$0xff]
    %v127 = vld [vmem:[#allocation2 + $0x68] sm:$0xf]
    %v128 = vld [vmem:[#allocation2 + $0x6c] sm:$0xff]
    %v129 = vld [vmem:[#allocation2 + $0x74] sm:$0xf]
    %v130 = vld [vmem:[#allocation2 + $0x78] sm:$0xff]
    %v131 = vld [vmem:[#allocation2 + $0x80] sm:$0xf]
    %v132 = vld [vmem:[#allocation2 + $0x84] sm:$0xff]
    %v133 = vld [vmem:[#allocation2 + $0x8c] sm:$0xf]
    %v134 = vld [vmem:[#allocation2 + $0x90] sm:$0xff]
    %v135 = vld [vmem:[#allocation2 + $0x98] sm:$0xf]
    %v136 = vld [vmem:[#allocation2 + $0x9c] sm:$0xff]
    %v137 = vld [vmem:[#allocation2 + $0xa4] sm:$0xf]
    %v138 = vld [vmem:[#allocation2 + $0xa8] sm:$0xff]
    %v139 = vld [vmem:[#allocation2 + $0xb0] sm:$0xf]
    %v140 = vld [vmem:[#allocation2 + $0xb4] sm:$0xff]
    %v141 = vld [vmem:[#allocation2 + $0xbc] sm:$0xf]
    %v142 = vld [vmem:[#allocation2 + $0xc0] sm:$0xff]
    %v143 = vld [vmem:[#allocation2 + $0xc8] sm:$0xf]
    %v144 = vld [vmem:[#allocation2 + $0xcc] sm:$0xff]
    %v145 = vld [vmem:[#allocation2 + $0xd4] sm:$0xf]
    %v146 = vld [vmem:[#allocation2 + $0xd8] sm:$0xff]
    %v147 = vld [vmem:[#allocation2 + $0xe0] sm:$0xf]
    %v148 = vld [vmem:[#allocation2 + $0xe4] sm:$0xff]
    %v149 = vld [vmem:[#allocation2 + $0xec] sm:$0xf]
    %v190 = vunpack.c.l.b16 %v110
    %v191 = vunpack.c.h.b16 %v110
    %v192 = vunpack.c.l.b16 %v111
    %v193 = vunpack.c.l.b16 %v112
    %v194 = vunpack.c.h.b16 %v112
    %v195 = vunpack.c.l.b16 %v113
    %v196 = vunpack.c.l.b16 %v114
    %v197 = vunpack.c.h.b16 %v114
    %v198 = vunpack.c.l.b16 %v115
    %v199 = vunpack.c.l.b16 %v116
    %v200 = vunpack.c.h.b16 %v116
    %v201 = vunpack.c.l.b16 %v117
    %v202 = vunpack.c.l.b16 %v118
    %v203 = vunpack.c.h.b16 %v118
    %v204 = vunpack.c.l.b16 %v119
    %v205 = vunpack.c.l.b16 %v120
    %v206 = vunpack.c.h.b16 %v120
    %v207 = vunpack.c.l.b16 %v121
    %v208 = vunpack.c.l.b16 %v122
    %v209 = vunpack.c.h.b16 %v122
    %v210 = vunpack.c.l.b16 %v123
    %v211 = vunpack.c.l.b16 %v124
    %v212 = vunpack.c.h.b16 %v124
    %v213 = vunpack.c.l.b16 %v125
    %v214 = vunpack.c.l.b16 %v126
    %v215 = vunpack.c.h.b16 %v126
    %v216 = vunpack.c.l.b16 %v127
    %v217 = vunpack.c.l.b16 %v128
    %v218 = vunpack.c.h.b16 %v128
    %v219 = vunpack.c.l.b16 %v129
    %v220 = vunpack.c.l.b16 %v130
    %v221 = vunpack.c.h.b16 %v130
    %v222 = vunpack.c.l.b16 %v131
    %v223 = vunpack.c.l.b16 %v132
    %v224 = vunpack.c.h.b16 %v132
    %v225 = vunpack.c.l.b16 %v133
    %v226 = vunpack.c.l.b16 %v134
    %v227 = vunpack.c.h.b16 %v134
    %v228 = vunpack.c.l.b16 %v135
    %v229 = vunpack.c.l.b16 %v136
    %v230 = vunpack.c.h.b16 %v136
    %v231 = vunpack.c.l.b16 %v137
    %v232 = vunpack.c.l.b16 %v138
    %v233 = vunpack.c.h.b16 %v138
    %v234 = vunpack.c.l.b16 %v139
    %v235 = vunpack.c.l.b16 %v140
    %v236 = vunpack.c.h.b16 %v140
    %v237 = vunpack.c.l.b16 %v141
    %v238 = vunpack.c.l.b16 %v142
    %v239 = vunpack.c.h.b16 %v142
    %v240 = vunpack.c.l.b16 %v143
    %v241 = vunpack.c.l.b16 %v144
    %v242 = vunpack.c.h.b16 %v144
    %v243 = vunpack.c.l.b16 %v145
    %v244 = vunpack.c.l.b16 %v146
    %v245 = vunpack.c.h.b16 %v146
    %v246 = vunpack.c.l.b16 %v147
    %v247 = vunpack.c.l.b16 %v148
    %v248 = vunpack.c.h.b16 %v148
    %v249 = vunpack.c.l.b16 %v149
    %v250 = vpack.c.b16 %v193, %v190
    %v251 = vpack.c.b16 %v194, %v191
    %v252 = vpack.c.b16 %v195, %v192
    %v253 = vpack.c.b16 %v199, %v196
    %v254 = vpack.c.b16 %v200, %v197
    %v255 = vpack.c.b16 %v201, %v198
    %v256 = vpack.c.b16 %v205, %v202
    %v257 = vpack.c.b16 %v206, %v203
    %v258 = vpack.c.b16 %v207, %v204
    %v259 = vpack.c.b16 %v211, %v208
    %v260 = vpack.c.b16 %v212, %v209
    %v261 = vpack.c.b16 %v213, %v210
    %v262 = vpack.c.b16 %v217, %v214
    %v263 = vpack.c.b16 %v218, %v215
    %v264 = vpack.c.b16 %v219, %v216
    %v265 = vpack.c.b16 %v223, %v220
    %v266 = vpack.c.b16 %v224, %v221
    %v267 = vpack.c.b16 %v225, %v222
    %v268 = vpack.c.b16 %v229, %v226
    %v269 = vpack.c.b16 %v230, %v227
    %v270 = vpack.c.b16 %v231, %v228
    %v271 = vpack.c.b16 %v235, %v232
    %v272 = vpack.c.b16 %v236, %v233
    %v273 = vpack.c.b16 %v237, %v234
    %v274 = vpack.c.b16 %v241, %v238
    %v275 = vpack.c.b16 %v242, %v239
    %v276 = vpack.c.b16 %v243, %v240
    %v277 = vpack.c.b16 %v247, %v244
    %v278 = vpack.c.b16 %v248, %v245
    %v279 = vpack.c.b16 %v249, %v246
    %vm310 = vcmask 261120
    %v312 = vsel %vm310, %v69, 0
    %314 = vmatpush.bf16.msra.mxu0 %v271
    %315 = vmatpush.bf16.msra.mxu0 %v268
    %316 = vmatpush.bf16.msra.mxu0 %v265
    %317 = vmatpush.bf16.msra.mxu0 %v262
    %318 = vmatpush.bf16.msra.mxu0 %v259
    %319 = vmatpush.bf16.msra.mxu0 %v256
    %320 = vmatpush.bf16.msra.mxu0 %v253
    %321 = vmatpush.bf16.msra.mxu0 %v250
    %322 = vmatmul.bf16.gmra.mxu0 %v68
    %v323 = vpop.f32.mrf.mxu0
    %v324 = vadd.f32 0.0, %v323
    %v325 = vpop.f32.mrf.mxu0
    %v326 = vadd.f32 0.0, %v325
    %327 = vdwg.mxu0
    %328 = vmatpush.bf16.msra.mxu0 0
    %329 = vmatpush.bf16.msra.mxu0 0
    %330 = vmatpush.bf16.msra.mxu0 0
    %331 = vmatpush.bf16.msra.mxu0 0
    %332 = vmatpush.bf16.msra.mxu0 0
    %333 = vmatpush.bf16.msra.mxu0 0
    %334 = vmatpush.bf16.msra.mxu0 %v277
    %335 = vmatpush.bf16.msra.mxu0 %v274
    %336 = vmatmul.bf16.gmra.mxu0 %v312
    %v337 = vpop.f32.mrf.mxu0
    %v338 = vadd.f32 %v324, %v337
    %v339 = vpop.f32.mrf.mxu0
    %v340 = vadd.f32 %v326, %v339
    %341 = vdwg.mxu0
    %342 = vmatpush.bf16.msra.mxu0 %v272
    %343 = vmatpush.bf16.msra.mxu0 %v269
    %344 = vmatpush.bf16.msra.mxu0 %v266
    %345 = vmatpush.bf16.msra.mxu0 %v263
    %346 = vmatpush.bf16.msra.mxu0 %v260
    %347 = vmatpush.bf16.msra.mxu0 %v257
    %348 = vmatpush.bf16.msra.mxu0 %v254
    %349 = vmatpush.bf16.msra.mxu0 %v251
    %350 = vmatmul.bf16.gmra.mxu0 %v68
    %v351 = vpop.f32.mrf.mxu0
    %v352 = vadd.f32 0.0, %v351
    %v353 = vpop.f32.mrf.mxu0
    %v354 = vadd.f32 0.0, %v353
    %355 = vdwg.mxu0
    %356 = vmatpush.bf16.msra.mxu0 0
    %357 = vmatpush.bf16.msra.mxu0 0
    %358 = vmatpush.bf16.msra.mxu0 0
    %359 = vmatpush.bf16.msra.mxu0 0
    %360 = vmatpush.bf16.msra.mxu0 0
    %361 = vmatpush.bf16.msra.mxu0 0
    %362 = vmatpush.bf16.msra.mxu0 %v278
    %363 = vmatpush.bf16.msra.mxu0 %v275
    %364 = vmatmul.bf16.gmra.mxu0 %v312
    %v365 = vpop.f32.mrf.mxu0
    %v366 = vadd.f32 %v352, %v365
    %v367 = vpop.f32.mrf.mxu0
    %v368 = vadd.f32 %v354, %v367
    %369 = vdwg.mxu0
    %370 = vmatpush.bf16.msra.mxu0 %v273
    %371 = vmatpush.bf16.msra.mxu0 %v270
    %372 = vmatpush.bf16.msra.mxu0 %v267
    %373 = vmatpush.bf16.msra.mxu0 %v264
    %374 = vmatpush.bf16.msra.mxu0 %v261
    %375 = vmatpush.bf16.msra.mxu0 %v258
    %376 = vmatpush.bf16.msra.mxu0 %v255
    %377 = vmatpush.bf16.msra.mxu0 %v252
    %378 = vmatmul.bf16.gmra.mxu0 %v68
    %v379 = vpop.f32.mrf.mxu0
    %v380 = vadd.f32 0.0, %v379
    %v381 = vpop.f32.mrf.mxu0
    %v382 = vadd.f32 0.0, %v381
    %383 = vdwg.mxu0
    %384 = vmatpush.bf16.msra.mxu0 0
    %385 = vmatpush.bf16.msra.mxu0 0
    %386 = vmatpush.bf16.msra.mxu0 0
    %387 = vmatpush.bf16.msra.mxu0 0
    %388 = vmatpush.bf16.msra.mxu0 0
    %389 = vmatpush.bf16.msra.mxu0 0
    %390 = vmatpush.bf16.msra.mxu0 %v279
    %391 = vmatpush.bf16.msra.mxu0 %v276
    %392 = vmatmul.bf16.gmra.mxu0 %v312
    %v393 = vpop.f32.mrf.mxu0
    %v394 = vadd.f32 %v380, %v393
    %v395 = vpop.f32.mrf.mxu0
    %v396 = vadd.f32 %v382, %v395
    %397 = vdwg.mxu0
    %v438 = vunpack.c.l.b16 %v70
    %v439 = vunpack.c.h.b16 %v70
    %v440 = vunpack.c.l.b16 %v71
    %v441 = vunpack.c.l.b16 %v72
    %v442 = vunpack.c.h.b16 %v72
    %v443 = vunpack.c.l.b16 %v73
    %v444 = vunpack.c.l.b16 %v74
    %v445 = vunpack.c.h.b16 %v74
    %v446 = vunpack.c.l.b16 %v75
    %v447 = vunpack.c.l.b16 %v76
    %v448 = vunpack.c.h.b16 %v76
    %v449 = vunpack.c.l.b16 %v77
    %v450 = vunpack.c.l.b16 %v78
    %v451 = vunpack.c.h.b16 %v78
    %v452 = vunpack.c.l.b16 %v79
    %v453 = vunpack.c.l.b16 %v80
    %v454 = vunpack.c.h.b16 %v80
    %v455 = vunpack.c.l.b16 %v81
    %v456 = vunpack.c.l.b16 %v82
    %v457 = vunpack.c.h.b16 %v82
    %v458 = vunpack.c.l.b16 %v83
    %v459 = vunpack.c.l.b16 %v84
    %v460 = vunpack.c.h.b16 %v84
    %v461 = vunpack.c.l.b16 %v85
    %v462 = vunpack.c.l.b16 %v86
    %v463 = vunpack.c.h.b16 %v86
    %v464 = vunpack.c.l.b16 %v87
    %v465 = vunpack.c.l.b16 %v88
    %v466 = vunpack.c.h.b16 %v88
    %v467 = vunpack.c.l.b16 %v89
    %v468 = vunpack.c.l.b16 %v90
    %v469 = vunpack.c.h.b16 %v90
    %v470 = vunpack.c.l.b16 %v91
    %v471 = vunpack.c.l.b16 %v92
    %v472 = vunpack.c.h.b16 %v92
    %v473 = vunpack.c.l.b16 %v93
    %v474 = vunpack.c.l.b16 %v94
    %v475 = vunpack.c.h.b16 %v94
    %v476 = vunpack.c.l.b16 %v95
    %v477 = vunpack.c.l.b16 %v96
    %v478 = vunpack.c.h.b16 %v96
    %v479 = vunpack.c.l.b16 %v97
    %v480 = vunpack.c.l.b16 %v98
    %v481 = vunpack.c.h.b16 %v98
    %v482 = vunpack.c.l.b16 %v99
    %v483 = vunpack.c.l.b16 %v100
    %v484 = vunpack.c.h.b16 %v100
    %v485 = vunpack.c.l.b16 %v101
    %v486 = vunpack.c.l.b16 %v102
    %v487 = vunpack.c.h.b16 %v102
    %v488 = vunpack.c.l.b16 %v103
    %v489 = vunpack.c.l.b16 %v104
    %v490 = vunpack.c.h.b16 %v104
    %v491 = vunpack.c.l.b16 %v105
    %v492 = vunpack.c.l.b16 %v106
    %v493 = vunpack.c.h.b16 %v106
    %v494 = vunpack.c.l.b16 %v107
    %v495 = vunpack.c.l.b16 %v108
    %v496 = vunpack.c.h.b16 %v108
    %v497 = vunpack.c.l.b16 %v109
    %v498 = vpack.c.b16 %v441, %v438
    %v499 = vpack.c.b16 %v442, %v439
    %v500 = vpack.c.b16 %v443, %v440
    %v501 = vpack.c.b16 %v447, %v444
    %v502 = vpack.c.b16 %v448, %v445
    %v503 = vpack.c.b16 %v449, %v446
    %v504 = vpack.c.b16 %v453, %v450
    %v505 = vpack.c.b16 %v454, %v451
    %v506 = vpack.c.b16 %v455, %v452
    %v507 = vpack.c.b16 %v459, %v456
    %v508 = vpack.c.b16 %v460, %v457
    %v509 = vpack.c.b16 %v461, %v458
    %v510 = vpack.c.b16 %v465, %v462
    %v511 = vpack.c.b16 %v466, %v463
    %v512 = vpack.c.b16 %v467, %v464
    %v513 = vpack.c.b16 %v471, %v468
    %v514 = vpack.c.b16 %v472, %v469
    %v515 = vpack.c.b16 %v473, %v470
    %v516 = vpack.c.b16 %v477, %v474
    %v517 = vpack.c.b16 %v478, %v475
    %v518 = vpack.c.b16 %v479, %v476
    %v519 = vpack.c.b16 %v483, %v480
    %v520 = vpack.c.b16 %v484, %v481
    %v521 = vpack.c.b16 %v485, %v482
    %v522 = vpack.c.b16 %v489, %v486
    %v523 = vpack.c.b16 %v490, %v487
    %v524 = vpack.c.b16 %v491, %v488
    %v525 = vpack.c.b16 %v495, %v492
    %v526 = vpack.c.b16 %v496, %v493
    %v527 = vpack.c.b16 %v497, %v494
    %v559 = vsel %vm310, %v59, 0
    %561 = vmatpush.bf16.msra.mxu0 %v519
    %562 = vmatpush.bf16.msra.mxu0 %v516
    %563 = vmatpush.bf16.msra.mxu0 %v513
    %564 = vmatpush.bf16.msra.mxu0 %v510
    %565 = vmatpush.bf16.msra.mxu0 %v507
    %566 = vmatpush.bf16.msra.mxu0 %v504
    %567 = vmatpush.bf16.msra.mxu0 %v501
    %568 = vmatpush.bf16.msra.mxu0 %v498
    %569 = vmatmul.bf16.gmra.mxu0 %v58
    %v570 = vpop.f32.mrf.mxu0
    %v571 = vadd.f32 %v338, %v570
    %v572 = vpop.f32.mrf.mxu0
    %v573 = vadd.f32 %v340, %v572
    %574 = vdwg.mxu0
    %575 = vmatpush.bf16.msra.mxu0 0
    %576 = vmatpush.bf16.msra.mxu0 0
    %577 = vmatpush.bf16.msra.mxu0 0
    %578 = vmatpush.bf16.msra.mxu0 0
    %579 = vmatpush.bf16.msra.mxu0 0
    %580 = vmatpush.bf16.msra.mxu0 0
    %581 = vmatpush.bf16.msra.mxu0 %v525
    %582 = vmatpush.bf16.msra.mxu0 %v522
    %583 = vmatmul.bf16.gmra.mxu0 %v559
    %v584 = vpop.f32.mrf.mxu0
    %v585 = vadd.f32 %v571, %v584
    %v586 = vpop.f32.mrf.mxu0
    %v587 = vadd.f32 %v573, %v586
    %588 = vdwg.mxu0
    %589 = vmatpush.bf16.msra.mxu0 %v520
    %590 = vmatpush.bf16.msra.mxu0 %v517
    %591 = vmatpush.bf16.msra.mxu0 %v514
    %592 = vmatpush.bf16.msra.mxu0 %v511
    %593 = vmatpush.bf16.msra.mxu0 %v508
    %594 = vmatpush.bf16.msra.mxu0 %v505
    %595 = vmatpush.bf16.msra.mxu0 %v502
    %596 = vmatpush.bf16.msra.mxu0 %v499
    %597 = vmatmul.bf16.gmra.mxu0 %v58
    %v598 = vpop.f32.mrf.mxu0
    %v599 = vadd.f32 %v366, %v598
    %v600 = vpop.f32.mrf.mxu0
    %v601 = vadd.f32 %v368, %v600
    %602 = vdwg.mxu0
    %603 = vmatpush.bf16.msra.mxu0 0
    %604 = vmatpush.bf16.msra.mxu0 0
    %605 = vmatpush.bf16.msra.mxu0 0
    %606 = vmatpush.bf16.msra.mxu0 0
    %607 = vmatpush.bf16.msra.mxu0 0
    %608 = vmatpush.bf16.msra.mxu0 0
    %609 = vmatpush.bf16.msra.mxu0 %v526
    %610 = vmatpush.bf16.msra.mxu0 %v523
    %611 = vmatmul.bf16.gmra.mxu0 %v559
    %v612 = vpop.f32.mrf.mxu0
    %v613 = vadd.f32 %v599, %v612
    %v614 = vpop.f32.mrf.mxu0
    %v615 = vadd.f32 %v601, %v614
    %616 = vdwg.mxu0
    %617 = vmatpush.bf16.msra.mxu0 %v521
    %618 = vmatpush.bf16.msra.mxu0 %v518
    %619 = vmatpush.bf16.msra.mxu0 %v515
    %620 = vmatpush.bf16.msra.mxu0 %v512
    %621 = vmatpush.bf16.msra.mxu0 %v509
    %622 = vmatpush.bf16.msra.mxu0 %v506
    %623 = vmatpush.bf16.msra.mxu0 %v503
    %624 = vmatpush.bf16.msra.mxu0 %v500
    %625 = vmatmul.bf16.gmra.mxu0 %v58
    %v626 = vpop.f32.mrf.mxu0
    %v627 = vadd.f32 %v394, %v626
    %v628 = vpop.f32.mrf.mxu0
    %v629 = vadd.f32 %v396, %v628
    %630 = vdwg.mxu0
    %631 = vmatpush.bf16.msra.mxu0 0
    %632 = vmatpush.bf16.msra.mxu0 0
    %633 = vmatpush.bf16.msra.mxu0 0
    %634 = vmatpush.bf16.msra.mxu0 0
    %635 = vmatpush.bf16.msra.mxu0 0
    %636 = vmatpush.bf16.msra.mxu0 0
    %637 = vmatpush.bf16.msra.mxu0 %v527
    %638 = vmatpush.bf16.msra.mxu0 %v524
    %639 = vmatmul.bf16.gmra.mxu0 %v559
    %v640 = vpop.f32.mrf.mxu0
    %v641 = vadd.f32 %v627, %v640
    %v642 = vpop.f32.mrf.mxu0
    %v643 = vadd.f32 %v629, %v642
    %644 = vdwg.mxu0
    %v645 = vld [vmem:[%s5] sm:$0x7]
    %v647 = vperm.slane %v645, 0
    %v648 = vperm.slane %v645, 1
    %v649 = vperm.slane %v645, 2
    %v653 = vadd.f32 %v585, %v647
    %v654 = vadd.f32 %v613, %v648
    %v655 = vadd.f32 %v641, %v649
    %v656 = vadd.f32 %v587, %v647
    %v657 = vadd.f32 %v615, %v648
    %v658 = vadd.f32 %v643, %v649
    %v659 = vmax.f32 %v653, 0.0
    %v660 = vmax.f32 %v654, 0.0
    %v661 = vmax.f32 %v655, 0.0
    %v662 = vmax.f32 %v656, 0.0
    %v663 = vmax.f32 %v657, 0.0
    %v664 = vmax.f32 %v658, 0.0
    %v665 = vpack.c.bf16 %v662, %v659
    %v666 = vpack.c.bf16 %v663, %v660
    %v667 = vpack.c.bf16 %v664, %v661
    %v668 = vld [vmem:[%s6] sm:$0xf]
    %v669 = vld [vmem:[%s6 + $0x4] sm:$0xf]
    %v670 = vld [vmem:[%s6 + $0x8] sm:$0xf]
    %v671 = vld [vmem:[%s6 + $0xc] sm:$0xf]
    %v672 = vld [vmem:[%s6 + $0x10] sm:$0xf]
    %v673 = vld [vmem:[%s6 + $0x14] sm:$0xf]
    %v674 = vld [vmem:[%s6 + $0x18] sm:$0xf]
    %v675 = vld [vmem:[%s6 + $0x1c] sm:$0xf]
    %v676 = vld [vmem:[%s6 + $0x20] sm:$0xf]
    %v677 = vld [vmem:[%s6 + $0x24] sm:$0xf]
    %v678 = vld [vmem:[%s6 + $0x28] sm:$0xf]
    %v679 = vld [vmem:[%s6 + $0x2c] sm:$0xf]
    %v680 = vld [vmem:[%s6 + $0x30] sm:$0xf]
    %v681 = vld [vmem:[%s6 + $0x34] sm:$0xf]
    %v682 = vld [vmem:[%s6 + $0x38] sm:$0xf]
    %v683 = vld [vmem:[%s6 + $0x3c] sm:$0xf]
    %v684 = vld [vmem:[%s6 + $0x40] sm:$0xf]
    %v685 = vld [vmem:[%s6 + $0x44] sm:$0xf]
    %v686 = vld [vmem:[%s6 + $0x48] sm:$0xf]
    %v687 = vld [vmem:[%s6 + $0x4c] sm:$0xf]
    %v688 = vld [vmem:[%s6 + $0x50] sm:$0xf]
    %v689 = vld [vmem:[%s6 + $0x54] sm:$0xf]
    %v690 = vld [vmem:[%s6 + $0x58] sm:$0xf]
    %v691 = vld [vmem:[%s6 + $0x5c] sm:$0xf]
    %v692 = vld [vmem:[%s6 + $0x60] sm:$0xf]
    %v693 = vld [vmem:[%s6 + $0x64] sm:$0xf]
    %v694 = vld [vmem:[%s6 + $0x68] sm:$0xf]
    %v695 = vld [vmem:[%s6 + $0x6c] sm:$0xf]
    %v696 = vld [vmem:[%s6 + $0x70] sm:$0xf]
    %v697 = vld [vmem:[%s6 + $0x74] sm:$0xf]
    %v698 = vld [vmem:[%s6 + $0x78] sm:$0xf]
    %v699 = vld [vmem:[%s6 + $0x7c] sm:$0xf]
    %v700 = vld [vmem:[%s6 + $0x80] sm:$0xf]
    %v701 = vld [vmem:[%s6 + $0x84] sm:$0xf]
    %v702 = vld [vmem:[%s6 + $0x88] sm:$0xf]
    %v703 = vld [vmem:[%s6 + $0x8c] sm:$0xf]
    %v704 = vld [vmem:[%s6 + $0x90] sm:$0xf]
    %v705 = vld [vmem:[%s6 + $0x94] sm:$0xf]
    %v706 = vld [vmem:[%s6 + $0x98] sm:$0xf]
    %v707 = vld [vmem:[%s6 + $0x9c] sm:$0xf]
    %v708 = vld [vmem:[%s7] sm:$0x1]
    %v710 = vperm.slane %v708, 0
    %v752 = vunpack.c.l.b16 %v668
    %v753 = vunpack.c.l.b16 %v669
    %v754 = vunpack.c.l.b16 %v670
    %v755 = vunpack.c.l.b16 %v671
    %v756 = vunpack.c.l.b16 %v672
    %v757 = vunpack.c.l.b16 %v673
    %v758 = vunpack.c.l.b16 %v674
    %v759 = vunpack.c.l.b16 %v675
    %v760 = vunpack.c.l.b16 %v676
    %v761 = vunpack.c.l.b16 %v677
    %v762 = vunpack.c.l.b16 %v678
    %v763 = vunpack.c.l.b16 %v679
    %v764 = vunpack.c.l.b16 %v680
    %v765 = vunpack.c.l.b16 %v681
    %v766 = vunpack.c.l.b16 %v682
    %v767 = vunpack.c.l.b16 %v683
    %v768 = vunpack.c.l.b16 %v684
    %v769 = vunpack.c.l.b16 %v685
    %v770 = vunpack.c.l.b16 %v686
    %v771 = vunpack.c.l.b16 %v687
    %v772 = vunpack.c.l.b16 %v688
    %v773 = vunpack.c.l.b16 %v689
    %v774 = vunpack.c.l.b16 %v690
    %v775 = vunpack.c.l.b16 %v691
    %v776 = vunpack.c.l.b16 %v692
    %v777 = vunpack.c.l.b16 %v693
    %v778 = vunpack.c.l.b16 %v694
    %v779 = vunpack.c.l.b16 %v695
    %v780 = vunpack.c.l.b16 %v696
    %v781 = vunpack.c.l.b16 %v697
    %v782 = vunpack.c.l.b16 %v698
    %v783 = vunpack.c.l.b16 %v699
    %v784 = vunpack.c.l.b16 %v700
    %v785 = vunpack.c.l.b16 %v701
    %v786 = vunpack.c.l.b16 %v702
    %v787 = vunpack.c.l.b16 %v703
    %v788 = vunpack.c.l.b16 %v704
    %v789 = vunpack.c.l.b16 %v705
    %v790 = vunpack.c.l.b16 %v706
    %v791 = vunpack.c.l.b16 %v707
    %v792 = vpack.c.b16 %v753, %v752
    %v793 = vpack.c.b16 %v755, %v754
    %v794 = vpack.c.b16 %v757, %v756
    %v795 = vpack.c.b16 %v759, %v758
    %v796 = vpack.c.b16 %v761, %v760
    %v797 = vpack.c.b16 %v763, %v762
    %v798 = vpack.c.b16 %v765, %v764
    %v799 = vpack.c.b16 %v767, %v766
    %v800 = vpack.c.b16 %v769, %v768
    %v801 = vpack.c.b16 %v771, %v770
    %v802 = vpack.c.b16 %v773, %v772
    %v803 = vpack.c.b16 %v775, %v774
    %v804 = vpack.c.b16 %v777, %v776
    %v805 = vpack.c.b16 %v779, %v778
    %v806 = vpack.c.b16 %v781, %v780
    %v807 = vpack.c.b16 %v783, %v782
    %v808 = vpack.c.b16 %v785, %v784
    %v809 = vpack.c.b16 %v787, %v786
    %v810 = vpack.c.b16 %v789, %v788
    %v811 = vpack.c.b16 %v791, %v790
    %vm832 = vcmask 523264
    %v834 = vsel %vm832, %v667, 0
    %836 = vmatpush.bf16.msra.mxu0 %v799
    %837 = vmatpush.bf16.msra.mxu0 %v798
    %838 = vmatpush.bf16.msra.mxu0 %v797
    %839 = vmatpush.bf16.msra.mxu0 %v796
    %840 = vmatpush.bf16.msra.mxu0 %v795
    %841 = vmatpush.bf16.msra.mxu0 %v794
    %842 = vmatpush.bf16.msra.mxu0 %v793
    %843 = vmatpush.bf16.msra.mxu0 %v792
    %844 = vmatmul.bf16.gmra.mxu0 %v665
    %v845 = vpop.f32.mrf.mxu0
    %v846 = vadd.f32 %v710, %v845
    %v847 = vpop.f32.mrf.mxu0
    %v848 = vadd.f32 %v710, %v847
    %849 = vdwg.mxu0
    %850 = vmatpush.bf16.msra.mxu0 %v807
    %851 = vmatpush.bf16.msra.mxu0 %v806
    %852 = vmatpush.bf16.msra.mxu0 %v805
    %853 = vmatpush.bf16.msra.mxu0 %v804
    %854 = vmatpush.bf16.msra.mxu0 %v803
    %855 = vmatpush.bf16.msra.mxu0 %v802
    %856 = vmatpush.bf16.msra.mxu0 %v801
    %857 = vmatpush.bf16.msra.mxu0 %v800
    %858 = vmatmul.bf16.gmra.mxu0 %v666
    %v859 = vpop.f32.mrf.mxu0
    %v860 = vadd.f32 %v846, %v859
    %v861 = vpop.f32.mrf.mxu0
    %v862 = vadd.f32 %v848, %v861
    %863 = vdwg.mxu0
    %864 = vmatpush.bf16.msra.mxu0 0
    %865 = vmatpush.bf16.msra.mxu0 0
    %866 = vmatpush.bf16.msra.mxu0 0
    %867 = vmatpush.bf16.msra.mxu0 0
    %868 = vmatpush.bf16.msra.mxu0 %v811
    %869 = vmatpush.bf16.msra.mxu0 %v810
    %870 = vmatpush.bf16.msra.mxu0 %v809
    %871 = vmatpush.bf16.msra.mxu0 %v808
    %872 = vmatmul.bf16.gmra.mxu0 %v834
    %v873 = vpop.f32.mrf.mxu0
    %v874 = vadd.f32 %v860, %v873
    %v875 = vpop.f32.mrf.mxu0
    %v876 = vadd.f32 %v862, %v875
    %877 = vdwg.mxu0
    %v878 = vxor.u32 %v874, 2147483648
    %v879 = vxor.u32 %v876, 2147483648
    %v880 = vmul.f32 %v878, 1.442695
    %v881 = vpow.pop %v880
    %v882 = vmul.f32 %v879, 1.442695
    %v883 = vpow.pop %v882
    %v884 = vadd.f32 %v881, 1.0
    %v885 = vadd.f32 %v883, 1.0
    %v886 = vrcp.pop %v884
    %v887 = vmul.f32 %v884, %v886
    %v888 = vsub.f32 1.0, %v887
    %v889 = vmul.f32 %v886, %v888
    %v890 = vadd.f32 %v886, %v889
    %vm891 = vweird.f32 %v884
    %vm892 = vweird.f32 %v886
    %vm893 = vmor %vm891, %vm892
    %v894 = vsel %vm893, %v886, %v890
    %v895 = vand.u32 2147483647, %v884
    %vm896 = vcmp.eq.f32.partialorder %v895, 8.507059e+37
    %v897 = vand.u32 %v884, 2147483648
    %v898 = vor.u32 1.1754944e-38, %v897
    %v899 = vsel %vm896, %v898, %v894
    %v900 = vmul.f32 1.0, %v899
    %v901 = vrcp.pop %v885
    %v902 = vmul.f32 %v885, %v901
    %v903 = vsub.f32 1.0, %v902
    %v904 = vmul.f32 %v901, %v903
    %v905 = vadd.f32 %v901, %v904
    %vm906 = vweird.f32 %v885
    %vm907 = vweird.f32 %v901
    %vm908 = vmor %vm906, %vm907
    %v909 = vsel %vm908, %v901, %v905
    %v910 = vand.u32 2147483647, %v885
    %vm911 = vcmp.eq.f32.partialorder %v910, 8.507059e+37
    %v912 = vand.u32 %v885, 2147483648
    %v913 = vor.u32 1.1754944e-38, %v912
    %v914 = vsel %vm911, %v913, %v909
    %v915 = vmul.f32 1.0, %v914
    %v916 = vld [vmem:[%s2] sm:$0xff]
    %v917 = vld [vmem:[%s2 + $0x8] sm:$0xff]
    %v918 = vmul.f32 %v900, %v916
    %v919 = vmul.f32 %v915, %v917
    %vm920 = vcmask 654336
    %921 = vst.msk [vmem:[%s8] sm:$0xff] %vm920, %v918
    %922 = vst.msk [vmem:[%s8 + $0x8] sm:$0xff] %vm920, %v919
    %v923 = vmax.f32 %v918, 1e-08
    %v924 = vmax.f32 %v919, 1e-08
    %v925 = vlog2.pop %v923
    %v926 = vmul.f32 %v925, 0.6931472
    %v927 = vlog2.pop %v924
    %v928 = vmul.f32 %v927, 0.6931472
    %v929 = vmul.f32 %v926, 0.4342945
    %v930 = vmul.f32 %v928, 0.4342945
    %931 = vst.msk [vmem:[%s9] sm:$0xff] %vm920, %v929
    %932 = vst.msk [vmem:[%s9 + $0x8] sm:$0xff] %vm920, %v930
    %v933 = vmax.f32 %v916, 1e-08
    %v934 = vmax.f32 %v917, 1e-08
    %v935 = vlog2.pop %v933
    %v936 = vmul.f32 %v935, 0.6931472
    %v937 = vlog2.pop %v934
    %v938 = vmul.f32 %v937, 0.6931472
    %v939 = vmul.f32 %v936, 0.4342945
    %v940 = vmul.f32 %v938, 0.4342945
    %941 = vst.msk [vmem:[#allocation5] sm:$0xff] %vm920, %v939
    %942 = vst.msk [vmem:[#allocation5 + $0x8] sm:$0xff] %vm920, %v940
    // Predicated region
    $region38: #{voicefixer_forward.17} parent=1 // pred_check
      _
    $region39: #{voicefixer_forward.17} parent=1 // pred_check_branch
      %944 = sbr.rel (0) target = $region41
    $region40: #{voicefixer_forward.17} parent=1 // pred_region
      _
    $region41: #{voicefixer_forward.17} parent=1 // pred_fallthru
      _
    // Predicated region
    $region42: #{voicefixer_forward.17} parent=1 // pred_check
      _
    $region43: #{voicefixer_forward.17} parent=1 // pred_check_branch
      %946 = sbr.rel (0) target = $region45
    $region44: #{voicefixer_forward.17} parent=1 // pred_region
      _
    $region45: #{voicefixer_forward.17} parent=1 // pred_fallthru
      _
    // Predicated region
    $region46: #{voicefixer_forward.17} parent=1 // pred_check
      _
    $region47: #{voicefixer_forward.17} parent=1 // pred_check_branch
      %948 = sbr.rel (0) target = $region49
    $region48: #{voicefixer_forward.17} parent=1 // pred_region
      %950 = vsyncadd [#allocation4], 0
      %s951 = sshll.u32 [#allocation5], 4
      %s952 = int_to_ptr.vmem [resolvable:$true] %s951
      %s953 = sshll.u32 %s10, 4
      %s954 = int_to_ptr.hbm [resolvable:$true] %s953
      %959 = dma.vmem_to_hbm [thread:$0]  %s952, 256, %s954, [#allocation4], 128, 128, 8
    $region49: #{voicefixer_forward.17} parent=1 // pred_fallthru
      _
    // Predicated region
    $region50: #{voicefixer_forward.17} parent=1 // pred_check
      _
    $region51: #{voicefixer_forward.17} parent=1 // pred_check_branch
      %961 = sbr.rel (0) target = $region53
    $region52: #{voicefixer_forward.17} parent=1 // pred_region
      _
    $region53: #{voicefixer_forward.17} parent=1 // pred_fallthru
      _
    // Predicated region
    $region54: #{voicefixer_forward.17} parent=1 // pred_check
      _
    $region55: #{voicefixer_forward.17} parent=1 // pred_check_branch
      %963 = sbr.rel (0) target = $region57
    $region56: #{voicefixer_forward.17} parent=1 // pred_region
      _
    $region57: #{voicefixer_forward.17} parent=1 // pred_fallthru
      _
    // Predicated region
    $region58: #{voicefixer_forward.17} parent=1 // pred_check
      _
    $region59: #{voicefixer_forward.17} parent=1 // pred_check_branch
      %965 = sbr.rel (0) target = $region61
    $region60: #{voicefixer_forward.17} parent=1 // pred_region
      %967 = dma.done [#allocation4], 256
    $region61: #{voicefixer_forward.17} parent=1 // pred_fallthru
      _
    %968 = vsyncpa [#allocation3], 1
    %969 = vsyncpa [#allocation4], 1

</llo_original>
